<compile_context>
chip_gen: v7x
topology: tpu7x:2x2x1
jax: 0.10.0
libtpu: 0.0.40
codegen_flags: <defaults>
</compile_context>

<pallas_src>
import jax
import jax.numpy as jnp
from jax import lax
from jax.experimental import pallas as pl
from jax.experimental.pallas import tpu as pltpu


# Sources with at most this many pixels use the fused kron upsample matmul;
# larger sources use the separable two-matmul path (perf review #1).
_KRON_MAX_PIXELS = 64


# ----------------------------------------------------------------------------
# Fused per-scale kernel
# ----------------------------------------------------------------------------
def _make_fused_scale_kernel(src_modes, H, W, split=None):
    """Kernel refs:
        x_ext                           (1, Cs, H*(W+2))   f32 gate
        per source j (mode "kron"):     src (1, Cin, h*w) bf16, m (h*w, Hp*Wp) bf16
        per source j (mode "sep"):      src (1, Cin*h, w) bf16, rwT (w, Wp) bf16,
                                        rh_b (Cin, Hp, h) bf16
        w_fused                         (Cout_tot, 9*sum Cin_j) bf16
        bias                            (Cout_tot, 1) f32
        out0 [, out1]                   (1, ..., H*(W+2)) f32
    with Wp = W+2, Hp = H+3, L = H*Wp.
    """
    Wp = W + 2
    Hp = H + 3
    L = H * Wp

    def kernel(*refs):
        x_ref = refs[0]
        pos = 1
        tap_blocks = []
        for mode in src_modes:
            if mode == "kron":
                src_ref, m_ref = refs[pos], refs[pos + 1]
                pos += 2
                # (1a) upsample + zero halo as ONE MXU matmul (bf16 -> f32 acc):
                #      (Cin, h*w) @ (h*w, Hp*Wp)
                up = jnp.dot(src_ref[0], m_ref[...],
                             preferred_element_type=jnp.float32)
            else:
                # (1b) separable upsample for larger sources (perf review #1).
                src_ref, rw_ref, rh_ref = refs[pos], refs[pos + 1], refs[pos + 2]
                pos += 3
                cin, _, h = rh_ref.shape
                # width:  (Cin*h, w) @ (w, Wp) -> (Cin*h, Wp)
                t = jnp.dot(src_ref[0], rw_ref[...],
                            preferred_element_type=jnp.float32)
                t3 = t.reshape(cin, h, Wp).astype(jnp.bfloat16)
                # height: batched (Cin, Hp, h) @ (Cin, h, Wp) -> (Cin, Hp, Wp)
                up3 = lax.dot_general(
                    rh_ref[...], t3,
                    dimension_numbers=(((2,), (1,)), ((0,), (0,))),
                    preferred_element_type=jnp.float32)
                up = up3.reshape(cin, Hp * Wp)

            upb = up.astype(jnp.bfloat16)
            # (2) im2col: tap (dy, dx) is the contiguous lane slice starting
            #     at dy*Wp + dx of length L of the flattened padded image.
            tap_blocks += [upb[:, dy * Wp + dx: dy * Wp + dx + L]
                           for dy in range(3) for dx in range(3)]

        # (3) one deep-K conv matmul for ALL sources of this scale
        #     (perf review #7): (Cout_tot, K) @ (K, L), K = 9*sum(Cin_j).
        patches = jnp.concatenate(tap_blocks, axis=0)
        w_ref = refs[pos]
        bias_ref = refs[pos + 1]
        out_refs = refs[pos + 2:]
        acc = jnp.dot(w_ref[...], patches,
                      preferred_element_type=jnp.float32) + bias_ref[...]

        # (4)/(5) fused gate epilogue in f32 (+ split for the two heads of
        #         conv4_up_2 / conv4_up_2_out which share the upsample).
        x = x_ref[0]
        if split is None:
            out_refs[0][0] = (x * acc).astype(out_refs[0].dtype)
        else:
            out_refs[0][0] = (x * acc[:split]).astype(out_refs[0].dtype)
            out_refs[1][0] = acc[split:].astype(out_refs[1].dtype)

    return kernel


def _fused_scale(x_ext, src_ops, w_fused, bias, H, W, split=None):
    """Run the fused upsample+conv+gate kernel for one output scale.

    src_ops: list of ("kron", src_flat, m) or ("sep", src2d, rwT, rh_b) tuples.
    """
    N, Cs, L = x_ext.shape
    cout_tot = w_fused.shape[0]
    modes = tuple(op[0] for op in src_ops)

    def full_spec(arr):
        # Constant-index operand (same block for every grid step).
        # TODO(synk): add pipeline_mode=pl.Buffered(1) to single-buffer these
        # once strip tiling / bigger blocks make VMEM tight (perf review #6).
        zeros = (0,) * arr.ndim
        return pl.BlockSpec(arr.shape, lambda n, _z=zeros: _z)

    in_specs = [pl.BlockSpec((1, Cs, L), lambda n: (n, 0, 0))]
    operands = [x_ext]
    for op in src_ops:
        src = op[1]
        in_specs.append(pl.BlockSpec((1,) + tuple(src.shape[1:]),
                                     lambda n: (n, 0, 0)))
        operands.append(src)
        for arr in op[2:]:
            in_specs.append(full_spec(arr))
            operands.append(arr)
    in_specs += [full_spec(w_fused), full_spec(bias)]
    operands += [w_fused, bias]

    if split is None:
        out_shape = jax.ShapeDtypeStruct((N, cout_tot, L), jnp.float32)
        out_specs = pl.BlockSpec((1, cout_tot, L), lambda n: (n, 0, 0))
    else:
        c1, c2 = split, cout_tot - split
        out_shape = (jax.ShapeDtypeStruct((N, c1, L), jnp.float32),
                     jax.ShapeDtypeStruct((N, c2, L), jnp.float32))
        out_specs = (pl.BlockSpec((1, c1, L), lambda n: (n, 0, 0)),
                     pl.BlockSpec((1, c2, L), lambda n: (n, 0, 0)))

    return pl.pallas_call(
        _make_fused_scale_kernel(modes, H, W, split=split),
        out_shape=out_shape,
        grid=(N,),
        in_specs=in_specs,
        out_specs=out_specs,
        compiler_params=pltpu.CompilerParams(
            dimension_semantics=("parallel",)),   # shards batch across TCs
    )(*operands)


# ----------------------------------------------------------------------------
# Upsample matrices (PyTorch bilinear, align_corners=False) + layout helpers
# ----------------------------------------------------------------------------
def _interp_matrix(out_size, in_size):
    """1-D bilinear interpolation matrix, half-pixel centers, clamp-at-0."""
    dst = jnp.arange(out_size, dtype=jnp.float32)
    src = jnp.maximum((dst + 0.5) * (in_size / out_size) - 0.5, 0.0)
    i0 = jnp.clip(jnp.floor(src).astype(jnp.int32), 0, in_size - 1)
    i1 = jnp.minimum(i0 + 1, in_size - 1)
    w1 = src - i0.astype(jnp.float32)
    w0 = 1.0 - w1
    return (jax.nn.one_hot(i0, in_size) * w0[:, None]
            + jax.nn.one_hot(i1, in_size) * w1[:, None])          # (out, in)


def _padded_factors(H, W, h, w):
    """Height/width interpolation matrices with the 3x3-conv zero halo baked
    in: 1 top row + 2 bottom rows, 1 left col + 1 right col."""
    rh = _interp_matrix(H, h)
    rw = _interp_matrix(W, w)
    rh_pad = jnp.zeros((H + 3, h), jnp.float32).at[1:H + 1].set(rh)
    rw_pad = jnp.zeros((W + 2, w), jnp.float32).at[1:W + 1].set(rw)
    return rh_pad, rw_pad                                          # (Hp,h),(Wp,w)


def _make_src_op(x_src, H, W):
    """Prepare one low-res source for the fused kernel (kron vs separable)."""
    N, C, h, w = x_src.shape
    rh_pad, rw_pad = _padded_factors(H, W, h, w)
    if h * w <= _KRON_MAX_PIXELS:
        m = jnp.kron(rh_pad, rw_pad).T.astype(jnp.bfloat16)        # (h*w, Hp*Wp)
        return ("kron", x_src.reshape(N, C, h * w).astype(jnp.bfloat16), m)
    rh_b = jnp.broadcast_to(rh_pad, (C,) + rh_pad.shape).astype(jnp.bfloat16)
    return ("sep",
            x_src.reshape(N, C * h, w).astype(jnp.bfloat16),       # free reshape
            rw_pad.T.astype(jnp.bfloat16),                         # (w, Wp)
            rh_b)                                                  # (C, Hp, h)


def _ext_flatten(x):
    """NCHW -> (N, C, H*(W+2)) with 2 zero columns appended per row."""
    N, C, H, W = x.shape
    return jnp.pad(x, ((0, 0), (0, 0), (0, 0), (0, 2))).reshape(N, C, H * (W + 2))


def _ext_unflatten(y, H, W):
    """(N, C, H*(W+2)) -> NCHW, dropping the 2 garbage columns per row."""
    N, C, _ = y.shape
    return y.reshape(N, C, H, W + 2)[:, :, :, :W]


# ----------------------------------------------------------------------------
# Parameters
# ----------------------------------------------------------------------------
def init_params(channels, key):
    """Conv2d(Cin, Cout, 3, padding=1) weights (OIHW) + bias, deterministic."""
    convs = {
        "conv4_up_2": (channels[3], channels[2]),
        "conv4_up_2_out": (channels[3], channels[2]),
        "conv4_up_4": (channels[3], channels[1]),
        "conv4_up_8": (channels[3], channels[0]),
        "conv3_up_2": (channels[2], channels[1]),
        "conv3_up_4": (channels[2], channels[0]),
        "conv2_up_2": (channels[1], channels[0]),
    }
    params = {}
    for name, (cin, cout) in convs.items():
        key, kw, kb = jax.random.split(key, 3)
        w = jax.random.normal(kw, (cout, cin, 3, 3), jnp.float32) * 0.05
        b = jax.random.normal(kb, (cout,), jnp.float32) * 0.05
        params[name] = (w, b)
    return params


def _im2col_weight(w_oihw):
    """OIHW -> (Cout, 9*Cin), tap-major then channel, matching the kernel."""
    o, i, kh, kw = w_oihw.shape
    return jnp.transpose(w_oihw, (0, 2, 3, 1)).reshape(o, kh * kw * i)


def prepare_params(params):
    """Hoisted, kernel-ready weights: im2col form in bf16, one fused weight
    per scale (K-concat over sources, Cout-concat for the two x4_up_2 heads),
    biases summed per gate and kept f32."""
    def w(name):
        return _im2col_weight(params[name][0])

    prep = {
        # scale 1 sources in kernel order: x2, x3, x4
        "w_scale1": jnp.concatenate(
            [w("conv2_up_2"), w("conv3_up_4"), w("conv4_up_8")],
            axis=1).astype(jnp.bfloat16),
        # scale 2 sources in kernel order: x3, x4
        "w_scale2": jnp.concatenate(
            [w("conv3_up_2"), w("conv4_up_4")], axis=1).astype(jnp.bfloat16),
        # scale 3: one source (x4), two heads fused along Cout
        "w_scale3": jnp.concatenate(
            [w("conv4_up_2"), w("conv4_up_2_out")], axis=0).astype(jnp.bfloat16),
        "b_scale1": (params["conv2_up_2"][1] + params["conv3_up_4"][1]
                     + params["conv4_up_8"][1])[:, None],
        "b_scale2": (params["conv3_up_2"][1] + params["conv4_up_4"][1])[:, None],
        "b_scale3": jnp.concatenate(
            [params["conv4_up_2"][1], params["conv4_up_2_out"][1]])[:, None],
    }
    return prep


# ----------------------------------------------------------------------------
# Forward
# ----------------------------------------------------------------------------
@jax.jit
def bba_forward(prep, x1, x2, x3, x4):
    """Inputs / outputs NCHW (PyTorch convention)."""
    H1, W1 = x1.shape[2:]
    H2, W2 = x2.shape[2:]
    H3, W3 = x3.shape[2:]

    # Gates in the width-extended flattened layout (f32).
    x1e, x2e, x3e = _ext_flatten(x1), _ext_flatten(x2), _ext_flatten(x3)

    y1e = _fused_scale(
        x1e,
        [_make_src_op(x2, H1, W1), _make_src_op(x3, H1, W1),
         _make_src_op(x4, H1, W1)],
        prep["w_scale1"], prep["b_scale1"], H1, W1)

    y2e = _fused_scale(
        x2e,
        [_make_src_op(x3, H2, W2), _make_src_op(x4, H2, W2)],
        prep["w_scale2"], prep["b_scale2"], H2, W2)

    y3e, y4e = _fused_scale(
        x3e,
        [_make_src_op(x4, H3, W3)],
        prep["w_scale3"], prep["b_scale3"], H3, W3, split=x3.shape[1])

    return (_ext_unflatten(y1e, H1, W1), _ext_unflatten(y2e, H2, W2),
            _ext_unflatten(y3e, H3, W3), _ext_unflatten(y4e, H3, W3))


# ----------------------------------------------------------------------------
# Independent pure-JAX reference (gather-based resize + lax.conv), full f32
# ----------------------------------------------------------------------------
def _bilinear_resize_nchw_ref(x, oh, ow):
    n, c, h, w = x.shape
    ys = jnp.maximum((jnp.arange(oh, dtype=jnp.float32) + 0.5) * (h / oh) - 0.5, 0.0)
    xs = jnp.maximum((jnp.arange(ow, dtype=jnp.float32) + 0.5) * (w / ow) - 0.5, 0.0)
    y0 = jnp.clip(jnp.floor(ys).astype(jnp.int32), 0, h - 1)
    x0 = jnp.clip(jnp.floor(xs).astype(jnp.int32), 0, w - 1)
    y1 = jnp.minimum(y0 + 1, h - 1)
    x1 = jnp.minimum(x0 + 1, w - 1)
    wy = (ys - y0.astype(jnp.float32))[None, None, :, None]
    wx = (xs - x0.astype(jnp.float32))[None, None, None, :]
    row = x[:, :, y0, :] * (1.0 - wy) + x[:, :, y1, :] * wy
    return row[:, :, :, x0] * (1.0 - wx) + row[:, :, :, x1] * wx


def _conv_ref(params, name, x_nchw):
    w, b = params[name]
    out = lax.conv_general_dilated(
        x_nchw, w, window_strides=(1, 1), padding=((1, 1), (1, 1)),
        dimension_numbers=("NCHW", "OIHW", "NCHW"))
    return out + b[None, :, None, None]


def bba_forward_ref(params, x1, x2, x3, x4):
    h3, w3 = x3.shape[2:]; h2, w2 = x2.shape[2:]; h1, w1 = x1.shape[2:]
    x4_up_2 = _bilinear_resize_nchw_ref(x4, h3, w3)
    x4_up_4 = _bilinear_resize_nchw_ref(x4, h2, w2)
    x4_up_8 = _bilinear_resize_nchw_ref(x4, h1, w1)
    x3_up_2 = _bilinear_resize_nchw_ref(x3, h2, w2)
    x3_up_4 = _bilinear_resize_nchw_ref(x3, h1, w1)
    x2_up_2 = _bilinear_resize_nchw_ref(x2, h1, w1)
    y1 = x1 * (_conv_ref(params, "conv2_up_2", x2_up_2)
               + _conv_ref(params, "conv3_up_4", x3_up_4)
               + _conv_ref(params, "conv4_up_8", x4_up_8))
    y2 = x2 * (_conv_ref(params, "conv3_up_2", x3_up_2)
               + _conv_ref(params, "conv4_up_4", x4_up_4))
    y3 = x3 * _conv_ref(params, "conv4_up_2", x4_up_2)
    y4 = _conv_ref(params, "conv4_up_2_out", x4_up_2)
    return (y1, y2, y3, y4)


# ----------------------------------------------------------------------------
if __name__ == "__main__":
    channels = [4, 8, 16, 32]   # channels[0]=x1 ... channels[3]=x4
    N = 2

    key = jax.random.PRNGKey(0)
    key, k1, k2, k3, k4, kp = jax.random.split(key, 6)
    x1 = jax.random.normal(k1, (N, channels[0], 16, 16), jnp.float32)
    x2 = jax.random.normal(k2, (N, channels[1], 8, 8), jnp.float32)
    x3 = jax.random.normal(k3, (N, channels[2], 4, 4), jnp.float32)
    x4 = jax.random.normal(k4, (N, channels[3], 2, 2), jnp.float32)

    params = init_params(channels, kp)
    prep = prepare_params(params)

    outs = bba_forward(prep, x1, x2, x3, x4)
    outs = jax.block_until_ready(outs)

    refs = bba_forward_ref(params, x1, x2, x3, x4)
    for o, r in zip(outs, refs):
        assert o.shape == r.shape and o.dtype == r.dtype, (o.shape, r.shape)
        err = float(jnp.max(jnp.abs(o - r)))
        # bf16 matmul operands with f32 accumulation -> loosen vs pure-f32 ref.
        assert jnp.allclose(o, r, atol=5e-2, rtol=5e-2), f"mismatch {err}"

    print("KERNEL_OK")
</pallas_src>

<mosaic_0001>
module attributes {stable_mosaic.version = 11 : i64} {
  func.func @kernel(%arg0: i32, %arg1: memref<1x4x288xf32, #tpu.memory_space<vmem>>, %arg2: memref<1x8x64xbf16, #tpu.memory_space<vmem>>, %arg3: memref<64x342xbf16, #tpu.memory_space<vmem>>, %arg4: memref<1x16x16xbf16, #tpu.memory_space<vmem>>, %arg5: memref<16x342xbf16, #tpu.memory_space<vmem>>, %arg6: memref<1x32x4xbf16, #tpu.memory_space<vmem>>, %arg7: memref<4x342xbf16, #tpu.memory_space<vmem>>, %arg8: memref<4x504xbf16, #tpu.memory_space<vmem>>, %arg9: memref<4x1xf32, #tpu.memory_space<vmem>>, %arg10: memref<1x4x288xf32, #tpu.memory_space<vmem>>) attributes {dimension_semantics = [#tpu.dimension_semantics<parallel>], iteration_bounds = array<i64: 2>, scalar_prefetch = 0 : i64, scratch_operands = 0 : i64, tpu.core_type = #tpu.core_type<tc>, window_params = [{transform_indices = @transform_0, window_bounds = array<i64: 1, 4, 288>}, {transform_indices = @transform_1, window_bounds = array<i64: 1, 8, 64>}, {pipeline_mode = #tpu.pipeline_mode<synchronous>, transform_indices = @transform_2, window_bounds = array<i64: 64, 342>}, {transform_indices = @transform_3, window_bounds = array<i64: 1, 16, 16>}, {pipeline_mode = #tpu.pipeline_mode<synchronous>, transform_indices = @transform_4, window_bounds = array<i64: 16, 342>}, {transform_indices = @transform_5, window_bounds = array<i64: 1, 32, 4>}, {pipeline_mode = #tpu.pipeline_mode<synchronous>, transform_indices = @transform_6, window_bounds = array<i64: 4, 342>}, {pipeline_mode = #tpu.pipeline_mode<synchronous>, transform_indices = @transform_7, window_bounds = array<i64: 4, 504>}, {pipeline_mode = #tpu.pipeline_mode<synchronous>, transform_indices = @transform_8, window_bounds = array<i64: 4, 1>}, {transform_indices = @transform_9, window_bounds = array<i64: 1, 4, 288>}]} {
    %c0 = arith.constant 0 : index
    %c0_0 = arith.constant 0 : index
    %c0_1 = arith.constant 0 : index
    %0 = vector.load %arg2[%c0, %c0_0, %c0_1] : memref<1x8x64xbf16, #tpu.memory_space<vmem>>, vector<1x8x64xbf16>
    %1 = vector.shape_cast %0 : vector<1x8x64xbf16> to vector<8x64xbf16>
    %c0_2 = arith.constant 0 : index
    %c0_3 = arith.constant 0 : index
    %2 = vector.load %arg3[%c0_2, %c0_3] : memref<64x342xbf16, #tpu.memory_space<vmem>>, vector<64x342xbf16>
    %cst = arith.constant dense<0.000000e+00> : vector<8x342xf32>
    %3 = tpu.matmul %1, %2, %cst {dimension_numbers = #tpu.dot_dimension_numbers<[1], [0], [0], [1], [0, 0, 1, 1], [], []>} : vector<8x64xbf16>, vector<64x342xbf16>, vector<8x342xf32> -> vector<8x342xf32>
    %4 = arith.truncf %3 : vector<8x342xf32> to vector<8x342xbf16>
    %5 = vector.extract_strided_slice %4 {offsets = [0, 0], sizes = [8, 288], strides = [1, 1]} : vector<8x342xbf16> to vector<8x288xbf16>
    %6 = vector.extract_strided_slice %4 {offsets = [0, 1], sizes = [8, 288], strides = [1, 1]} : vector<8x342xbf16> to vector<8x288xbf16>
    %7 = vector.extract_strided_slice %4 {offsets = [0, 2], sizes = [8, 288], strides = [1, 1]} : vector<8x342xbf16> to vector<8x288xbf16>
    %8 = vector.extract_strided_slice %4 {offsets = [0, 18], sizes = [8, 288], strides = [1, 1]} : vector<8x342xbf16> to vector<8x288xbf16>
    %9 = vector.extract_strided_slice %4 {offsets = [0, 19], sizes = [8, 288], strides = [1, 1]} : vector<8x342xbf16> to vector<8x288xbf16>
    %10 = vector.extract_strided_slice %4 {offsets = [0, 20], sizes = [8, 288], strides = [1, 1]} : vector<8x342xbf16> to vector<8x288xbf16>
    %11 = vector.extract_strided_slice %4 {offsets = [0, 36], sizes = [8, 288], strides = [1, 1]} : vector<8x342xbf16> to vector<8x288xbf16>
    %12 = vector.extract_strided_slice %4 {offsets = [0, 37], sizes = [8, 288], strides = [1, 1]} : vector<8x342xbf16> to vector<8x288xbf16>
    %13 = vector.extract_strided_slice %4 {offsets = [0, 38], sizes = [8, 288], strides = [1, 1]} : vector<8x342xbf16> to vector<8x288xbf16>
    %c0_4 = arith.constant 0 : index
    %c0_5 = arith.constant 0 : index
    %c0_6 = arith.constant 0 : index
    %14 = vector.load %arg4[%c0_4, %c0_5, %c0_6] : memref<1x16x16xbf16, #tpu.memory_space<vmem>>, vector<1x16x16xbf16>
    %15 = vector.shape_cast %14 : vector<1x16x16xbf16> to vector<16x16xbf16>
    %c0_7 = arith.constant 0 : index
    %c0_8 = arith.constant 0 : index
    %16 = vector.load %arg5[%c0_7, %c0_8] : memref<16x342xbf16, #tpu.memory_space<vmem>>, vector<16x342xbf16>
    %cst_9 = arith.constant dense<0.000000e+00> : vector<16x342xf32>
    %17 = tpu.matmul %15, %16, %cst_9 {dimension_numbers = #tpu.dot_dimension_numbers<[1], [0], [0], [1], [0, 0, 1, 1], [], []>} : vector<16x16xbf16>, vector<16x342xbf16>, vector<16x342xf32> -> vector<16x342xf32>
    %18 = arith.truncf %17 : vector<16x342xf32> to vector<16x342xbf16>
    %19 = vector.extract_strided_slice %18 {offsets = [0, 0], sizes = [16, 288], strides = [1, 1]} : vector<16x342xbf16> to vector<16x288xbf16>
    %20 = vector.extract_strided_slice %18 {offsets = [0, 1], sizes = [16, 288], strides = [1, 1]} : vector<16x342xbf16> to vector<16x288xbf16>
    %21 = vector.extract_strided_slice %18 {offsets = [0, 2], sizes = [16, 288], strides = [1, 1]} : vector<16x342xbf16> to vector<16x288xbf16>
    %22 = vector.extract_strided_slice %18 {offsets = [0, 18], sizes = [16, 288], strides = [1, 1]} : vector<16x342xbf16> to vector<16x288xbf16>
    %23 = vector.extract_strided_slice %18 {offsets = [0, 19], sizes = [16, 288], strides = [1, 1]} : vector<16x342xbf16> to vector<16x288xbf16>
    %24 = vector.extract_strided_slice %18 {offsets = [0, 20], sizes = [16, 288], strides = [1, 1]} : vector<16x342xbf16> to vector<16x288xbf16>
    %25 = vector.extract_strided_slice %18 {offsets = [0, 36], sizes = [16, 288], strides = [1, 1]} : vector<16x342xbf16> to vector<16x288xbf16>
    %26 = vector.extract_strided_slice %18 {offsets = [0, 37], sizes = [16, 288], strides = [1, 1]} : vector<16x342xbf16> to vector<16x288xbf16>
    %27 = vector.extract_strided_slice %18 {offsets = [0, 38], sizes = [16, 288], strides = [1, 1]} : vector<16x342xbf16> to vector<16x288xbf16>
    %c0_10 = arith.constant 0 : index
    %c0_11 = arith.constant 0 : index
    %c0_12 = arith.constant 0 : index
    %28 = vector.load %arg6[%c0_10, %c0_11, %c0_12] : memref<1x32x4xbf16, #tpu.memory_space<vmem>>, vector<1x32x4xbf16>
    %29 = vector.shape_cast %28 : vector<1x32x4xbf16> to vector<32x4xbf16>
    %c0_13 = arith.constant 0 : index
    %c0_14 = arith.constant 0 : index
    %30 = vector.load %arg7[%c0_13, %c0_14] : memref<4x342xbf16, #tpu.memory_space<vmem>>, vector<4x342xbf16>
    %cst_15 = arith.constant dense<0.000000e+00> : vector<32x342xf32>
    %31 = tpu.matmul %29, %30, %cst_15 {dimension_numbers = #tpu.dot_dimension_numbers<[1], [0], [0], [1], [0, 0, 1, 1], [], []>} : vector<32x4xbf16>, vector<4x342xbf16>, vector<32x342xf32> -> vector<32x342xf32>
    %32 = arith.truncf %31 : vector<32x342xf32> to vector<32x342xbf16>
    %33 = vector.extract_strided_slice %32 {offsets = [0, 0], sizes = [32, 288], strides = [1, 1]} : vector<32x342xbf16> to vector<32x288xbf16>
    %34 = vector.extract_strided_slice %32 {offsets = [0, 1], sizes = [32, 288], strides = [1, 1]} : vector<32x342xbf16> to vector<32x288xbf16>
    %35 = vector.extract_strided_slice %32 {offsets = [0, 2], sizes = [32, 288], strides = [1, 1]} : vector<32x342xbf16> to vector<32x288xbf16>
    %36 = vector.extract_strided_slice %32 {offsets = [0, 18], sizes = [32, 288], strides = [1, 1]} : vector<32x342xbf16> to vector<32x288xbf16>
    %37 = vector.extract_strided_slice %32 {offsets = [0, 19], sizes = [32, 288], strides = [1, 1]} : vector<32x342xbf16> to vector<32x288xbf16>
    %38 = vector.extract_strided_slice %32 {offsets = [0, 20], sizes = [32, 288], strides = [1, 1]} : vector<32x342xbf16> to vector<32x288xbf16>
    %39 = vector.extract_strided_slice %32 {offsets = [0, 36], sizes = [32, 288], strides = [1, 1]} : vector<32x342xbf16> to vector<32x288xbf16>
    %40 = vector.extract_strided_slice %32 {offsets = [0, 37], sizes = [32, 288], strides = [1, 1]} : vector<32x342xbf16> to vector<32x288xbf16>
    %41 = vector.extract_strided_slice %32 {offsets = [0, 38], sizes = [32, 288], strides = [1, 1]} : vector<32x342xbf16> to vector<32x288xbf16>
    %42 = tpu.concatenate %5, %6, %7, %8, %9, %10, %11, %12, %13, %19, %20, %21, %22, %23, %24, %25 in 0 : vector<8x288xbf16>, vector<8x288xbf16>, vector<8x288xbf16>, vector<8x288xbf16>, vector<8x288xbf16>, vector<8x288xbf16>, vector<8x288xbf16>, vector<8x288xbf16>, vector<8x288xbf16>, vector<16x288xbf16>, vector<16x288xbf16>, vector<16x288xbf16>, vector<16x288xbf16>, vector<16x288xbf16>, vector<16x288xbf16>, vector<16x288xbf16> -> vector<184x288xbf16>
    %43 = tpu.concatenate %26, %27, %33, %34, %35, %36, %37, %38, %39, %40, %41 in 0 : vector<16x288xbf16>, vector<16x288xbf16>, vector<32x288xbf16>, vector<32x288xbf16>, vector<32x288xbf16>, vector<32x288xbf16>, vector<32x288xbf16>, vector<32x288xbf16>, vector<32x288xbf16>, vector<32x288xbf16>, vector<32x288xbf16> -> vector<320x288xbf16>
    %44 = tpu.concatenate %42, %43 in 0 : vector<184x288xbf16>, vector<320x288xbf16> -> vector<504x288xbf16>
    %c0_16 = arith.constant 0 : index
    %c0_17 = arith.constant 0 : index
    %45 = vector.load %arg8[%c0_16, %c0_17] : memref<4x504xbf16, #tpu.memory_space<vmem>>, vector<4x504xbf16>
    %cst_18 = arith.constant dense<0.000000e+00> : vector<4x288xf32>
    %46 = tpu.matmul %45, %44, %cst_18 {dimension_numbers = #tpu.dot_dimension_numbers<[1], [0], [0], [1], [0, 0, 1, 1], [], []>} : vector<4x504xbf16>, vector<504x288xbf16>, vector<4x288xf32> -> vector<4x288xf32>
    %c0_19 = arith.constant 0 : index
    %c0_20 = arith.constant 0 : index
    %47 = vector.load %arg9[%c0_19, %c0_20] : memref<4x1xf32, #tpu.memory_space<vmem>>, vector<4x1xf32>
    %48 = vector.broadcast %47 : vector<4x1xf32> to vector<4x288xf32>
    %49 = arith.addf %46, %48 : vector<4x288xf32>
    %c0_21 = arith.constant 0 : index
    %c0_22 = arith.constant 0 : index
    %c0_23 = arith.constant 0 : index
    %50 = vector.load %arg1[%c0_21, %c0_22, %c0_23] : memref<1x4x288xf32, #tpu.memory_space<vmem>>, vector<1x4x288xf32>
    %51 = vector.shape_cast %50 : vector<1x4x288xf32> to vector<4x288xf32>
    %52 = arith.mulf %51, %49 : vector<4x288xf32>
    %c0_24 = arith.constant 0 : index
    %c0_25 = arith.constant 0 : index
    %c0_26 = arith.constant 0 : index
    %53 = vector.load %arg10[%c0_24, %c0_25, %c0_26] : memref<1x4x288xf32, #tpu.memory_space<vmem>>, vector<1x4x288xf32>
    %54 = vector.shape_cast %53 : vector<1x4x288xf32> to vector<4x288xf32>
    %55 = vector.shape_cast %52 : vector<4x288xf32> to vector<1x4x288xf32>
    tpu.vector_store %arg10[%c0_24, %c0_25, %c0_26], %55 {strides = array<i32>} : memref<1x4x288xf32, #tpu.memory_space<vmem>>, vector<1x4x288xf32>,
    return
  }
  func.func @transform_0(%arg0: i32) -> (i32, i32, i32) {
    %c0_i32 = arith.constant 0 : i32
    %c0_i32_0 = arith.constant 0 : i32
    %c0_i32_1 = arith.constant 0 : i32
    return %arg0, %c0_i32, %c0_i32_0 : i32, i32, i32
  }
  func.func @transform_1(%arg0: i32) -> (i32, i32, i32) {
    %c0_i32 = arith.constant 0 : i32
    %c0_i32_0 = arith.constant 0 : i32
    %c0_i32_1 = arith.constant 0 : i32
    return %arg0, %c0_i32, %c0_i32_0 : i32, i32, i32
  }
  func.func @transform_2(%arg0: i32) -> (i32, i32) {
    %c0_i32 = arith.constant 0 : i32
    %c0_i32_0 = arith.constant 0 : i32
    %c0_i32_1 = arith.constant 0 : i32
    return %c0_i32, %c0_i32_0 : i32, i32
  }
  func.func @transform_3(%arg0: i32) -> (i32, i32, i32) {
    %c0_i32 = arith.constant 0 : i32
    %c0_i32_0 = arith.constant 0 : i32
    %c0_i32_1 = arith.constant 0 : i32
    return %arg0, %c0_i32, %c0_i32_0 : i32, i32, i32
  }
  func.func @transform_4(%arg0: i32) -> (i32, i32) {
    %c0_i32 = arith.constant 0 : i32
    %c0_i32_0 = arith.constant 0 : i32
    %c0_i32_1 = arith.constant 0 : i32
    return %c0_i32, %c0_i32_0 : i32, i32
  }
  func.func @transform_5(%arg0: i32) -> (i32, i32, i32) {
    %c0_i32 = arith.constant 0 : i32
    %c0_i32_0 = arith.constant 0 : i32
    %c0_i32_1 = arith.constant 0 : i32
    return %arg0, %c0_i32, %c0_i32_0 : i32, i32, i32
  }
  func.func @transform_6(%arg0: i32) -> (i32, i32) {
    %c0_i32 = arith.constant 0 : i32
    %c0_i32_0 = arith.constant 0 : i32
    %c0_i32_1 = arith.constant 0 : i32
    return %c0_i32, %c0_i32_0 : i32, i32
  }
  func.func @transform_7(%arg0: i32) -> (i32, i32) {
    %c0_i32 = arith.constant 0 : i32
    %c0_i32_0 = arith.constant 0 : i32
    %c0_i32_1 = arith.constant 0 : i32
    return %c0_i32, %c0_i32_0 : i32, i32
  }
  func.func @transform_8(%arg0: i32) -> (i32, i32) {
    %c0_i32 = arith.constant 0 : i32
    %c0_i32_0 = arith.constant 0 : i32
    %c0_i32_1 = arith.constant 0 : i32
    return %c0_i32, %c0_i32_0 : i32, i32
  }
  func.func @transform_9(%arg0: i32) -> (i32, i32, i32) {
    %c0_i32 = arith.constant 0 : i32
    %c0_i32_0 = arith.constant 0 : i32
    %c0_i32_1 = arith.constant 0 : i32
    return %arg0, %c0_i32, %c0_i32_0 : i32, i32, i32
  }
}

module attributes {stable_mosaic.version = 11 : i64} {
  func.func @kernel(%arg0: i32, %arg1: memref<1x8x80xf32, #tpu.memory_space<vmem>>, %arg2: memref<1x16x16xbf16, #tpu.memory_space<vmem>>, %arg3: memref<16x110xbf16, #tpu.memory_space<vmem>>, %arg4: memref<1x32x4xbf16, #tpu.memory_space<vmem>>, %arg5: memref<4x110xbf16, #tpu.memory_space<vmem>>, %arg6: memref<8x432xbf16, #tpu.memory_space<vmem>>, %arg7: memref<8x1xf32, #tpu.memory_space<vmem>>, %arg8: memref<1x8x80xf32, #tpu.memory_space<vmem>>) attributes {dimension_semantics = [#tpu.dimension_semantics<parallel>], iteration_bounds = array<i64: 2>, scalar_prefetch = 0 : i64, scratch_operands = 0 : i64, tpu.core_type = #tpu.core_type<tc>, window_params = [{transform_indices = @transform_0, window_bounds = array<i64: 1, 8, 80>}, {transform_indices = @transform_1, window_bounds = array<i64: 1, 16, 16>}, {pipeline_mode = #tpu.pipeline_mode<synchronous>, transform_indices = @transform_2, window_bounds = array<i64: 16, 110>}, {transform_indices = @transform_3, window_bounds = array<i64: 1, 32, 4>}, {pipeline_mode = #tpu.pipeline_mode<synchronous>, transform_indices = @transform_4, window_bounds = array<i64: 4, 110>}, {pipeline_mode = #tpu.pipeline_mode<synchronous>, transform_indices = @transform_5, window_bounds = array<i64: 8, 432>}, {pipeline_mode = #tpu.pipeline_mode<synchronous>, transform_indices = @transform_6, window_bounds = array<i64: 8, 1>}, {transform_indices = @transform_7, window_bounds = array<i64: 1, 8, 80>}]} {
    %c0 = arith.constant 0 : index
    %c0_0 = arith.constant 0 : index
    %c0_1 = arith.constant 0 : index
    %0 = vector.load %arg2[%c0, %c0_0, %c0_1] : memref<1x16x16xbf16, #tpu.memory_space<vmem>>, vector<1x16x16xbf16>
    %1 = vector.shape_cast %0 : vector<1x16x16xbf16> to vector<16x16xbf16>
    %c0_2 = arith.constant 0 : index
    %c0_3 = arith.constant 0 : index
    %2 = vector.load %arg3[%c0_2, %c0_3] : memref<16x110xbf16, #tpu.memory_space<vmem>>, vector<16x110xbf16>
    %cst = arith.constant dense<0.000000e+00> : vector<16x110xf32>
    %3 = tpu.matmul %1, %2, %cst {dimension_numbers = #tpu.dot_dimension_numbers<[1], [0], [0], [1], [0, 0, 1, 1], [], []>} : vector<16x16xbf16>, vector<16x110xbf16>, vector<16x110xf32> -> vector<16x110xf32>
    %4 = arith.truncf %3 : vector<16x110xf32> to vector<16x110xbf16>
    %5 = vector.extract_strided_slice %4 {offsets = [0, 0], sizes = [16, 80], strides = [1, 1]} : vector<16x110xbf16> to vector<16x80xbf16>
    %6 = vector.extract_strided_slice %4 {offsets = [0, 1], sizes = [16, 80], strides = [1, 1]} : vector<16x110xbf16> to vector<16x80xbf16>
    %7 = vector.extract_strided_slice %4 {offsets = [0, 2], sizes = [16, 80], strides = [1, 1]} : vector<16x110xbf16> to vector<16x80xbf16>
    %8 = vector.extract_strided_slice %4 {offsets = [0, 10], sizes = [16, 80], strides = [1, 1]} : vector<16x110xbf16> to vector<16x80xbf16>
    %9 = vector.extract_strided_slice %4 {offsets = [0, 11], sizes = [16, 80], strides = [1, 1]} : vector<16x110xbf16> to vector<16x80xbf16>
    %10 = vector.extract_strided_slice %4 {offsets = [0, 12], sizes = [16, 80], strides = [1, 1]} : vector<16x110xbf16> to vector<16x80xbf16>
    %11 = vector.extract_strided_slice %4 {offsets = [0, 20], sizes = [16, 80], strides = [1, 1]} : vector<16x110xbf16> to vector<16x80xbf16>
    %12 = vector.extract_strided_slice %4 {offsets = [0, 21], sizes = [16, 80], strides = [1, 1]} : vector<16x110xbf16> to vector<16x80xbf16>
    %13 = vector.extract_strided_slice %4 {offsets = [0, 22], sizes = [16, 80], strides = [1, 1]} : vector<16x110xbf16> to vector<16x80xbf16>
    %c0_4 = arith.constant 0 : index
    %c0_5 = arith.constant 0 : index
    %c0_6 = arith.constant 0 : index
    %14 = vector.load %arg4[%c0_4, %c0_5, %c0_6] : memref<1x32x4xbf16, #tpu.memory_space<vmem>>, vector<1x32x4xbf16>
    %15 = vector.shape_cast %14 : vector<1x32x4xbf16> to vector<32x4xbf16>
    %c0_7 = arith.constant 0 : index
    %c0_8 = arith.constant 0 : index
    %16 = vector.load %arg5[%c0_7, %c0_8] : memref<4x110xbf16, #tpu.memory_space<vmem>>, vector<4x110xbf16>
    %cst_9 = arith.constant dense<0.000000e+00> : vector<32x110xf32>
    %17 = tpu.matmul %15, %16, %cst_9 {dimension_numbers = #tpu.dot_dimension_numbers<[1], [0], [0], [1], [0, 0, 1, 1], [], []>} : vector<32x4xbf16>, vector<4x110xbf16>, vector<32x110xf32> -> vector<32x110xf32>
    %18 = arith.truncf %17 : vector<32x110xf32> to vector<32x110xbf16>
    %19 = vector.extract_strided_slice %18 {offsets = [0, 0], sizes = [32, 80], strides = [1, 1]} : vector<32x110xbf16> to vector<32x80xbf16>
    %20 = vector.extract_strided_slice %18 {offsets = [0, 1], sizes = [32, 80], strides = [1, 1]} : vector<32x110xbf16> to vector<32x80xbf16>
    %21 = vector.extract_strided_slice %18 {offsets = [0, 2], sizes = [32, 80], strides = [1, 1]} : vector<32x110xbf16> to vector<32x80xbf16>
    %22 = vector.extract_strided_slice %18 {offsets = [0, 10], sizes = [32, 80], strides = [1, 1]} : vector<32x110xbf16> to vector<32x80xbf16>
    %23 = vector.extract_strided_slice %18 {offsets = [0, 11], sizes = [32, 80], strides = [1, 1]} : vector<32x110xbf16> to vector<32x80xbf16>
    %24 = vector.extract_strided_slice %18 {offsets = [0, 12], sizes = [32, 80], strides = [1, 1]} : vector<32x110xbf16> to vector<32x80xbf16>
    %25 = vector.extract_strided_slice %18 {offsets = [0, 20], sizes = [32, 80], strides = [1, 1]} : vector<32x110xbf16> to vector<32x80xbf16>
    %26 = vector.extract_strided_slice %18 {offsets = [0, 21], sizes = [32, 80], strides = [1, 1]} : vector<32x110xbf16> to vector<32x80xbf16>
    %27 = vector.extract_strided_slice %18 {offsets = [0, 22], sizes = [32, 80], strides = [1, 1]} : vector<32x110xbf16> to vector<32x80xbf16>
    %28 = tpu.concatenate %5, %6, %7, %8, %9, %10, %11, %12, %13, %19, %20, %21, %22, %23, %24, %25 in 0 : vector<16x80xbf16>, vector<16x80xbf16>, vector<16x80xbf16>, vector<16x80xbf16>, vector<16x80xbf16>, vector<16x80xbf16>, vector<16x80xbf16>, vector<16x80xbf16>, vector<16x80xbf16>, vector<32x80xbf16>, vector<32x80xbf16>, vector<32x80xbf16>, vector<32x80xbf16>, vector<32x80xbf16>, vector<32x80xbf16>, vector<32x80xbf16> -> vector<368x80xbf16>
    %29 = tpu.concatenate %26, %27 in 0 : vector<32x80xbf16>, vector<32x80xbf16> -> vector<64x80xbf16>
    %30 = tpu.concatenate %28, %29 in 0 : vector<368x80xbf16>, vector<64x80xbf16> -> vector<432x80xbf16>
    %c0_10 = arith.constant 0 : index
    %c0_11 = arith.constant 0 : index
    %31 = vector.load %arg6[%c0_10, %c0_11] : memref<8x432xbf16, #tpu.memory_space<vmem>>, vector<8x432xbf16>
    %cst_12 = arith.constant dense<0.000000e+00> : vector<8x80xf32>
    %32 = tpu.matmul %31, %30, %cst_12 {dimension_numbers = #tpu.dot_dimension_numbers<[1], [0], [0], [1], [0, 0, 1, 1], [], []>} : vector<8x432xbf16>, vector<432x80xbf16>, vector<8x80xf32> -> vector<8x80xf32>
    %c0_13 = arith.constant 0 : index
    %c0_14 = arith.constant 0 : index
    %33 = vector.load %arg7[%c0_13, %c0_14] : memref<8x1xf32, #tpu.memory_space<vmem>>, vector<8x1xf32>
    %34 = vector.broadcast %33 : vector<8x1xf32> to vector<8x80xf32>
    %35 = arith.addf %32, %34 : vector<8x80xf32>
    %c0_15 = arith.constant 0 : index
    %c0_16 = arith.constant 0 : index
    %c0_17 = arith.constant 0 : index
    %36 = vector.load %arg1[%c0_15, %c0_16, %c0_17] : memref<1x8x80xf32, #tpu.memory_space<vmem>>, vector<1x8x80xf32>
    %37 = vector.shape_cast %36 : vector<1x8x80xf32> to vector<8x80xf32>
    %38 = arith.mulf %37, %35 : vector<8x80xf32>
    %c0_18 = arith.constant 0 : index
    %c0_19 = arith.constant 0 : index
    %c0_20 = arith.constant 0 : index
    %39 = vector.load %arg8[%c0_18, %c0_19, %c0_20] : memref<1x8x80xf32, #tpu.memory_space<vmem>>, vector<1x8x80xf32>
    %40 = vector.shape_cast %39 : vector<1x8x80xf32> to vector<8x80xf32>
    %41 = vector.shape_cast %38 : vector<8x80xf32> to vector<1x8x80xf32>
    tpu.vector_store %arg8[%c0_18, %c0_19, %c0_20], %41 {strides = array<i32>} : memref<1x8x80xf32, #tpu.memory_space<vmem>>, vector<1x8x80xf32>,
    return
  }
  func.func @transform_0(%arg0: i32) -> (i32, i32, i32) {
    %c0_i32 = arith.constant 0 : i32
    %c0_i32_0 = arith.constant 0 : i32
    %c0_i32_1 = arith.constant 0 : i32
    return %arg0, %c0_i32, %c0_i32_0 : i32, i32, i32
  }
  func.func @transform_1(%arg0: i32) -> (i32, i32, i32) {
    %c0_i32 = arith.constant 0 : i32
    %c0_i32_0 = arith.constant 0 : i32
    %c0_i32_1 = arith.constant 0 : i32
    return %arg0, %c0_i32, %c0_i32_0 : i32, i32, i32
  }
  func.func @transform_2(%arg0: i32) -> (i32, i32) {
    %c0_i32 = arith.constant 0 : i32
    %c0_i32_0 = arith.constant 0 : i32
    %c0_i32_1 = arith.constant 0 : i32
    return %c0_i32, %c0_i32_0 : i32, i32
  }
  func.func @transform_3(%arg0: i32) -> (i32, i32, i32) {
    %c0_i32 = arith.constant 0 : i32
    %c0_i32_0 = arith.constant 0 : i32
    %c0_i32_1 = arith.constant 0 : i32
    return %arg0, %c0_i32, %c0_i32_0 : i32, i32, i32
  }
  func.func @transform_4(%arg0: i32) -> (i32, i32) {
    %c0_i32 = arith.constant 0 : i32
    %c0_i32_0 = arith.constant 0 : i32
    %c0_i32_1 = arith.constant 0 : i32
    return %c0_i32, %c0_i32_0 : i32, i32
  }
  func.func @transform_5(%arg0: i32) -> (i32, i32) {
    %c0_i32 = arith.constant 0 : i32
    %c0_i32_0 = arith.constant 0 : i32
    %c0_i32_1 = arith.constant 0 : i32
    return %c0_i32, %c0_i32_0 : i32, i32
  }
  func.func @transform_6(%arg0: i32) -> (i32, i32) {
    %c0_i32 = arith.constant 0 : i32
    %c0_i32_0 = arith.constant 0 : i32
    %c0_i32_1 = arith.constant 0 : i32
    return %c0_i32, %c0_i32_0 : i32, i32
  }
  func.func @transform_7(%arg0: i32) -> (i32, i32, i32) {
    %c0_i32 = arith.constant 0 : i32
    %c0_i32_0 = arith.constant 0 : i32
    %c0_i32_1 = arith.constant 0 : i32
    return %arg0, %c0_i32, %c0_i32_0 : i32, i32, i32
  }
}

module attributes {stable_mosaic.version = 11 : i64} {
  func.func @kernel(%arg0: i32, %arg1: memref<1x16x24xf32, #tpu.memory_space<vmem>>, %arg2: memref<1x32x4xbf16, #tpu.memory_space<vmem>>, %arg3: memref<4x42xbf16, #tpu.memory_space<vmem>>, %arg4: memref<32x288xbf16, #tpu.memory_space<vmem>>, %arg5: memref<32x1xf32, #tpu.memory_space<vmem>>, %arg6: memref<1x16x24xf32, #tpu.memory_space<vmem>>, %arg7: memref<1x16x24xf32, #tpu.memory_space<vmem>>) attributes {dimension_semantics = [#tpu.dimension_semantics<parallel>], iteration_bounds = array<i64: 2>, scalar_prefetch = 0 : i64, scratch_operands = 0 : i64, tpu.core_type = #tpu.core_type<tc>, window_params = [{transform_indices = @transform_0, window_bounds = array<i64: 1, 16, 24>}, {transform_indices = @transform_1, window_bounds = array<i64: 1, 32, 4>}, {pipeline_mode = #tpu.pipeline_mode<synchronous>, transform_indices = @transform_2, window_bounds = array<i64: 4, 42>}, {pipeline_mode = #tpu.pipeline_mode<synchronous>, transform_indices = @transform_3, window_bounds = array<i64: 32, 288>}, {pipeline_mode = #tpu.pipeline_mode<synchronous>, transform_indices = @transform_4, window_bounds = array<i64: 32, 1>}, {transform_indices = @transform_5, window_bounds = array<i64: 1, 16, 24>}, {transform_indices = @transform_6, window_bounds = array<i64: 1, 16, 24>}]} {
    %c0 = arith.constant 0 : index
    %c0_0 = arith.constant 0 : index
    %c0_1 = arith.constant 0 : index
    %0 = vector.load %arg2[%c0, %c0_0, %c0_1] : memref<1x32x4xbf16, #tpu.memory_space<vmem>>, vector<1x32x4xbf16>
    %1 = vector.shape_cast %0 : vector<1x32x4xbf16> to vector<32x4xbf16>
    %c0_2 = arith.constant 0 : index
    %c0_3 = arith.constant 0 : index
    %2 = vector.load %arg3[%c0_2, %c0_3] : memref<4x42xbf16, #tpu.memory_space<vmem>>, vector<4x42xbf16>
    %cst = arith.constant dense<0.000000e+00> : vector<32x42xf32>
    %3 = tpu.matmul %1, %2, %cst {dimension_numbers = #tpu.dot_dimension_numbers<[1], [0], [0], [1], [0, 0, 1, 1], [], []>} : vector<32x4xbf16>, vector<4x42xbf16>, vector<32x42xf32> -> vector<32x42xf32>
    %4 = arith.truncf %3 : vector<32x42xf32> to vector<32x42xbf16>
    %5 = vector.extract_strided_slice %4 {offsets = [0, 0], sizes = [32, 24], strides = [1, 1]} : vector<32x42xbf16> to vector<32x24xbf16>
    %6 = vector.extract_strided_slice %4 {offsets = [0, 1], sizes = [32, 24], strides = [1, 1]} : vector<32x42xbf16> to vector<32x24xbf16>
    %7 = vector.extract_strided_slice %4 {offsets = [0, 2], sizes = [32, 24], strides = [1, 1]} : vector<32x42xbf16> to vector<32x24xbf16>
    %8 = vector.extract_strided_slice %4 {offsets = [0, 6], sizes = [32, 24], strides = [1, 1]} : vector<32x42xbf16> to vector<32x24xbf16>
    %9 = vector.extract_strided_slice %4 {offsets = [0, 7], sizes = [32, 24], strides = [1, 1]} : vector<32x42xbf16> to vector<32x24xbf16>
    %10 = vector.extract_strided_slice %4 {offsets = [0, 8], sizes = [32, 24], strides = [1, 1]} : vector<32x42xbf16> to vector<32x24xbf16>
    %11 = vector.extract_strided_slice %4 {offsets = [0, 12], sizes = [32, 24], strides = [1, 1]} : vector<32x42xbf16> to vector<32x24xbf16>
    %12 = vector.extract_strided_slice %4 {offsets = [0, 13], sizes = [32, 24], strides = [1, 1]} : vector<32x42xbf16> to vector<32x24xbf16>
    %13 = vector.extract_strided_slice %4 {offsets = [0, 14], sizes = [32, 24], strides = [1, 1]} : vector<32x42xbf16> to vector<32x24xbf16>
    %14 = tpu.concatenate %5, %6, %7, %8, %9, %10, %11, %12, %13 in 0 : vector<32x24xbf16>, vector<32x24xbf16>, vector<32x24xbf16>, vector<32x24xbf16>, vector<32x24xbf16>, vector<32x24xbf16>, vector<32x24xbf16>, vector<32x24xbf16>, vector<32x24xbf16> -> vector<288x24xbf16>
    %c0_4 = arith.constant 0 : index
    %c0_5 = arith.constant 0 : index
    %15 = vector.load %arg4[%c0_4, %c0_5] : memref<32x288xbf16, #tpu.memory_space<vmem>>, vector<32x288xbf16>
    %cst_6 = arith.constant dense<0.000000e+00> : vector<32x24xf32>
    %16 = tpu.matmul %15, %14, %cst_6 {dimension_numbers = #tpu.dot_dimension_numbers<[1], [0], [0], [1], [0, 0, 1, 1], [], []>} : vector<32x288xbf16>, vector<288x24xbf16>, vector<32x24xf32> -> vector<32x24xf32>
    %c0_7 = arith.constant 0 : index
    %c0_8 = arith.constant 0 : index
    %17 = vector.load %arg5[%c0_7, %c0_8] : memref<32x1xf32, #tpu.memory_space<vmem>>, vector<32x1xf32>
    %18 = vector.broadcast %17 : vector<32x1xf32> to vector<32x24xf32>
    %19 = arith.addf %16, %18 : vector<32x24xf32>
    %c0_9 = arith.constant 0 : index
    %c0_10 = arith.constant 0 : index
    %c0_11 = arith.constant 0 : index
    %20 = vector.load %arg1[%c0_9, %c0_10, %c0_11] : memref<1x16x24xf32, #tpu.memory_space<vmem>>, vector<1x16x24xf32>
    %21 = vector.shape_cast %20 : vector<1x16x24xf32> to vector<16x24xf32>
    %22 = vector.extract_strided_slice %19 {offsets = [0, 0], sizes = [16, 24], strides = [1, 1]} : vector<32x24xf32> to vector<16x24xf32>
    %23 = arith.mulf %21, %22 : vector<16x24xf32>
    %c0_12 = arith.constant 0 : index
    %c0_13 = arith.constant 0 : index
    %c0_14 = arith.constant 0 : index
    %24 = vector.load %arg6[%c0_12, %c0_13, %c0_14] : memref<1x16x24xf32, #tpu.memory_space<vmem>>, vector<1x16x24xf32>
    %25 = vector.shape_cast %24 : vector<1x16x24xf32> to vector<16x24xf32>
    %26 = vector.shape_cast %23 : vector<16x24xf32> to vector<1x16x24xf32>
    tpu.vector_store %arg6[%c0_12, %c0_13, %c0_14], %26 {strides = array<i32>} : memref<1x16x24xf32, #tpu.memory_space<vmem>>, vector<1x16x24xf32>,
    %27 = vector.extract_strided_slice %19 {offsets = [16, 0], sizes = [16, 24], strides = [1, 1]} : vector<32x24xf32> to vector<16x24xf32>
    %c0_15 = arith.constant 0 : index
    %c0_16 = arith.constant 0 : index
    %c0_17 = arith.constant 0 : index
    %28 = vector.load %arg7[%c0_15, %c0_16, %c0_17] : memref<1x16x24xf32, #tpu.memory_space<vmem>>, vector<1x16x24xf32>
    %29 = vector.shape_cast %28 : vector<1x16x24xf32> to vector<16x24xf32>
    %30 = vector.shape_cast %27 : vector<16x24xf32> to vector<1x16x24xf32>
    tpu.vector_store %arg7[%c0_15, %c0_16, %c0_17], %30 {strides = array<i32>} : memref<1x16x24xf32, #tpu.memory_space<vmem>>, vector<1x16x24xf32>,
    return
  }
  func.func @transform_0(%arg0: i32) -> (i32, i32, i32) {
    %c0_i32 = arith.constant 0 : i32
    %c0_i32_0 = arith.constant 0 : i32
    %c0_i32_1 = arith.constant 0 : i32
    return %arg0, %c0_i32, %c0_i32_0 : i32, i32, i32
  }
  func.func @transform_1(%arg0: i32) -> (i32, i32, i32) {
    %c0_i32 = arith.constant 0 : i32
    %c0_i32_0 = arith.constant 0 : i32
    %c0_i32_1 = arith.constant 0 : i32
    return %arg0, %c0_i32, %c0_i32_0 : i32, i32, i32
  }
  func.func @transform_2(%arg0: i32) -> (i32, i32) {
    %c0_i32 = arith.constant 0 : i32
    %c0_i32_0 = arith.constant 0 : i32
    %c0_i32_1 = arith.constant 0 : i32
    return %c0_i32, %c0_i32_0 : i32, i32
  }
  func.func @transform_3(%arg0: i32) -> (i32, i32) {
    %c0_i32 = arith.constant 0 : i32
    %c0_i32_0 = arith.constant 0 : i32
    %c0_i32_1 = arith.constant 0 : i32
    return %c0_i32, %c0_i32_0 : i32, i32
  }
  func.func @transform_4(%arg0: i32) -> (i32, i32) {
    %c0_i32 = arith.constant 0 : i32
    %c0_i32_0 = arith.constant 0 : i32
    %c0_i32_1 = arith.constant 0 : i32
    return %c0_i32, %c0_i32_0 : i32, i32
  }
  func.func @transform_5(%arg0: i32) -> (i32, i32, i32) {
    %c0_i32 = arith.constant 0 : i32
    %c0_i32_0 = arith.constant 0 : i32
    %c0_i32_1 = arith.constant 0 : i32
    return %arg0, %c0_i32, %c0_i32_0 : i32, i32, i32
  }
  func.func @transform_6(%arg0: i32) -> (i32, i32, i32) {
    %c0_i32 = arith.constant 0 : i32
    %c0_i32_0 = arith.constant 0 : i32
    %c0_i32_1 = arith.constant 0 : i32
    return %arg0, %c0_i32, %c0_i32_0 : i32, i32, i32
  }
}

</mosaic_0001>

<llo_original>
// kernel: bba_forward.3
$region0: #{bba_forward.3}
  #allocation0 [shape = 'u32[]', space=smem, size = 0x4, offset = 0x4, fixed_abs, tag = 'smem constant byte address 0x4 - core index']
  #allocation1 [shape = 'u32[144,128]{1,0:T(1,128)}', space=vmem, size = 0x12000, scoped, tag = 'internal scratch']
  %s0 = inlined_call_operand.vmem [shape: f32[2,4,288], index: 0, kind: input, shape index: {}]
  %s1 = inlined_call_operand.vmem [shape: bf16[2,8,64], index: 1, kind: input, shape index: {}]
  %s2 = inlined_call_operand.vmem [shape: bf16[64,342], index: 2, kind: input, shape index: {}]
  %s3 = inlined_call_operand.vmem [shape: bf16[2,16,16], index: 3, kind: input, shape index: {}]
  %s4 = inlined_call_operand.vmem [shape: bf16[16,342], index: 4, kind: input, shape index: {}]
  %s5 = inlined_call_operand.vmem [shape: bf16[2,32,4], index: 5, kind: input, shape index: {}]
  %s6 = inlined_call_operand.vmem [shape: bf16[4,342], index: 6, kind: input, shape index: {}]
  %s7 = inlined_call_operand.vmem [shape: bf16[4,504], index: 7, kind: input, shape index: {}]
  %s8 = inlined_call_operand.vmem [shape: f32[4,1], index: 8, kind: input, shape index: {}]
  %s9 = inlined_call_operand.vmem [shape: f32[2,4,288], index: 9, kind: output, shape index: {}]
  %s10 = sld [smem:[#allocation0]]
  $region69: #{bba_forward.3} parent=0
    _
  %s12 = ssub.s32 1, %s10
  %s13 = scalar_select 0, %s12, %s10
  loop: start=0, step=1, limit=4
  $region2: #{bba_forward.3} parent=0 // loop_pre_header
    _
  $region3: #{bba_forward.3} parent=0 // loop_header
    %s15 = sphi 0, %s19
    %p16 = scmp.ge.s32.totalorder %s15, 4
    %s25 = sphi 0, %s27
    %s28 = sphi 0, %s25
    %s29 = sphi 0, %s28
    %s45 = sphi 0, %s29
    %s51 = sphi 0, %s53
    %s54 = sphi 0, %s51
    %s55 = sphi 0, %s54
    %s71 = sphi 0, %s55
    %s75 = sphi 0, %s75
    %s77 = sphi 0, %s75
    %s78 = sphi 0, %s77
    %s92 = sphi 0, %s78
    %s98 = sphi 0, %s100
    %s101 = sphi 0, %s98
    %s102 = sphi 0, %s101
    %s118 = sphi 0, %s102
    %s122 = sphi 0, %s122
    %s124 = sphi 0, %s122
    %s125 = sphi 0, %s124
    %s139 = sphi 0, %s125
    %s145 = sphi 0, %s147
    %s148 = sphi 0, %s145
    %s149 = sphi 0, %s148
    %s165 = sphi 0, %s149
    %s169 = sphi 0, %s169
    %s171 = sphi 0, %s169
    %s172 = sphi 0, %s171
    %s186 = sphi 0, %s172
    %s190 = sphi 0, %s190
    %s192 = sphi 0, %s190
    %s193 = sphi 0, %s192
    %s207 = sphi 0, %s193
    %s211 = sphi 0, %s211
    %s213 = sphi 0, %s211
    %s214 = sphi 0, %s213
    %s228 = sphi 0, %s214
    %s234 = sphi 0, %s236
    %s237 = sphi 0, %s234
    %s238 = sphi 0, %s237
    %s254 = sphi 0, %s238
  $region4: #{bba_forward.3} parent=0 // loop_header_branch
    %18 = sbr.rel (%p16) target = $region8
  $region5: #{bba_forward.3} parent=0 // loop_body
    %s20 = ssub.s32 %s15, 1
    %s21 = ssub.s32 %s15, 2
    %s22 = sadd.s32 %s15, 1
    %s23 = ssub.s32 %s15, %s22
    %p24 = scmp.eq.s32.totalorder %s23, 0
    %s26 = sadd.s32 %s25, 1
    %s27 = scalar_select %p24, %s25, %s26
    %p30 = pneg %p24
    %p31 = scmp.eq.s32.totalorder %s15, 1
    %p32 = por %p30, %p31
    %p33 = scmp.ne.s32.totalorder %s25, %s28
    %p34 = scmp.eq.s32.totalorder %s15, 0
    %p35 = por %p33, %p34
    %p36 = scmp.ne.s32.totalorder %s25, %s28
    %p37 = scmp.eq.s32.totalorder %s20, 1
    %p38 = por %p36, %p37
    %p39 = scmp.ne.s32.totalorder %s28, %s29
    %p40 = scmp.eq.s32.totalorder %s20, 0
    %p41 = por %p39, %p40
    %p42 = scmp.ne.s32.totalorder %s28, %s29
    %p43 = scmp.eq.s32.totalorder %s21, 1
    %p44 = por %p42, %p43
    %p46 = scmp.ne.s32.totalorder %s29, %s45
    %p47 = scmp.eq.s32.totalorder %s21, 0
    %p48 = por %p46, %p47
    %s49 = ssub.s32 %s15, %s22
    %p50 = scmp.eq.s32.totalorder %s49, 0
    %s52 = sadd.s32 %s51, 1
    %s53 = scalar_select %p50, %s51, %s52
    %p56 = pneg %p50
    %p57 = scmp.eq.s32.totalorder %s15, 1
    %p58 = por %p56, %p57
    %p59 = scmp.ne.s32.totalorder %s51, %s54
    %p60 = scmp.eq.s32.totalorder %s15, 0
    %p61 = por %p59, %p60
    %p62 = scmp.ne.s32.totalorder %s51, %s54
    %p63 = scmp.eq.s32.totalorder %s20, 1
    %p64 = por %p62, %p63
    %p65 = scmp.ne.s32.totalorder %s54, %s55
    %p66 = scmp.eq.s32.totalorder %s20, 0
    %p67 = por %p65, %p66
    %p68 = scmp.ne.s32.totalorder %s54, %s55
    %p69 = scmp.eq.s32.totalorder %s21, 1
    %p70 = por %p68, %p69
    %p72 = scmp.ne.s32.totalorder %s55, %s71
    %p73 = scmp.eq.s32.totalorder %s21, 0
    %p74 = por %p72, %p73
    %s76 = sadd.s32 %s75, 1
    %p79 = scmp.eq.s32.totalorder %s15, 1
    %p80 = scmp.ne.s32.totalorder %s75, %s77
    %p81 = scmp.eq.s32.totalorder %s15, 0
    %p82 = por %p80, %p81
    %p83 = scmp.ne.s32.totalorder %s75, %s77
    %p84 = scmp.eq.s32.totalorder %s20, 1
    %p85 = por %p83, %p84
    %p86 = scmp.ne.s32.totalorder %s77, %s78
    %p87 = scmp.eq.s32.totalorder %s20, 0
    %p88 = por %p86, %p87
    %p89 = scmp.ne.s32.totalorder %s77, %s78
    %p90 = scmp.eq.s32.totalorder %s21, 1
    %p91 = por %p89, %p90
    %p93 = scmp.ne.s32.totalorder %s78, %s92
    %p94 = scmp.eq.s32.totalorder %s21, 0
    %p95 = por %p93, %p94
    %s96 = ssub.s32 %s15, %s22
    %p97 = scmp.eq.s32.totalorder %s96, 0
    %s99 = sadd.s32 %s98, 1
    %s100 = scalar_select %p97, %s98, %s99
    %p103 = pneg %p97
    %p104 = scmp.eq.s32.totalorder %s15, 1
    %p105 = por %p103, %p104
    %p106 = scmp.ne.s32.totalorder %s98, %s101
    %p107 = scmp.eq.s32.totalorder %s15, 0
    %p108 = por %p106, %p107
    %p109 = scmp.ne.s32.totalorder %s98, %s101
    %p110 = scmp.eq.s32.totalorder %s20, 1
    %p111 = por %p109, %p110
    %p112 = scmp.ne.s32.totalorder %s101, %s102
    %p113 = scmp.eq.s32.totalorder %s20, 0
    %p114 = por %p112, %p113
    %p115 = scmp.ne.s32.totalorder %s101, %s102
    %p116 = scmp.eq.s32.totalorder %s21, 1
    %p117 = por %p115, %p116
    %p119 = scmp.ne.s32.totalorder %s102, %s118
    %p120 = scmp.eq.s32.totalorder %s21, 0
    %p121 = por %p119, %p120
    %s123 = sadd.s32 %s122, 1
    %p126 = scmp.eq.s32.totalorder %s15, 1
    %p127 = scmp.ne.s32.totalorder %s122, %s124
    %p128 = scmp.eq.s32.totalorder %s15, 0
    %p129 = por %p127, %p128
    %p130 = scmp.ne.s32.totalorder %s122, %s124
    %p131 = scmp.eq.s32.totalorder %s20, 1
    %p132 = por %p130, %p131
    %p133 = scmp.ne.s32.totalorder %s124, %s125
    %p134 = scmp.eq.s32.totalorder %s20, 0
    %p135 = por %p133, %p134
    %p136 = scmp.ne.s32.totalorder %s124, %s125
    %p137 = scmp.eq.s32.totalorder %s21, 1
    %p138 = por %p136, %p137
    %p140 = scmp.ne.s32.totalorder %s125, %s139
    %p141 = scmp.eq.s32.totalorder %s21, 0
    %p142 = por %p140, %p141
    %s143 = ssub.s32 %s15, %s22
    %p144 = scmp.eq.s32.totalorder %s143, 0
    %s146 = sadd.s32 %s145, 1
    %s147 = scalar_select %p144, %s145, %s146
    %p150 = pneg %p144
    %p151 = scmp.eq.s32.totalorder %s15, 1
    %p152 = por %p150, %p151
    %p153 = scmp.ne.s32.totalorder %s145, %s148
    %p154 = scmp.eq.s32.totalorder %s15, 0
    %p155 = por %p153, %p154
    %p156 = scmp.ne.s32.totalorder %s145, %s148
    %p157 = scmp.eq.s32.totalorder %s20, 1
    %p158 = por %p156, %p157
    %p159 = scmp.ne.s32.totalorder %s148, %s149
    %p160 = scmp.eq.s32.totalorder %s20, 0
    %p161 = por %p159, %p160
    %p162 = scmp.ne.s32.totalorder %s148, %s149
    %p163 = scmp.eq.s32.totalorder %s21, 1
    %p164 = por %p162, %p163
    %p166 = scmp.ne.s32.totalorder %s149, %s165
    %p167 = scmp.eq.s32.totalorder %s21, 0
    %p168 = por %p166, %p167
    %s170 = sadd.s32 %s169, 1
    %p173 = scmp.eq.s32.totalorder %s15, 1
    %p174 = scmp.ne.s32.totalorder %s169, %s171
    %p175 = scmp.eq.s32.totalorder %s15, 0
    %p176 = por %p174, %p175
    %p177 = scmp.ne.s32.totalorder %s169, %s171
    %p178 = scmp.eq.s32.totalorder %s20, 1
    %p179 = por %p177, %p178
    %p180 = scmp.ne.s32.totalorder %s171, %s172
    %p181 = scmp.eq.s32.totalorder %s20, 0
    %p182 = por %p180, %p181
    %p183 = scmp.ne.s32.totalorder %s171, %s172
    %p184 = scmp.eq.s32.totalorder %s21, 1
    %p185 = por %p183, %p184
    %p187 = scmp.ne.s32.totalorder %s172, %s186
    %p188 = scmp.eq.s32.totalorder %s21, 0
    %p189 = por %p187, %p188
    %s191 = sadd.s32 %s190, 1
    %p194 = scmp.eq.s32.totalorder %s15, 1
    %p195 = scmp.ne.s32.totalorder %s190, %s192
    %p196 = scmp.eq.s32.totalorder %s15, 0
    %p197 = por %p195, %p196
    %p198 = scmp.ne.s32.totalorder %s190, %s192
    %p199 = scmp.eq.s32.totalorder %s20, 1
    %p200 = por %p198, %p199
    %p201 = scmp.ne.s32.totalorder %s192, %s193
    %p202 = scmp.eq.s32.totalorder %s20, 0
    %p203 = por %p201, %p202
    %p204 = scmp.ne.s32.totalorder %s192, %s193
    %p205 = scmp.eq.s32.totalorder %s21, 1
    %p206 = por %p204, %p205
    %p208 = scmp.ne.s32.totalorder %s193, %s207
    %p209 = scmp.eq.s32.totalorder %s21, 0
    %p210 = por %p208, %p209
    %s212 = sadd.s32 %s211, 1
    %p215 = scmp.eq.s32.totalorder %s15, 1
    %p216 = scmp.ne.s32.totalorder %s211, %s213
    %p217 = scmp.eq.s32.totalorder %s15, 0
    %p218 = por %p216, %p217
    %p219 = scmp.ne.s32.totalorder %s211, %s213
    %p220 = scmp.eq.s32.totalorder %s20, 1
    %p221 = por %p219, %p220
    %p222 = scmp.ne.s32.totalorder %s213, %s214
    %p223 = scmp.eq.s32.totalorder %s20, 0
    %p224 = por %p222, %p223
    %p225 = scmp.ne.s32.totalorder %s213, %s214
    %p226 = scmp.eq.s32.totalorder %s21, 1
    %p227 = por %p225, %p226
    %p229 = scmp.ne.s32.totalorder %s214, %s228
    %p230 = scmp.eq.s32.totalorder %s21, 0
    %p231 = por %p229, %p230
    %s232 = ssub.s32 %s15, %s22
    %p233 = scmp.eq.s32.totalorder %s232, 0
    %s235 = sadd.s32 %s234, 1
    %s236 = scalar_select %p233, %s234, %s235
    %p239 = pneg %p233
    %p240 = scmp.eq.s32.totalorder %s15, 1
    %p241 = por %p239, %p240
    %p242 = scmp.ne.s32.totalorder %s234, %s237
    %p243 = scmp.eq.s32.totalorder %s15, 0
    %p244 = por %p242, %p243
    %p245 = scmp.ne.s32.totalorder %s234, %s237
    %p246 = scmp.eq.s32.totalorder %s20, 1
    %p247 = por %p245, %p246
    %p248 = scmp.ne.s32.totalorder %s237, %s238
    %p249 = scmp.eq.s32.totalorder %s20, 0
    %p250 = por %p248, %p249
    %p251 = scmp.ne.s32.totalorder %s237, %s238
    %p252 = scmp.eq.s32.totalorder %s21, 1
    %p253 = por %p251, %p252
    %p255 = scmp.ne.s32.totalorder %s238, %s254
    %p256 = scmp.eq.s32.totalorder %s21, 0
    %p257 = por %p255, %p256
    %p258 = scmp.le.s32.totalorder 1, %s15
    %p259 = scmp.lt.s32.totalorder %s15, 3
    %p260 = pnand %p258, %p259
    %p261 = pneg %p260
    // Predicated region
    $region9: #{bba_forward.3} parent=5 // pred_check
      _
    $region10: #{bba_forward.3} parent=5 // pred_check_branch
      %263 = sbr.rel (%p260) target = $region12
    $region11: #{bba_forward.3} parent=5 // pred_region
      %s264 = ssub.s32 %s15, 1
      // Predicated region
      $region13: #{bba_forward.3} parent=11 // pred_check
        %p265 = pneg %p88
      $region14: #{bba_forward.3} parent=11 // pred_check_branch
        %267 = sbr.rel (%p265) target = $region16
      $region15: #{bba_forward.3} parent=11 // pred_region
        _
      $region16: #{bba_forward.3} parent=11 // pred_fallthru
        _
      // Predicated region
      $region17: #{bba_forward.3} parent=11 // pred_check
        %p268 = pneg %p135
      $region18: #{bba_forward.3} parent=11 // pred_check_branch
        %270 = sbr.rel (%p268) target = $region20
      $region19: #{bba_forward.3} parent=11 // pred_region
        _
      $region20: #{bba_forward.3} parent=11 // pred_fallthru
        _
      // Predicated region
      $region21: #{bba_forward.3} parent=11 // pred_check
        %p271 = pneg %p182
      $region22: #{bba_forward.3} parent=11 // pred_check_branch
        %273 = sbr.rel (%p271) target = $region24
      $region23: #{bba_forward.3} parent=11 // pred_region
        _
      $region24: #{bba_forward.3} parent=11 // pred_fallthru
        _
      // Predicated region
      $region25: #{bba_forward.3} parent=11 // pred_check
        %p274 = pneg %p203
      $region26: #{bba_forward.3} parent=11 // pred_check_branch
        %276 = sbr.rel (%p274) target = $region28
      $region27: #{bba_forward.3} parent=11 // pred_region
        _
      $region28: #{bba_forward.3} parent=11 // pred_fallthru
        _
      // Predicated region
      $region29: #{bba_forward.3} parent=11 // pred_check
        %p277 = pneg %p224
      $region30: #{bba_forward.3} parent=11 // pred_check_branch
        %279 = sbr.rel (%p277) target = $region32
      $region31: #{bba_forward.3} parent=11 // pred_region
        _
      $region32: #{bba_forward.3} parent=11 // pred_fallthru
        _
    $region12: #{bba_forward.3} parent=5 // pred_fallthru
      _
    %p280 = scmp.lt.s32.totalorder %s15, 2
    // Predicated region
    $region33: #{bba_forward.3} parent=5 // pred_check
      %p281 = pneg %p280
    $region34: #{bba_forward.3} parent=5 // pred_check_branch
      %283 = sbr.rel (%p281) target = $region36
    $region35: #{bba_forward.3} parent=5 // pred_region
      // Predicated region
      $region37: #{bba_forward.3} parent=35 // pred_check
        %p284 = pneg %p35
      $region38: #{bba_forward.3} parent=35 // pred_check_branch
        %286 = sbr.rel (%p284) target = $region40
      $region39: #{bba_forward.3} parent=35 // pred_region
        %p287 = scmp.lt.s32.totalorder %s15, 1
        %s288 = scalar_select %p287, %s15, 1
        %s289 = smul.addr %s288, 3
        %s290 = smul.addr %s289, 4
        %s291 = scalar_lea.vmem %s0, %s290
      $region40: #{bba_forward.3} parent=35 // pred_fallthru
        _
      // Predicated region
      $region41: #{bba_forward.3} parent=35 // pred_check
        %p292 = pneg %p61
      $region42: #{bba_forward.3} parent=35 // pred_check_branch
        %294 = sbr.rel (%p292) target = $region44
      $region43: #{bba_forward.3} parent=35 // pred_region
        %p295 = scmp.lt.s32.totalorder %s15, 1
        %s296 = scalar_select %p295, %s15, 1
        %s297 = smul.addr %s296, 4
        %s298 = scalar_lea.vmem %s1, %s297
      $region44: #{bba_forward.3} parent=35 // pred_fallthru
        _
      // Predicated region
      $region45: #{bba_forward.3} parent=35 // pred_check
        %p299 = pneg %p108
      $region46: #{bba_forward.3} parent=35 // pred_check_branch
        %301 = sbr.rel (%p299) target = $region48
      $region47: #{bba_forward.3} parent=35 // pred_region
        %p302 = scmp.lt.s32.totalorder %s15, 1
        %s303 = scalar_select %p302, %s15, 1
        %s304 = smul.addr %s303, 2
        %s305 = smul.addr %s304, 4
        %s306 = scalar_lea.vmem %s3, %s305
      $region48: #{bba_forward.3} parent=35 // pred_fallthru
        _
      // Predicated region
      $region49: #{bba_forward.3} parent=35 // pred_check
        %p307 = pneg %p155
      $region50: #{bba_forward.3} parent=35 // pred_check_branch
        %309 = sbr.rel (%p307) target = $region52
      $region51: #{bba_forward.3} parent=35 // pred_region
        %p310 = scmp.lt.s32.totalorder %s15, 1
        %s311 = scalar_select %p310, %s15, 1
        %s312 = smul.addr %s311, 4
        %s313 = smul.addr %s312, 4
        %s314 = scalar_lea.vmem %s5, %s313
      $region52: #{bba_forward.3} parent=35 // pred_fallthru
        _
    $region36: #{bba_forward.3} parent=5 // pred_fallthru
      _
    %p315 = scmp.le.s32.totalorder 1, %s15
    %p316 = scmp.lt.s32.totalorder %s15, 3
    %p317 = pnand %p315, %p316
    %p318 = pneg %p317
    // Predicated region
    $region53: #{bba_forward.3} parent=5 // pred_check
      _
    $region54: #{bba_forward.3} parent=5 // pred_check_branch
      %320 = sbr.rel (%p317) target = $region56
    $region55: #{bba_forward.3} parent=5 // pred_region
      %s321 = ssub.s32 %s15, 1
      %p322 = scmp.lt.s32.totalorder %s20, 1
      %s323 = scalar_select %p322, %s20, 1
      %s324 = smul.addr %s323, 3
      %s325 = smul.addr %s324, 4
      %s326 = scalar_lea.vmem %s0, %s325
      %p327 = pneg %p41
      %p328 = pneg %p38
      %p329 = scmp.lt.s32.totalorder %s20, 1
      %s330 = scalar_select %p329, %s20, 1
      %s331 = smul.addr %s330, 4
      %s332 = scalar_lea.vmem %s1, %s331
      %p333 = pneg %p67
      %p334 = pneg %p64
      %p335 = pneg %p88
      %p336 = pneg %p85
      %p337 = scmp.lt.s32.totalorder %s20, 1
      %s338 = scalar_select %p337, %s20, 1
      %s339 = smul.addr %s338, 2
      %s340 = smul.addr %s339, 4
      %s341 = scalar_lea.vmem %s3, %s340
      %p342 = pneg %p114
      %p343 = pneg %p111
      %p344 = pneg %p135
      %p345 = pneg %p132
      %p346 = scmp.lt.s32.totalorder %s20, 1
      %s347 = scalar_select %p346, %s20, 1
      %s348 = smul.addr %s347, 4
      %s349 = smul.addr %s348, 4
      %s350 = scalar_lea.vmem %s5, %s349
      %p351 = pneg %p161
      %p352 = pneg %p158
      %p353 = pneg %p182
      %p354 = pneg %p179
      %p355 = pneg %p203
      %p356 = pneg %p200
      %p357 = pneg %p224
      %p358 = pneg %p221
      %p359 = pneg %p250
      %p360 = pneg %p247
      %p361 = scmp.lt.s32.totalorder %s20, 1
      %s362 = scalar_select %p361, %s20, 1
      %s363 = smul.addr %s362, 3
      %s364 = smul.addr %s363, 4
      %s365 = scalar_lea.vmem %s9, %s364
      %p366 = scmp.lt.s32.totalorder %s20, 1
      %s367 = scalar_select %p366, %s20, 1
      %s368 = smul.addr %s367, 3
      %s369 = smul.addr %s368, 4
      %s370 = scalar_lea.vmem %s0, %s369
      %p371 = scmp.lt.s32.totalorder %s20, 1
      %s372 = scalar_select %p371, %s20, 1
      %s373 = smul.addr %s372, 4
      %s374 = scalar_lea.vmem %s1, %s373
      %p375 = scmp.lt.s32.totalorder %s20, 1
      %s376 = scalar_select %p375, %s20, 1
      %s377 = smul.addr %s376, 2
      %s378 = smul.addr %s377, 4
      %s379 = scalar_lea.vmem %s3, %s378
      %p380 = scmp.lt.s32.totalorder %s20, 1
      %s381 = scalar_select %p380, %s20, 1
      %s382 = smul.addr %s381, 4
      %s383 = smul.addr %s382, 4
      %s384 = scalar_lea.vmem %s5, %s383
      %p385 = scmp.lt.s32.totalorder %s20, 1
      %s386 = scalar_select %p385, %s20, 1
      %s387 = smul.addr %s386, 3
      %s388 = smul.addr %s387, 4
      %s389 = scalar_lea.vmem %s9, %s388
      %v391 = vld [vmem:[%s374] sm:$0xf]
      %v392 = vld [vmem:[%s2] sm:$0xff]
      %v393 = vld [vmem:[%s2 + $0x8] sm:$0xf]
      %v394 = vld [vmem:[%s2 + $0xc] sm:$0xff]
      %v395 = vld [vmem:[%s2 + $0x14] sm:$0xf]
      %v396 = vld [vmem:[%s2 + $0x18] sm:$0xff]
      %v397 = vld [vmem:[%s2 + $0x20] sm:$0xf]
      %v398 = vld [vmem:[%s2 + $0x24] sm:$0xff]
      %v399 = vld [vmem:[%s2 + $0x2c] sm:$0xf]
      %v400 = vld [vmem:[%s2 + $0x30] sm:$0xff]
      %v401 = vld [vmem:[%s2 + $0x38] sm:$0xf]
      %v402 = vld [vmem:[%s2 + $0x3c] sm:$0xff]
      %v403 = vld [vmem:[%s2 + $0x44] sm:$0xf]
      %v404 = vld [vmem:[%s2 + $0x48] sm:$0xff]
      %v405 = vld [vmem:[%s2 + $0x50] sm:$0xf]
      %v406 = vld [vmem:[%s2 + $0x54] sm:$0xff]
      %v407 = vld [vmem:[%s2 + $0x5c] sm:$0xf]
      %v424 = vunpack.c.l.b16 %v392
      %v425 = vunpack.c.h.b16 %v392
      %v426 = vunpack.c.l.b16 %v393
      %v427 = vunpack.c.l.b16 %v394
      %v428 = vunpack.c.h.b16 %v394
      %v429 = vunpack.c.l.b16 %v395
      %v430 = vunpack.c.l.b16 %v396
      %v431 = vunpack.c.h.b16 %v396
      %v432 = vunpack.c.l.b16 %v397
      %v433 = vunpack.c.l.b16 %v398
      %v434 = vunpack.c.h.b16 %v398
      %v435 = vunpack.c.l.b16 %v399
      %v436 = vunpack.c.l.b16 %v400
      %v437 = vunpack.c.h.b16 %v400
      %v438 = vunpack.c.l.b16 %v401
      %v439 = vunpack.c.l.b16 %v402
      %v440 = vunpack.c.h.b16 %v402
      %v441 = vunpack.c.l.b16 %v403
      %v442 = vunpack.c.l.b16 %v404
      %v443 = vunpack.c.h.b16 %v404
      %v444 = vunpack.c.l.b16 %v405
      %v445 = vunpack.c.l.b16 %v406
      %v446 = vunpack.c.h.b16 %v406
      %v447 = vunpack.c.l.b16 %v407
      %v448 = vpack.c.b16 %v427, %v424
      %v449 = vpack.c.b16 %v428, %v425
      %v450 = vpack.c.b16 %v429, %v426
      %v451 = vpack.c.b16 %v433, %v430
      %v452 = vpack.c.b16 %v434, %v431
      %v453 = vpack.c.b16 %v435, %v432
      %v454 = vpack.c.b16 %v439, %v436
      %v455 = vpack.c.b16 %v440, %v437
      %v456 = vpack.c.b16 %v441, %v438
      %v457 = vpack.c.b16 %v445, %v442
      %v458 = vpack.c.b16 %v446, %v443
      %v459 = vpack.c.b16 %v447, %v444
      %vm472 = vcmask 523264
      %v474 = vsel %vm472, %v391, 0
      %476 = vmatprep.subr.bf16.mxu0 %v449
      %477 = vmatpush1.bf16.msra.mxu0 %v448
      %478 = vmatprep.subr.bf16.mxu0 %v452
      %479 = vmatpush1.bf16.msra.mxu0 %v451
      %480 = vmatprep.subr.bf16.mxu0 %v455
      %481 = vmatpush1.bf16.msra.mxu0 %v454
      %482 = vmatprep.subr.bf16.mxu0 %v458
      %483 = vmatpush1.bf16.msra.mxu0 %v457
      %484 = vmatprep.subr.bf16.mxu0 0
      %485 = vmatpush1.bf16.msra.mxu0 0
      %486 = vmatprep.subr.bf16.mxu0 0
      %487 = vmatpush1.bf16.msra.mxu0 0
      %488 = vmatprep.subr.bf16.mxu0 0
      %489 = vmatpush1.bf16.msra.mxu0 0
      %490 = vmatprep.subr.bf16.mxu0 0
      %491 = vmatpush1.bf16.msra.mxu0 0
      %492 = vmatprep.subr.bf16.mxu0 0
      %493 = vmatpush1.bf16.msra.mxu0 0
      %494 = vmatprep.subr.bf16.mxu0 0
      %495 = vmatpush1.bf16.msra.mxu0 0
      %496 = vmatprep.subr.bf16.mxu0 0
      %497 = vmatpush1.bf16.msra.mxu0 0
      %498 = vmatprep.subr.bf16.mxu0 0
      %499 = vmatpush1.bf16.msra.mxu0 0
      %500 = vmatprep.subr.bf16.mxu0 0
      %501 = vmatpush1.bf16.msra.mxu0 0
      %502 = vmatprep.subr.bf16.mxu0 0
      %503 = vmatpush1.bf16.msra.mxu0 0
      %504 = vmatprep.subr.bf16.mxu0 0
      %505 = vmatpush1.bf16.msra.mxu0 0
      %506 = vmatprep.subr.bf16.mxu0 0
      %507 = vmatpush1.bf16.msra.mxu0 0
      %508 = vmatprep.mubr.bf16.mxu0 0
      %509 = vmatmul.mubr.bf16.gmra.mrb[0].mxu0 %v474
      %v510 = vpop.f32.mrb[0].mxu0
      %v511 = vadd.f32 0.0, %v510
      %v512 = vpop.f32.mrb[0].mxu0
      %v513 = vadd.f32 0.0, %v512
      %v514 = vpop.f32.mrb[0].mxu0
      %v515 = vpop.f32.mrb[0].mxu0
      %516 = vdwg.mxu0
      %517 = vmatprep.subr.bf16.mxu0 0
      %518 = vmatpush1.bf16.msra.mxu0 %v450
      %519 = vmatprep.subr.bf16.mxu0 0
      %520 = vmatpush1.bf16.msra.mxu0 %v453
      %521 = vmatprep.subr.bf16.mxu0 0
      %522 = vmatpush1.bf16.msra.mxu0 %v456
      %523 = vmatprep.subr.bf16.mxu0 0
      %524 = vmatpush1.bf16.msra.mxu0 %v459
      %525 = vmatprep.subr.bf16.mxu0 0
      %526 = vmatpush1.bf16.msra.mxu0 0
      %527 = vmatprep.subr.bf16.mxu0 0
      %528 = vmatpush1.bf16.msra.mxu0 0
      %529 = vmatprep.subr.bf16.mxu0 0
      %530 = vmatpush1.bf16.msra.mxu0 0
      %531 = vmatprep.subr.bf16.mxu0 0
      %532 = vmatpush1.bf16.msra.mxu0 0
      %533 = vmatprep.subr.bf16.mxu0 0
      %534 = vmatpush1.bf16.msra.mxu0 0
      %535 = vmatprep.subr.bf16.mxu0 0
      %536 = vmatpush1.bf16.msra.mxu0 0
      %537 = vmatprep.subr.bf16.mxu0 0
      %538 = vmatpush1.bf16.msra.mxu0 0
      %539 = vmatprep.subr.bf16.mxu0 0
      %540 = vmatpush1.bf16.msra.mxu0 0
      %541 = vmatprep.subr.bf16.mxu0 0
      %542 = vmatpush1.bf16.msra.mxu0 0
      %543 = vmatprep.subr.bf16.mxu0 0
      %544 = vmatpush1.bf16.msra.mxu0 0
      %545 = vmatprep.subr.bf16.mxu0 0
      %546 = vmatpush1.bf16.msra.mxu0 0
      %547 = vmatprep.subr.bf16.mxu0 0
      %548 = vmatpush1.bf16.msra.mxu0 0
      %549 = vmatprep.mubr.bf16.mxu0 0
      %550 = vmatmul.mubr.bf16.gmra.mrb[0].mxu0 %v474
      %v551 = vpop.f32.mrb[0].mxu0
      %v552 = vadd.f32 0.0, %v551
      %v553 = vpop.f32.mrb[0].mxu0
      %v554 = vpop.f32.mrb[0].mxu0
      %v555 = vpop.f32.mrb[0].mxu0
      %556 = vdwg.mxu0
      %v557 = vpack.c.bf16 %v511, %v511
      %v558 = vpack.c.bf16 %v513, %v513
      %v559 = vpack.c.bf16 %v552, %v552
      %v560 = vld [vmem:[%s379] sm:$0xf]
      %v561 = vld [vmem:[%s379 + $0x4] sm:$0xf]
      %v562 = vld [vmem:[%s4] sm:$0xff]
      %v563 = vld [vmem:[%s4 + $0x8] sm:$0xf]
      %v564 = vld [vmem:[%s4 + $0xc] sm:$0xff]
      %v565 = vld [vmem:[%s4 + $0x14] sm:$0xf]
      %v568 = vunpack.c.l.b16 %v560
      %v569 = vunpack.c.l.b16 %v561
      %v570 = vpack.c.b16 %v569, %v568
      %v575 = vunpack.c.l.b16 %v562
      %v576 = vunpack.c.h.b16 %v562
      %v577 = vunpack.c.l.b16 %v563
      %v578 = vunpack.c.l.b16 %v564
      %v579 = vunpack.c.h.b16 %v564
      %v580 = vunpack.c.l.b16 %v565
      %v581 = vpack.c.b16 %v578, %v575
      %v582 = vpack.c.b16 %v579, %v576
      %v583 = vpack.c.b16 %v580, %v577
      %vm587 = vcmask 130048
      %v589 = vsel %vm587, %v570, 0
      %591 = vmatprep.subr.bf16.mxu0 %v582
      %592 = vmatpush1.bf16.msra.mxu0 %v581
      %593 = vmatprep.subr.bf16.mxu0 0
      %594 = vmatpush1.bf16.msra.mxu0 0
      %595 = vmatprep.subr.bf16.mxu0 0
      %596 = vmatpush1.bf16.msra.mxu0 0
      %597 = vmatprep.subr.bf16.mxu0 0
      %598 = vmatpush1.bf16.msra.mxu0 0
      %599 = vmatprep.subr.bf16.mxu0 0
      %600 = vmatpush1.bf16.msra.mxu0 0
      %601 = vmatprep.subr.bf16.mxu0 0
      %602 = vmatpush1.bf16.msra.mxu0 0
      %603 = vmatprep.subr.bf16.mxu0 0
      %604 = vmatpush1.bf16.msra.mxu0 0
      %605 = vmatprep.subr.bf16.mxu0 0
      %606 = vmatpush1.bf16.msra.mxu0 0
      %607 = vmatprep.subr.bf16.mxu0 0
      %608 = vmatpush1.bf16.msra.mxu0 0
      %609 = vmatprep.subr.bf16.mxu0 0
      %610 = vmatpush1.bf16.msra.mxu0 0
      %611 = vmatprep.subr.bf16.mxu0 0
      %612 = vmatpush1.bf16.msra.mxu0 0
      %613 = vmatprep.subr.bf16.mxu0 0
      %614 = vmatpush1.bf16.msra.mxu0 0
      %615 = vmatprep.subr.bf16.mxu0 0
      %616 = vmatpush1.bf16.msra.mxu0 0
      %617 = vmatprep.subr.bf16.mxu0 0
      %618 = vmatpush1.bf16.msra.mxu0 0
      %619 = vmatprep.subr.bf16.mxu0 0
      %620 = vmatpush1.bf16.msra.mxu0 0
      %621 = vmatprep.subr.bf16.mxu0 0
      %622 = vmatpush1.bf16.msra.mxu0 0
      %623 = vmatprep.mubr.bf16.mxu0 0
      %624 = vmatmul.mubr.bf16.gmra.mrb[0].mxu0 %v589
      %v625 = vpop.f32.mrb[0].mxu0
      %v626 = vadd.f32 0.0, %v625
      %v627 = vpop.f32.mrb[0].mxu0
      %v628 = vadd.f32 0.0, %v627
      %v629 = vpop.f32.mrb[0].mxu0
      %v630 = vadd.f32 0.0, %v629
      %v631 = vpop.f32.mrb[0].mxu0
      %v632 = vadd.f32 0.0, %v631
      %633 = vdwg.mxu0
      %634 = vmatprep.subr.bf16.mxu0 0
      %635 = vmatpush1.bf16.msra.mxu0 %v583
      %636 = vmatprep.subr.bf16.mxu0 0
      %637 = vmatpush1.bf16.msra.mxu0 0
      %638 = vmatprep.subr.bf16.mxu0 0
      %639 = vmatpush1.bf16.msra.mxu0 0
      %640 = vmatprep.subr.bf16.mxu0 0
      %641 = vmatpush1.bf16.msra.mxu0 0
      %642 = vmatprep.subr.bf16.mxu0 0
      %643 = vmatpush1.bf16.msra.mxu0 0
      %644 = vmatprep.subr.bf16.mxu0 0
      %645 = vmatpush1.bf16.msra.mxu0 0
      %646 = vmatprep.subr.bf16.mxu0 0
      %647 = vmatpush1.bf16.msra.mxu0 0
      %648 = vmatprep.subr.bf16.mxu0 0
      %649 = vmatpush1.bf16.msra.mxu0 0
      %650 = vmatprep.subr.bf16.mxu0 0
      %651 = vmatpush1.bf16.msra.mxu0 0
      %652 = vmatprep.subr.bf16.mxu0 0
      %653 = vmatpush1.bf16.msra.mxu0 0
      %654 = vmatprep.subr.bf16.mxu0 0
      %655 = vmatpush1.bf16.msra.mxu0 0
      %656 = vmatprep.subr.bf16.mxu0 0
      %657 = vmatpush1.bf16.msra.mxu0 0
      %658 = vmatprep.subr.bf16.mxu0 0
      %659 = vmatpush1.bf16.msra.mxu0 0
      %660 = vmatprep.subr.bf16.mxu0 0
      %661 = vmatpush1.bf16.msra.mxu0 0
      %662 = vmatprep.subr.bf16.mxu0 0
      %663 = vmatpush1.bf16.msra.mxu0 0
      %664 = vmatprep.subr.bf16.mxu0 0
      %665 = vmatpush1.bf16.msra.mxu0 0
      %666 = vmatprep.mubr.bf16.mxu0 0
      %667 = vmatmul.mubr.bf16.gmra.mrb[0].mxu0 %v589
      %v668 = vpop.f32.mrb[0].mxu0
      %v669 = vadd.f32 0.0, %v668
      %v670 = vpop.f32.mrb[0].mxu0
      %v671 = vpop.f32.mrb[0].mxu0
      %v672 = vadd.f32 0.0, %v671
      %v673 = vpop.f32.mrb[0].mxu0
      %674 = vdwg.mxu0
      %v675 = vpack.c.bf16 %v630, %v626
      %v676 = vpack.c.bf16 %v632, %v628
      %v677 = vpack.c.bf16 %v672, %v669
      %v678 = vld [vmem:[%s384] sm:$0xf]
      %v679 = vld [vmem:[%s384 + $0x4] sm:$0xf]
      %v680 = vld [vmem:[%s384 + $0x8] sm:$0xf]
      %v681 = vld [vmem:[%s384 + $0xc] sm:$0xf]
      %v682 = vld [vmem:[%s6] sm:$0x3f]
      %v687 = vunpack.c.l.b16 %v678
      %v688 = vunpack.c.l.b16 %v679
      %v689 = vunpack.c.l.b16 %v680
      %v690 = vunpack.c.l.b16 %v681
      %v691 = vpack.c.b16 %v688, %v687
      %v692 = vpack.c.b16 %v690, %v689
      %v694 = vcombine.high %v682, %v682
      %v696 = vunpack.c.l.s4 1983009808
      %v697 = vunpack.c.0.s8 %v696
      %v698 = vlaneseq
      %v699 = vshrl.u32 %v698, 7
      %v700 = vsub.s32 %v697, %v699
      %v701 = vrot.slane %v682, %v700
      %v703 = vunpack.c.l.s4 1983009808
      %v704 = vunpack.c.0.s8 %v703
      %v705 = vlaneseq
      %v706 = vshrl.u32 %v705, 7
      %v707 = vsub.s32 %v704, %v706
      %v708 = vrot.slane %v694, %v707
      %v709 = vcombine.high %v701, %v701
      %vm710 = vcmask 31744
      %v712 = vsel %vm710, %v691, 0
      %v715 = vsel %vm710, %v692, 0
      %vm717 = vcmask 1041408
      %v719 = vsel %vm717, %v701, 0
      %v722 = vsel %vm717, %v709, 0
      %v725 = vsel %vm717, %v708, 0
      %727 = vmatprep.subr.bf16.mxu0 %v722
      %728 = vmatpush1.bf16.msra.mxu0 %v719
      %729 = vmatprep.subr.bf16.mxu0 0
      %730 = vmatpush1.bf16.msra.mxu0 0
      %731 = vmatprep.subr.bf16.mxu0 0
      %732 = vmatpush1.bf16.msra.mxu0 0
      %733 = vmatprep.subr.bf16.mxu0 0
      %734 = vmatpush1.bf16.msra.mxu0 0
      %735 = vmatprep.subr.bf16.mxu0 0
      %736 = vmatpush1.bf16.msra.mxu0 0
      %737 = vmatprep.subr.bf16.mxu0 0
      %738 = vmatpush1.bf16.msra.mxu0 0
      %739 = vmatprep.subr.bf16.mxu0 0
      %740 = vmatpush1.bf16.msra.mxu0 0
      %741 = vmatprep.subr.bf16.mxu0 0
      %742 = vmatpush1.bf16.msra.mxu0 0
      %743 = vmatprep.subr.bf16.mxu0 0
      %744 = vmatpush1.bf16.msra.mxu0 0
      %745 = vmatprep.subr.bf16.mxu0 0
      %746 = vmatpush1.bf16.msra.mxu0 0
      %747 = vmatprep.subr.bf16.mxu0 0
      %748 = vmatpush1.bf16.msra.mxu0 0
      %749 = vmatprep.subr.bf16.mxu0 0
      %750 = vmatpush1.bf16.msra.mxu0 0
      %751 = vmatprep.subr.bf16.mxu0 0
      %752 = vmatpush1.bf16.msra.mxu0 0
      %753 = vmatprep.subr.bf16.mxu0 0
      %754 = vmatpush1.bf16.msra.mxu0 0
      %755 = vmatprep.subr.bf16.mxu0 0
      %756 = vmatpush1.bf16.msra.mxu0 0
      %757 = vmatprep.subr.bf16.mxu0 0
      %758 = vmatpush1.bf16.msra.mxu0 0
      %759 = vmatprep.mubr.bf16.mxu0 0
      %760 = vmatmul.mubr.bf16.gmra.mrb[0].mxu0 %v712
      %v761 = vpop.f32.mrb[0].mxu0
      %v762 = vadd.f32 0.0, %v761
      %v763 = vpop.f32.mrb[0].mxu0
      %v764 = vadd.f32 0.0, %v763
      %v765 = vpop.f32.mrb[0].mxu0
      %v766 = vadd.f32 0.0, %v765
      %v767 = vpop.f32.mrb[0].mxu0
      %v768 = vadd.f32 0.0, %v767
      %769 = vmatprep.mubr.bf16.mxu0 0
      %770 = vmatmul.mubr.bf16.gmra.mrb[0].mxu0 %v715
      %v771 = vpop.f32.mrb[0].mxu0
      %v772 = vadd.f32 0.0, %v771
      %v773 = vpop.f32.mrb[0].mxu0
      %v774 = vadd.f32 0.0, %v773
      %v775 = vpop.f32.mrb[0].mxu0
      %v776 = vadd.f32 0.0, %v775
      %v777 = vpop.f32.mrb[0].mxu0
      %v778 = vadd.f32 0.0, %v777
      %779 = vdwg.mxu0
      %780 = vmatprep.subr.bf16.mxu0 0
      %781 = vmatpush1.bf16.msra.mxu0 %v725
      %782 = vmatprep.subr.bf16.mxu0 0
      %783 = vmatpush1.bf16.msra.mxu0 0
      %784 = vmatprep.subr.bf16.mxu0 0
      %785 = vmatpush1.bf16.msra.mxu0 0
      %786 = vmatprep.subr.bf16.mxu0 0
      %787 = vmatpush1.bf16.msra.mxu0 0
      %788 = vmatprep.subr.bf16.mxu0 0
      %789 = vmatpush1.bf16.msra.mxu0 0
      %790 = vmatprep.subr.bf16.mxu0 0
      %791 = vmatpush1.bf16.msra.mxu0 0
      %792 = vmatprep.subr.bf16.mxu0 0
      %793 = vmatpush1.bf16.msra.mxu0 0
      %794 = vmatprep.subr.bf16.mxu0 0
      %795 = vmatpush1.bf16.msra.mxu0 0
      %796 = vmatprep.subr.bf16.mxu0 0
      %797 = vmatpush1.bf16.msra.mxu0 0
      %798 = vmatprep.subr.bf16.mxu0 0
      %799 = vmatpush1.bf16.msra.mxu0 0
      %800 = vmatprep.subr.bf16.mxu0 0
      %801 = vmatpush1.bf16.msra.mxu0 0
      %802 = vmatprep.subr.bf16.mxu0 0
      %803 = vmatpush1.bf16.msra.mxu0 0
      %804 = vmatprep.subr.bf16.mxu0 0
      %805 = vmatpush1.bf16.msra.mxu0 0
      %806 = vmatprep.subr.bf16.mxu0 0
      %807 = vmatpush1.bf16.msra.mxu0 0
      %808 = vmatprep.subr.bf16.mxu0 0
      %809 = vmatpush1.bf16.msra.mxu0 0
      %810 = vmatprep.subr.bf16.mxu0 0
      %811 = vmatpush1.bf16.msra.mxu0 0
      %812 = vmatprep.mubr.bf16.mxu0 0
      %813 = vmatmul.mubr.bf16.gmra.mrb[0].mxu0 %v712
      %v814 = vpop.f32.mrb[0].mxu0
      %v815 = vadd.f32 0.0, %v814
      %v816 = vpop.f32.mrb[0].mxu0
      %v817 = vpop.f32.mrb[0].mxu0
      %v818 = vadd.f32 0.0, %v817
      %v819 = vpop.f32.mrb[0].mxu0
      %820 = vmatprep.mubr.bf16.mxu0 0
      %821 = vmatmul.mubr.bf16.gmra.mrb[0].mxu0 %v715
      %v822 = vpop.f32.mrb[0].mxu0
      %v823 = vadd.f32 0.0, %v822
      %v824 = vpop.f32.mrb[0].mxu0
      %v825 = vpop.f32.mrb[0].mxu0
      %v826 = vadd.f32 0.0, %v825
      %v827 = vpop.f32.mrb[0].mxu0
      %828 = vdwg.mxu0
      %v829 = vpack.c.bf16 %v766, %v762
      %v830 = vpack.c.bf16 %v768, %v764
      %v831 = vpack.c.bf16 %v818, %v815
      %v832 = vpack.c.bf16 %v776, %v772
      %v833 = vpack.c.bf16 %v778, %v774
      %v834 = vpack.c.bf16 %v826, %v823
      %v838 = vrot.slane %v557, 4
      %v839 = vrot.slane %v558, 4
      %v840 = vrot.slane %v559, 4
      %841 = vrot.lane.b32.xlu0 %v838, 127
      %v842 = vpop.permute.xlu0 %841
      %843 = vrot.lane.b32.xlu0 %v839, 127
      %v844 = vpop.permute.xlu0 %843
      %845 = vrot.lane.b32.xlu0 %v840, 127
      %v846 = vpop.permute.xlu0 %845
      %vm847 = vcmask 1039360
      %v848 = vsel %vm847, %v842, %v844
      %v849 = vsel %vm847, %v844, %v846
      %850 = vrot.lane.b32.xlu0 %v557, 126
      %v851 = vpop.permute.xlu0 %850
      %852 = vrot.lane.b32.xlu0 %v558, 126
      %v853 = vpop.permute.xlu0 %852
      %854 = vrot.lane.b32.xlu0 %v559, 126
      %v855 = vpop.permute.xlu0 %854
      %vm856 = vcmask 1031168
      %v857 = vsel %vm856, %v851, %v853
      %v858 = vsel %vm856, %v853, %v855
      %859 = vrot.lane.b32.xlu0 %v838, 110
      %v860 = vpop.permute.xlu0 %859
      %861 = vrot.lane.b32.xlu0 %v839, 110
      %v862 = vpop.permute.xlu0 %861
      %863 = vrot.lane.b32.xlu0 %v840, 110
      %v864 = vpop.permute.xlu0 %863
      %vm865 = vcmask 900096
      %v866 = vsel %vm865, %v860, %v862
      %v867 = vsel %vm865, %v862, %v864
      %868 = vrot.lane.b32.xlu0 %v557, 109
      %v869 = vpop.permute.xlu0 %868
      %870 = vrot.lane.b32.xlu0 %v558, 109
      %v871 = vpop.permute.xlu0 %870
      %872 = vrot.lane.b32.xlu0 %v559, 109
      %v873 = vpop.permute.xlu0 %872
      %vm874 = vcmask 891904
      %v875 = vsel %vm874, %v869, %v871
      %v876 = vsel %vm874, %v871, %v873
      %877 = vrot.lane.b32.xlu0 %v838, 108
      %v878 = vpop.permute.xlu0 %877
      %879 = vrot.lane.b32.xlu0 %v839, 108
      %v880 = vpop.permute.xlu0 %879
      %881 = vrot.lane.b32.xlu0 %v840, 108
      %v882 = vpop.permute.xlu0 %881
      %vm883 = vcmask 883712
      %v884 = vsel %vm883, %v878, %v880
      %v885 = vsel %vm883, %v880, %v882
      %886 = vrot.lane.b32.xlu0 %v557, 92
      %v887 = vpop.permute.xlu0 %886
      %888 = vrot.lane.b32.xlu0 %v558, 92
      %v889 = vpop.permute.xlu0 %888
      %890 = vrot.lane.b32.xlu0 %v559, 92
      %v891 = vpop.permute.xlu0 %890
      %vm892 = vcmask 752640
      %v893 = vsel %vm892, %v887, %v889
      %v894 = vsel %vm892, %v889, %v891
      %895 = vrot.lane.b32.xlu0 %v838, 91
      %v896 = vpop.permute.xlu0 %895
      %897 = vrot.lane.b32.xlu0 %v839, 91
      %v898 = vpop.permute.xlu0 %897
      %899 = vrot.lane.b32.xlu0 %v840, 91
      %v900 = vpop.permute.xlu0 %899
      %vm901 = vcmask 744448
      %v902 = vsel %vm901, %v896, %v898
      %v903 = vsel %vm901, %v898, %v900
      %904 = vrot.lane.b32.xlu0 %v557, 90
      %v905 = vpop.permute.xlu0 %904
      %906 = vrot.lane.b32.xlu0 %v558, 90
      %v907 = vpop.permute.xlu0 %906
      %908 = vrot.lane.b32.xlu0 %v559, 90
      %v909 = vpop.permute.xlu0 %908
      %vm910 = vcmask 736256
      %v911 = vsel %vm910, %v905, %v907
      %v912 = vsel %vm910, %v907, %v909
      %v916 = vrot.slane %v675, 4
      %v917 = vrot.slane %v676, 4
      %v918 = vrot.slane %v677, 4
      %919 = vrot.lane.b32.xlu0 %v916, 127
      %v920 = vpop.permute.xlu0 %919
      %921 = vrot.lane.b32.xlu0 %v917, 127
      %v922 = vpop.permute.xlu0 %921
      %923 = vrot.lane.b32.xlu0 %v918, 127
      %v924 = vpop.permute.xlu0 %923
      %v925 = vsel %vm847, %v920, %v922
      %v926 = vsel %vm847, %v922, %v924
      %927 = vrot.lane.b32.xlu0 %v916, 126
      %v928 = vpop.permute.xlu0 %927
      %929 = vrot.lane.b32.xlu0 %v917, 126
      %v930 = vpop.permute.xlu0 %929
      %931 = vrot.lane.b32.xlu0 %v918, 126
      %v932 = vpop.permute.xlu0 %931
      %v933 = vsel %vm856, %v928, %v930
      %v934 = vsel %vm856, %v930, %v932
      %935 = vrot.lane.b32.xlu0 %v916, 110
      %v936 = vpop.permute.xlu0 %935
      %937 = vrot.lane.b32.xlu0 %v917, 110
      %v938 = vpop.permute.xlu0 %937
      %939 = vrot.lane.b32.xlu0 %v918, 110
      %v940 = vpop.permute.xlu0 %939
      %v941 = vsel %vm865, %v936, %v938
      %v942 = vsel %vm865, %v938, %v940
      %943 = vrot.lane.b32.xlu0 %v916, 109
      %v944 = vpop.permute.xlu0 %943
      %945 = vrot.lane.b32.xlu0 %v917, 109
      %v946 = vpop.permute.xlu0 %945
      %947 = vrot.lane.b32.xlu0 %v918, 109
      %v948 = vpop.permute.xlu0 %947
      %v949 = vsel %vm874, %v944, %v946
      %v950 = vsel %vm874, %v946, %v948
      %951 = vrot.lane.b32.xlu0 %v916, 108
      %v952 = vpop.permute.xlu0 %951
      %953 = vrot.lane.b32.xlu0 %v917, 108
      %v954 = vpop.permute.xlu0 %953
      %955 = vrot.lane.b32.xlu0 %v918, 108
      %v956 = vpop.permute.xlu0 %955
      %v957 = vsel %vm883, %v952, %v954
      %v958 = vsel %vm883, %v954, %v956
      %959 = vrot.lane.b32.xlu0 %v916, 92
      %v960 = vpop.permute.xlu0 %959
      %961 = vrot.lane.b32.xlu0 %v917, 92
      %v962 = vpop.permute.xlu0 %961
      %963 = vrot.lane.b32.xlu0 %v918, 92
      %v964 = vpop.permute.xlu0 %963
      %v965 = vsel %vm892, %v960, %v962
      %v966 = vsel %vm892, %v962, %v964
      %vm967 = vcmask 1043456
      %v970 = vsel %vm967, %v557, %v848
      %v974 = vsel %vm967, %v558, %v849
      %v978 = vsel %vm967, %v559, %v846
      %v982 = vsel %vm967, %v857, %v866
      %v986 = vsel %vm967, %v858, %v867
      %v990 = vsel %vm967, %v855, %v864
      %v994 = vsel %vm967, %v875, %v884
      %v998 = vsel %vm967, %v876, %v885
      %v1002 = vsel %vm967, %v873, %v882
      %v1006 = vsel %vm967, %v893, %v902
      %v1010 = vsel %vm967, %v894, %v903
      %v1014 = vsel %vm967, %v891, %v900
      %v1018 = vsel %vm967, %v911, %v916
      %v1022 = vsel %vm967, %v912, %v917
      %v1026 = vsel %vm967, %v909, %v918
      %v1029 = vsel %vm967, %v916, %v925
      %v1032 = vsel %vm967, %v917, %v926
      %v1035 = vsel %vm967, %v918, %v924
      %v1038 = vsel %vm967, %v925, %v933
      %v1041 = vsel %vm967, %v926, %v934
      %v1044 = vsel %vm967, %v924, %v932
      %v1047 = vsel %vm967, %v933, %v941
      %v1050 = vsel %vm967, %v934, %v942
      %v1053 = vsel %vm967, %v932, %v940
      %v1056 = vsel %vm967, %v941, %v949
      %v1059 = vsel %vm967, %v942, %v950
      %v1062 = vsel %vm967, %v940, %v948
      %v1065 = vsel %vm967, %v949, %v957
      %v1068 = vsel %vm967, %v950, %v958
      %v1071 = vsel %vm967, %v948, %v956
      %v1074 = vsel %vm967, %v957, %v965
      %v1077 = vsel %vm967, %v958, %v966
      %v1080 = vsel %vm967, %v956, %v964
      %1082 = vrot.lane.b32.xlu0 %v675, 127
      %v1083 = vpop.permute.xlu0 %1082
      %1084 = vrot.lane.b32.xlu0 %v676, 127
      %v1085 = vpop.permute.xlu0 %1084
      %1086 = vrot.lane.b32.xlu0 %v677, 127
      %v1087 = vpop.permute.xlu0 %1086
      %v1088 = vsel %vm847, %v1083, %v1085
      %v1089 = vsel %vm847, %v1085, %v1087
      %1096 = vrot.lane.b32.xlu0 %v829, 37
      %v1097 = vpop.permute.xlu0 %1096
      %1098 = vrot.lane.b32.xlu0 %v830, 37
      %v1099 = vpop.permute.xlu0 %1098
      %1100 = vrot.lane.b32.xlu0 %v831, 37
      %v1101 = vpop.permute.xlu0 %1100
      %1102 = vrot.lane.b32.xlu0 %v832, 37
      %v1103 = vpop.permute.xlu0 %1102
      %1104 = vrot.lane.b32.xlu0 %v833, 37
      %v1105 = vpop.permute.xlu0 %1104
      %1106 = vrot.lane.b32.xlu0 %v834, 37
      %v1107 = vpop.permute.xlu0 %1106
      %vm1108 = vcmask 302080
      %v1109 = vsel %vm1108, %v1097, %v1099
      %v1110 = vsel %vm1108, %v1099, %v1101
      %v1111 = vsel %vm1108, %v1103, %v1105
      %v1112 = vsel %vm1108, %v1105, %v1107
      %1113 = vrot.lane.b32.xlu0 %v829, 36
      %v1114 = vpop.permute.xlu0 %1113
      %1115 = vrot.lane.b32.xlu0 %v830, 36
      %v1116 = vpop.permute.xlu0 %1115
      %1117 = vrot.lane.b32.xlu0 %v831, 36
      %v1118 = vpop.permute.xlu0 %1117
      %1119 = vrot.lane.b32.xlu0 %v832, 36
      %v1120 = vpop.permute.xlu0 %1119
      %1121 = vrot.lane.b32.xlu0 %v833, 36
      %v1122 = vpop.permute.xlu0 %1121
      %1123 = vrot.lane.b32.xlu0 %v834, 36
      %v1124 = vpop.permute.xlu0 %1123
      %vm1125 = vcmask 293888
      %v1126 = vsel %vm1125, %v1114, %v1116
      %v1127 = vsel %vm1125, %v1116, %v1118
      %v1128 = vsel %vm1125, %v1120, %v1122
      %v1129 = vsel %vm1125, %v1122, %v1124
      %1130 = vrot.lane.b32.xlu0 %v829, 35
      %v1131 = vpop.permute.xlu0 %1130
      %1132 = vrot.lane.b32.xlu0 %v830, 35
      %v1133 = vpop.permute.xlu0 %1132
      %1134 = vrot.lane.b32.xlu0 %v831, 35
      %v1135 = vpop.permute.xlu0 %1134
      %1136 = vrot.lane.b32.xlu0 %v832, 35
      %v1137 = vpop.permute.xlu0 %1136
      %1138 = vrot.lane.b32.xlu0 %v833, 35
      %v1139 = vpop.permute.xlu0 %1138
      %1140 = vrot.lane.b32.xlu0 %v834, 35
      %v1141 = vpop.permute.xlu0 %1140
      %vm1142 = vcmask 285696
      %v1143 = vsel %vm1142, %v1131, %v1133
      %v1144 = vsel %vm1142, %v1133, %v1135
      %v1145 = vsel %vm1142, %v1137, %v1139
      %v1146 = vsel %vm1142, %v1139, %v1141
      %1147 = vrot.lane.b32.xlu0 %v829, 19
      %v1148 = vpop.permute.xlu0 %1147
      %1149 = vrot.lane.b32.xlu0 %v830, 19
      %v1150 = vpop.permute.xlu0 %1149
      %1151 = vrot.lane.b32.xlu0 %v831, 19
      %v1152 = vpop.permute.xlu0 %1151
      %1153 = vrot.lane.b32.xlu0 %v832, 19
      %v1154 = vpop.permute.xlu0 %1153
      %1155 = vrot.lane.b32.xlu0 %v833, 19
      %v1156 = vpop.permute.xlu0 %1155
      %1157 = vrot.lane.b32.xlu0 %v834, 19
      %v1158 = vpop.permute.xlu0 %1157
      %vm1159 = vcmask 154624
      %v1160 = vsel %vm1159, %v1148, %v1150
      %v1161 = vsel %vm1159, %v1150, %v1152
      %v1162 = vsel %vm1159, %v1154, %v1156
      %v1163 = vsel %vm1159, %v1156, %v1158
      %1164 = vrot.lane.b32.xlu0 %v829, 18
      %v1165 = vpop.permute.xlu0 %1164
      %1166 = vrot.lane.b32.xlu0 %v830, 18
      %v1167 = vpop.permute.xlu0 %1166
      %1168 = vrot.lane.b32.xlu0 %v831, 18
      %v1169 = vpop.permute.xlu0 %1168
      %1170 = vrot.lane.b32.xlu0 %v832, 18
      %v1171 = vpop.permute.xlu0 %1170
      %1172 = vrot.lane.b32.xlu0 %v833, 18
      %v1173 = vpop.permute.xlu0 %1172
      %1174 = vrot.lane.b32.xlu0 %v834, 18
      %v1175 = vpop.permute.xlu0 %1174
      %vm1176 = vcmask 146432
      %v1177 = vsel %vm1176, %v1165, %v1167
      %v1178 = vsel %vm1176, %v1167, %v1169
      %v1179 = vsel %vm1176, %v1171, %v1173
      %v1180 = vsel %vm1176, %v1173, %v1175
      %1181 = vrot.lane.b32.xlu0 %v829, 17
      %v1182 = vpop.permute.xlu0 %1181
      %1183 = vrot.lane.b32.xlu0 %v830, 17
      %v1184 = vpop.permute.xlu0 %1183
      %1185 = vrot.lane.b32.xlu0 %v831, 17
      %v1186 = vpop.permute.xlu0 %1185
      %1187 = vrot.lane.b32.xlu0 %v832, 17
      %v1188 = vpop.permute.xlu0 %1187
      %1189 = vrot.lane.b32.xlu0 %v833, 17
      %v1190 = vpop.permute.xlu0 %1189
      %1191 = vrot.lane.b32.xlu0 %v834, 17
      %v1192 = vpop.permute.xlu0 %1191
      %vm1193 = vcmask 138240
      %v1194 = vsel %vm1193, %v1182, %v1184
      %v1195 = vsel %vm1193, %v1184, %v1186
      %v1196 = vsel %vm1193, %v1188, %v1190
      %v1197 = vsel %vm1193, %v1190, %v1192
      %1198 = vrot.lane.b32.xlu0 %v829, 1
      %v1199 = vpop.permute.xlu0 %1198
      %1200 = vrot.lane.b32.xlu0 %v830, 1
      %v1201 = vpop.permute.xlu0 %1200
      %1202 = vrot.lane.b32.xlu0 %v831, 1
      %v1203 = vpop.permute.xlu0 %1202
      %1204 = vrot.lane.b32.xlu0 %v832, 1
      %v1205 = vpop.permute.xlu0 %1204
      %1206 = vrot.lane.b32.xlu0 %v833, 1
      %v1207 = vpop.permute.xlu0 %1206
      %1208 = vrot.lane.b32.xlu0 %v834, 1
      %v1209 = vpop.permute.xlu0 %1208
      %vm1210 = vcmask 7168
      %v1211 = vsel %vm1210, %v1199, %v1201
      %v1212 = vsel %vm1210, %v1201, %v1203
      %v1213 = vsel %vm1210, %v1205, %v1207
      %v1214 = vsel %vm1210, %v1207, %v1209
      %1215 = vrot.lane.b32.xlu0 %v829, 127
      %v1216 = vpop.permute.xlu0 %1215
      %1217 = vrot.lane.b32.xlu0 %v830, 127
      %v1218 = vpop.permute.xlu0 %1217
      %1219 = vrot.lane.b32.xlu0 %v831, 127
      %v1220 = vpop.permute.xlu0 %1219
      %1221 = vrot.lane.b32.xlu0 %v832, 127
      %v1222 = vpop.permute.xlu0 %1221
      %1223 = vrot.lane.b32.xlu0 %v833, 127
      %v1224 = vpop.permute.xlu0 %1223
      %1225 = vrot.lane.b32.xlu0 %v834, 127
      %v1226 = vpop.permute.xlu0 %1225
      %v1227 = vsel %vm847, %v1216, %v1218
      %v1228 = vsel %vm847, %v1218, %v1220
      %v1229 = vsel %vm847, %v1222, %v1224
      %v1230 = vsel %vm847, %v1224, %v1226
      %vm1231 = vcmask 1043456
      %v1232 = vrot.slane %v1088, 4
      %v1233 = vsel %vm1231, %v916, %v1232
      %v1234 = vrot.slane %v1089, 4
      %v1235 = vsel %vm1231, %v917, %v1234
      %v1236 = vrot.slane %v1087, 4
      %v1237 = vsel %vm1231, %v918, %v1236
      %v1238 = vrot.slane %v1097, 4
      %v1239 = vsel %vm1231, %v1232, %v1238
      %v1240 = vrot.slane %v1109, 4
      %v1241 = vsel %vm1231, %v1234, %v1240
      %v1242 = vrot.slane %v1110, 4
      %v1243 = vsel %vm1231, %v1236, %v1242
      %v1244 = vrot.slane %v1103, 4
      %v1245 = vsel %vm1231, %v1238, %v1244
      %v1246 = vrot.slane %v1111, 4
      %v1247 = vsel %vm1231, %v1240, %v1246
      %v1248 = vrot.slane %v1112, 4
      %v1249 = vsel %vm1231, %v1242, %v1248
      %v1250 = vrot.slane %v1114, 4
      %v1251 = vsel %vm1231, %v1244, %v1250
      %v1252 = vrot.slane %v1126, 4
      %v1253 = vsel %vm1231, %v1246, %v1252
      %v1254 = vrot.slane %v1127, 4
      %v1255 = vsel %vm1231, %v1248, %v1254
      %v1256 = vrot.slane %v1120, 4
      %v1257 = vsel %vm1231, %v1250, %v1256
      %v1258 = vrot.slane %v1128, 4
      %v1259 = vsel %vm1231, %v1252, %v1258
      %v1260 = vrot.slane %v1129, 4
      %v1261 = vsel %vm1231, %v1254, %v1260
      %v1262 = vrot.slane %v1131, 4
      %v1263 = vsel %vm1231, %v1256, %v1262
      %v1264 = vrot.slane %v1143, 4
      %v1265 = vsel %vm1231, %v1258, %v1264
      %v1266 = vrot.slane %v1144, 4
      %v1267 = vsel %vm1231, %v1260, %v1266
      %v1268 = vrot.slane %v1137, 4
      %v1269 = vsel %vm1231, %v1262, %v1268
      %v1270 = vrot.slane %v1145, 4
      %v1271 = vsel %vm1231, %v1264, %v1270
      %v1272 = vrot.slane %v1146, 4
      %v1273 = vsel %vm1231, %v1266, %v1272
      %v1274 = vrot.slane %v1148, 4
      %v1275 = vsel %vm1231, %v1268, %v1274
      %v1276 = vrot.slane %v1160, 4
      %v1277 = vsel %vm1231, %v1270, %v1276
      %v1278 = vrot.slane %v1161, 4
      %v1279 = vsel %vm1231, %v1272, %v1278
      %v1280 = vrot.slane %v1154, 4
      %v1281 = vsel %vm1231, %v1274, %v1280
      %v1282 = vrot.slane %v1162, 4
      %v1283 = vsel %vm1231, %v1276, %v1282
      %v1284 = vrot.slane %v1163, 4
      %v1285 = vsel %vm1231, %v1278, %v1284
      %v1286 = vrot.slane %v1165, 4
      %v1287 = vsel %vm1231, %v1280, %v1286
      %v1288 = vrot.slane %v1177, 4
      %v1289 = vsel %vm1231, %v1282, %v1288
      %v1290 = vrot.slane %v1178, 4
      %v1291 = vsel %vm1231, %v1284, %v1290
      %v1292 = vrot.slane %v1171, 4
      %v1293 = vsel %vm1231, %v1286, %v1292
      %v1294 = vrot.slane %v1179, 4
      %v1295 = vsel %vm1231, %v1288, %v1294
      %v1296 = vrot.slane %v1180, 4
      %v1297 = vsel %vm1231, %v1290, %v1296
      %v1298 = vrot.slane %v1182, 4
      %v1299 = vsel %vm1231, %v1292, %v1298
      %v1300 = vrot.slane %v1194, 4
      %v1301 = vsel %vm1231, %v1294, %v1300
      %v1302 = vrot.slane %v1195, 4
      %v1303 = vsel %vm1231, %v1296, %v1302
      %v1304 = vrot.slane %v1188, 4
      %v1305 = vsel %vm1231, %v1298, %v1304
      %v1306 = vrot.slane %v1196, 4
      %v1307 = vsel %vm1231, %v1300, %v1306
      %v1308 = vrot.slane %v1197, 4
      %v1309 = vsel %vm1231, %v1302, %v1308
      %v1310 = vrot.slane %v1199, 4
      %v1311 = vsel %vm1231, %v1304, %v1310
      %v1312 = vrot.slane %v1211, 4
      %v1313 = vsel %vm1231, %v1306, %v1312
      %v1314 = vrot.slane %v1212, 4
      %v1315 = vsel %vm1231, %v1308, %v1314
      %v1316 = vrot.slane %v1205, 4
      %v1317 = vsel %vm1231, %v1310, %v1316
      %v1318 = vrot.slane %v1213, 4
      %v1319 = vsel %vm1231, %v1312, %v1318
      %v1320 = vrot.slane %v1214, 4
      %v1321 = vsel %vm1231, %v1314, %v1320
      %v1322 = vrot.slane %v829, 4
      %v1323 = vsel %vm1231, %v1316, %v1322
      %v1324 = vrot.slane %v830, 4
      %v1325 = vsel %vm1231, %v1318, %v1324
      %v1326 = vrot.slane %v831, 4
      %v1327 = vsel %vm1231, %v1320, %v1326
      %v1328 = vrot.slane %v832, 4
      %v1329 = vsel %vm1231, %v1322, %v1328
      %v1330 = vrot.slane %v833, 4
      %v1331 = vsel %vm1231, %v1324, %v1330
      %v1332 = vrot.slane %v834, 4
      %v1333 = vsel %vm1231, %v1326, %v1332
      %v1334 = vrot.slane %v1227, 4
      %v1335 = vsel %vm1231, %v1328, %v1334
      %v1336 = vrot.slane %v1228, 4
      %v1337 = vsel %vm1231, %v1330, %v1336
      %v1338 = vrot.slane %v1220, 4
      %v1339 = vsel %vm1231, %v1332, %v1338
      %v1340 = vrot.slane %v1229, 4
      %v1341 = vsel %vm1231, %v1334, %v1340
      %v1342 = vrot.slane %v1230, 4
      %v1343 = vsel %vm1231, %v1336, %v1342
      %v1344 = vrot.slane %v1226, 4
      %v1345 = vsel %vm1231, %v1338, %v1344
      %1346 = vrot.lane.b32.xlu0 %v916, 91
      %v1347 = vpop.permute.xlu0 %1346
      %1348 = vrot.lane.b32.xlu0 %v917, 91
      %v1349 = vpop.permute.xlu0 %1348
      %1350 = vrot.lane.b32.xlu0 %v918, 91
      %v1351 = vpop.permute.xlu0 %1350
      %1352 = vrot.lane.b32.xlu0 %v1233, 91
      %v1353 = vpop.permute.xlu0 %1352
      %1354 = vrot.lane.b32.xlu0 %v1235, 91
      %v1355 = vpop.permute.xlu0 %1354
      %1356 = vrot.lane.b32.xlu0 %v1237, 91
      %v1357 = vpop.permute.xlu0 %1356
      %1358 = vrot.lane.b32.xlu0 %v1239, 91
      %v1359 = vpop.permute.xlu0 %1358
      %1360 = vrot.lane.b32.xlu0 %v1241, 91
      %v1361 = vpop.permute.xlu0 %1360
      %1362 = vrot.lane.b32.xlu0 %v1243, 91
      %v1363 = vpop.permute.xlu0 %1362
      %1364 = vrot.lane.b32.xlu0 %v1245, 91
      %v1365 = vpop.permute.xlu0 %1364
      %1366 = vrot.lane.b32.xlu0 %v1247, 91
      %v1367 = vpop.permute.xlu0 %1366
      %1368 = vrot.lane.b32.xlu0 %v1249, 91
      %v1369 = vpop.permute.xlu0 %1368
      %1370 = vrot.lane.b32.xlu0 %v1251, 91
      %v1371 = vpop.permute.xlu0 %1370
      %1372 = vrot.lane.b32.xlu0 %v1253, 91
      %v1373 = vpop.permute.xlu0 %1372
      %1374 = vrot.lane.b32.xlu0 %v1255, 91
      %v1375 = vpop.permute.xlu0 %1374
      %1376 = vrot.lane.b32.xlu0 %v1257, 91
      %v1377 = vpop.permute.xlu0 %1376
      %1378 = vrot.lane.b32.xlu0 %v1259, 91
      %v1379 = vpop.permute.xlu0 %1378
      %1380 = vrot.lane.b32.xlu0 %v1261, 91
      %v1381 = vpop.permute.xlu0 %1380
      %1382 = vrot.lane.b32.xlu0 %v1263, 91
      %v1383 = vpop.permute.xlu0 %1382
      %1384 = vrot.lane.b32.xlu0 %v1265, 91
      %v1385 = vpop.permute.xlu0 %1384
      %1386 = vrot.lane.b32.xlu0 %v1267, 91
      %v1387 = vpop.permute.xlu0 %1386
      %1388 = vrot.lane.b32.xlu0 %v1269, 91
      %v1389 = vpop.permute.xlu0 %1388
      %1390 = vrot.lane.b32.xlu0 %v1271, 91
      %v1391 = vpop.permute.xlu0 %1390
      %1392 = vrot.lane.b32.xlu0 %v1273, 91
      %v1393 = vpop.permute.xlu0 %1392
      %1394 = vrot.lane.b32.xlu0 %v1275, 91
      %v1395 = vpop.permute.xlu0 %1394
      %1396 = vrot.lane.b32.xlu0 %v1277, 91
      %v1397 = vpop.permute.xlu0 %1396
      %1398 = vrot.lane.b32.xlu0 %v1279, 91
      %v1399 = vpop.permute.xlu0 %1398
      %1400 = vrot.lane.b32.xlu0 %v1281, 91
      %v1401 = vpop.permute.xlu0 %1400
      %1402 = vrot.lane.b32.xlu0 %v1283, 91
      %v1403 = vpop.permute.xlu0 %1402
      %1404 = vrot.lane.b32.xlu0 %v1285, 91
      %v1405 = vpop.permute.xlu0 %1404
      %1406 = vrot.lane.b32.xlu0 %v1287, 91
      %v1407 = vpop.permute.xlu0 %1406
      %1408 = vrot.lane.b32.xlu0 %v1289, 91
      %v1409 = vpop.permute.xlu0 %1408
      %1410 = vrot.lane.b32.xlu0 %v1291, 91
      %v1411 = vpop.permute.xlu0 %1410
      %1412 = vrot.lane.b32.xlu0 %v1293, 91
      %v1413 = vpop.permute.xlu0 %1412
      %1414 = vrot.lane.b32.xlu0 %v1295, 91
      %v1415 = vpop.permute.xlu0 %1414
      %1416 = vrot.lane.b32.xlu0 %v1297, 91
      %v1417 = vpop.permute.xlu0 %1416
      %1418 = vrot.lane.b32.xlu0 %v1299, 91
      %v1419 = vpop.permute.xlu0 %1418
      %1420 = vrot.lane.b32.xlu0 %v1301, 91
      %v1421 = vpop.permute.xlu0 %1420
      %1422 = vrot.lane.b32.xlu0 %v1303, 91
      %v1423 = vpop.permute.xlu0 %1422
      %1424 = vrot.lane.b32.xlu0 %v1305, 91
      %v1425 = vpop.permute.xlu0 %1424
      %1426 = vrot.lane.b32.xlu0 %v1307, 91
      %v1427 = vpop.permute.xlu0 %1426
      %1428 = vrot.lane.b32.xlu0 %v1309, 91
      %v1429 = vpop.permute.xlu0 %1428
      %1430 = vrot.lane.b32.xlu0 %v1311, 91
      %v1431 = vpop.permute.xlu0 %1430
      %1432 = vrot.lane.b32.xlu0 %v1313, 91
      %v1433 = vpop.permute.xlu0 %1432
      %1434 = vrot.lane.b32.xlu0 %v1315, 91
      %v1435 = vpop.permute.xlu0 %1434
      %1436 = vrot.lane.b32.xlu0 %v1317, 91
      %v1437 = vpop.permute.xlu0 %1436
      %1438 = vrot.lane.b32.xlu0 %v1319, 91
      %v1439 = vpop.permute.xlu0 %1438
      %1440 = vrot.lane.b32.xlu0 %v1321, 91
      %v1441 = vpop.permute.xlu0 %1440
      %1442 = vrot.lane.b32.xlu0 %v1323, 91
      %v1443 = vpop.permute.xlu0 %1442
      %1444 = vrot.lane.b32.xlu0 %v1325, 91
      %v1445 = vpop.permute.xlu0 %1444
      %1446 = vrot.lane.b32.xlu0 %v1327, 91
      %v1447 = vpop.permute.xlu0 %1446
      %1448 = vrot.lane.b32.xlu0 %v1329, 91
      %v1449 = vpop.permute.xlu0 %1448
      %1450 = vrot.lane.b32.xlu0 %v1331, 91
      %v1451 = vpop.permute.xlu0 %1450
      %1452 = vrot.lane.b32.xlu0 %v1333, 91
      %v1453 = vpop.permute.xlu0 %1452
      %1454 = vrot.lane.b32.xlu0 %v1335, 91
      %v1455 = vpop.permute.xlu0 %1454
      %1456 = vrot.lane.b32.xlu0 %v1337, 91
      %v1457 = vpop.permute.xlu0 %1456
      %1458 = vrot.lane.b32.xlu0 %v1339, 91
      %v1459 = vpop.permute.xlu0 %1458
      %1460 = vrot.lane.b32.xlu0 %v1341, 91
      %v1461 = vpop.permute.xlu0 %1460
      %1462 = vrot.lane.b32.xlu0 %v1343, 91
      %v1463 = vpop.permute.xlu0 %1462
      %1464 = vrot.lane.b32.xlu0 %v1345, 91
      %v1465 = vpop.permute.xlu0 %1464
      %1466 = vrot.lane.b32.xlu0 %v1340, 91
      %v1467 = vpop.permute.xlu0 %1466
      %1468 = vrot.lane.b32.xlu0 %v1342, 91
      %v1469 = vpop.permute.xlu0 %1468
      %1470 = vrot.lane.b32.xlu0 %v1344, 91
      %v1471 = vpop.permute.xlu0 %1470
      %v1472 = vsel %vm901, %v1347, %v1349
      %v1473 = vsel %vm901, %v1349, %v1351
      %v1474 = vsel %vm901, %v1353, %v1355
      %v1475 = vsel %vm901, %v1355, %v1357
      %v1476 = vsel %vm901, %v1359, %v1361
      %v1477 = vsel %vm901, %v1361, %v1363
      %v1478 = vsel %vm901, %v1365, %v1367
      %v1479 = vsel %vm901, %v1367, %v1369
      %v1480 = vsel %vm901, %v1371, %v1373
      %v1481 = vsel %vm901, %v1373, %v1375
      %v1482 = vsel %vm901, %v1377, %v1379
      %v1483 = vsel %vm901, %v1379, %v1381
      %v1484 = vsel %vm901, %v1383, %v1385
      %v1485 = vsel %vm901, %v1385, %v1387
      %v1486 = vsel %vm901, %v1389, %v1391
      %v1487 = vsel %vm901, %v1391, %v1393
      %v1488 = vsel %vm901, %v1395, %v1397
      %v1489 = vsel %vm901, %v1397, %v1399
      %v1490 = vsel %vm901, %v1401, %v1403
      %v1491 = vsel %vm901, %v1403, %v1405
      %v1492 = vsel %vm901, %v1407, %v1409
      %v1493 = vsel %vm901, %v1409, %v1411
      %v1494 = vsel %vm901, %v1413, %v1415
      %v1495 = vsel %vm901, %v1415, %v1417
      %v1496 = vsel %vm901, %v1419, %v1421
      %v1497 = vsel %vm901, %v1421, %v1423
      %v1498 = vsel %vm901, %v1425, %v1427
      %v1499 = vsel %vm901, %v1427, %v1429
      %v1500 = vsel %vm901, %v1431, %v1433
      %v1501 = vsel %vm901, %v1433, %v1435
      %v1502 = vsel %vm901, %v1437, %v1439
      %v1503 = vsel %vm901, %v1439, %v1441
      %v1504 = vsel %vm901, %v1443, %v1445
      %v1505 = vsel %vm901, %v1445, %v1447
      %v1506 = vsel %vm901, %v1449, %v1451
      %v1507 = vsel %vm901, %v1451, %v1453
      %v1508 = vsel %vm901, %v1455, %v1457
      %v1509 = vsel %vm901, %v1457, %v1459
      %v1510 = vsel %vm901, %v1461, %v1463
      %v1511 = vsel %vm901, %v1463, %v1465
      %v1512 = vsel %vm901, %v1467, %v1469
      %v1513 = vsel %vm901, %v1469, %v1471
      %v1572 = vsel %vm967, %v965, %v1472
      %v1575 = vsel %vm967, %v966, %v1473
      %v1578 = vsel %vm967, %v964, %v1351
      %v1580 = vld [vmem:[%s7] sm:$0xff]
      %v1581 = vld [vmem:[%s8] sm:$0xf]
      %1583 = vset.pattern.permute.xlu0 0
      %1584 = vperm.xlu0 %1583, %v1581
      %v1585 = vpop.permute.xlu0 %1584
      %v1588 = vcombine.high %v1580, %v1580
      %v1590 = vunpack.c.l.s4 1983009808
      %v1591 = vunpack.c.0.s8 %v1590
      %v1592 = vlaneseq
      %v1593 = vshrl.u32 %v1592, 7
      %v1594 = vsub.s32 %v1591, %v1593
      %v1595 = vrot.slane %v1580, %v1594
      %v1597 = vunpack.c.l.s4 1983009808
      %v1598 = vunpack.c.0.s8 %v1597
      %v1599 = vlaneseq
      %v1600 = vshrl.u32 %v1599, 7
      %v1601 = vsub.s32 %v1598, %v1600
      %v1602 = vrot.slane %v1588, %v1601
      %v1603 = vcombine.high %v1595, %v1595
      %v1604 = vcombine.high %v1602, %v1602
      %vm1608 = vcmask 982016
      %v1610 = vsel %vm1608, %v1604, 0
      %v1613 = vsel %vm967, %v1512, 0
      %v1616 = vsel %vm967, %v1513, 0
      %v1619 = vsel %vm967, %v1471, 0
      %1621 = vmatprep.subr.bf16.mxu0 %v974
      %1622 = vmatpush1.bf16.msra.mxu0 %v970
      %1623 = vmatprep.subr.bf16.mxu0 %v986
      %1624 = vmatpush1.bf16.msra.mxu0 %v982
      %1625 = vmatprep.subr.bf16.mxu0 %v998
      %1626 = vmatpush1.bf16.msra.mxu0 %v994
      %1627 = vmatprep.subr.bf16.mxu0 %v1010
      %1628 = vmatpush1.bf16.msra.mxu0 %v1006
      %1629 = vmatprep.subr.bf16.mxu0 %v1022
      %1630 = vmatpush1.bf16.msra.mxu0 %v1018
      %1631 = vmatprep.subr.bf16.mxu0 %v1032
      %1632 = vmatpush1.bf16.msra.mxu0 %v1029
      %1633 = vmatprep.subr.bf16.mxu0 %v1041
      %1634 = vmatpush1.bf16.msra.mxu0 %v1038
      %1635 = vmatprep.subr.bf16.mxu0 %v1050
      %1636 = vmatpush1.bf16.msra.mxu0 %v1047
      %1637 = vmatprep.subr.bf16.mxu0 %v1059
      %1638 = vmatpush1.bf16.msra.mxu0 %v1056
      %1639 = vmatprep.subr.bf16.mxu0 %v1068
      %1640 = vmatpush1.bf16.msra.mxu0 %v1065
      %1641 = vmatprep.subr.bf16.mxu0 %v1077
      %1642 = vmatpush1.bf16.msra.mxu0 %v1074
      %1643 = vmatprep.subr.bf16.mxu0 %v1575
      %1644 = vmatpush1.bf16.msra.mxu0 %v1572
      %1645 = vmatprep.subr.bf16.mxu0 %v1475
      %1646 = vmatpush1.bf16.msra.mxu0 %v1474
      %1647 = vmatprep.subr.bf16.mxu0 %v1477
      %1648 = vmatpush1.bf16.msra.mxu0 %v1476
      %1649 = vmatprep.subr.bf16.mxu0 %v1479
      %1650 = vmatpush1.bf16.msra.mxu0 %v1478
      %1651 = vmatprep.subr.bf16.mxu0 %v1481
      %1652 = vmatpush1.bf16.msra.mxu0 %v1480
      %1653 = vmatprep.mubr.bf16.mxu0 %v1603
      %1654 = vmatmul.mubr.bf16.gmra.mrb[0].mxu0 %v1595
      %v1655 = vpop.f32.mrb[0].mxu0
      %v1656 = vadd.f32 %v1585, %v1655
      %v1657 = vpop.f32.mrb[0].mxu0
      %v1658 = vadd.f32 %v1585, %v1657
      %v1659 = vpop.f32.mrb[0].mxu0
      %v1660 = vpop.f32.mrb[0].mxu0
      %1661 = vdwg.mxu0
      %1662 = vmatprep.subr.bf16.mxu0 %v1483
      %1663 = vmatpush1.bf16.msra.mxu0 %v1482
      %1664 = vmatprep.subr.bf16.mxu0 %v1485
      %1665 = vmatpush1.bf16.msra.mxu0 %v1484
      %1666 = vmatprep.subr.bf16.mxu0 %v1487
      %1667 = vmatpush1.bf16.msra.mxu0 %v1486
      %1668 = vmatprep.subr.bf16.mxu0 %v1489
      %1669 = vmatpush1.bf16.msra.mxu0 %v1488
      %1670 = vmatprep.subr.bf16.mxu0 %v1491
      %1671 = vmatpush1.bf16.msra.mxu0 %v1490
      %1672 = vmatprep.subr.bf16.mxu0 %v1493
      %1673 = vmatpush1.bf16.msra.mxu0 %v1492
      %1674 = vmatprep.subr.bf16.mxu0 %v1495
      %1675 = vmatpush1.bf16.msra.mxu0 %v1494
      %1676 = vmatprep.subr.bf16.mxu0 %v1497
      %1677 = vmatpush1.bf16.msra.mxu0 %v1496
      %1678 = vmatprep.subr.bf16.mxu0 %v1499
      %1679 = vmatpush1.bf16.msra.mxu0 %v1498
      %1680 = vmatprep.subr.bf16.mxu0 %v1501
      %1681 = vmatpush1.bf16.msra.mxu0 %v1500
      %1682 = vmatprep.subr.bf16.mxu0 %v1503
      %1683 = vmatpush1.bf16.msra.mxu0 %v1502
      %1684 = vmatprep.subr.bf16.mxu0 %v1505
      %1685 = vmatpush1.bf16.msra.mxu0 %v1504
      %1686 = vmatprep.subr.bf16.mxu0 %v1507
      %1687 = vmatpush1.bf16.msra.mxu0 %v1506
      %1688 = vmatprep.subr.bf16.mxu0 %v1509
      %1689 = vmatpush1.bf16.msra.mxu0 %v1508
      %1690 = vmatprep.subr.bf16.mxu0 %v1511
      %1691 = vmatpush1.bf16.msra.mxu0 %v1510
      %1692 = vmatprep.subr.bf16.mxu0 %v1616
      %1693 = vmatpush1.bf16.msra.mxu0 %v1613
      %1694 = vmatprep.mubr.bf16.mxu0 %v1610
      %1695 = vmatmul.mubr.bf16.gmra.mrb[0].mxu0 %v1602
      %v1696 = vpop.f32.mrb[0].mxu0
      %v1697 = vadd.f32 %v1656, %v1696
      %v1698 = vpop.f32.mrb[0].mxu0
      %v1699 = vadd.f32 %v1658, %v1698
      %v1700 = vpop.f32.mrb[0].mxu0
      %v1701 = vpop.f32.mrb[0].mxu0
      %1702 = vdwg.mxu0
      %1703 = vmatprep.subr.bf16.mxu0 0
      %1704 = vmatpush1.bf16.msra.mxu0 %v978
      %1705 = vmatprep.subr.bf16.mxu0 0
      %1706 = vmatpush1.bf16.msra.mxu0 %v990
      %1707 = vmatprep.subr.bf16.mxu0 0
      %1708 = vmatpush1.bf16.msra.mxu0 %v1002
      %1709 = vmatprep.subr.bf16.mxu0 0
      %1710 = vmatpush1.bf16.msra.mxu0 %v1014
      %1711 = vmatprep.subr.bf16.mxu0 0
      %1712 = vmatpush1.bf16.msra.mxu0 %v1026
      %1713 = vmatprep.subr.bf16.mxu0 0
      %1714 = vmatpush1.bf16.msra.mxu0 %v1035
      %1715 = vmatprep.subr.bf16.mxu0 0
      %1716 = vmatpush1.bf16.msra.mxu0 %v1044
      %1717 = vmatprep.subr.bf16.mxu0 0
      %1718 = vmatpush1.bf16.msra.mxu0 %v1053
      %1719 = vmatprep.subr.bf16.mxu0 0
      %1720 = vmatpush1.bf16.msra.mxu0 %v1062
      %1721 = vmatprep.subr.bf16.mxu0 0
      %1722 = vmatpush1.bf16.msra.mxu0 %v1071
      %1723 = vmatprep.subr.bf16.mxu0 0
      %1724 = vmatpush1.bf16.msra.mxu0 %v1080
      %1725 = vmatprep.subr.bf16.mxu0 0
      %1726 = vmatpush1.bf16.msra.mxu0 %v1578
      %1727 = vmatprep.subr.bf16.mxu0 0
      %1728 = vmatpush1.bf16.msra.mxu0 %v1357
      %1729 = vmatprep.subr.bf16.mxu0 0
      %1730 = vmatpush1.bf16.msra.mxu0 %v1363
      %1731 = vmatprep.subr.bf16.mxu0 0
      %1732 = vmatpush1.bf16.msra.mxu0 %v1369
      %1733 = vmatprep.subr.bf16.mxu0 0
      %1734 = vmatpush1.bf16.msra.mxu0 %v1375
      %1735 = vmatprep.mubr.bf16.mxu0 %v1603
      %1736 = vmatmul.mubr.bf16.gmra.mrb[0].mxu0 %v1595
      %v1737 = vpop.f32.mrb[0].mxu0
      %v1738 = vadd.f32 %v1585, %v1737
      %v1739 = vpop.f32.mrb[0].mxu0
      %v1740 = vpop.f32.mrb[0].mxu0
      %v1741 = vpop.f32.mrb[0].mxu0
      %1742 = vdwg.mxu0
      %1743 = vmatprep.subr.bf16.mxu0 0
      %1744 = vmatpush1.bf16.msra.mxu0 %v1381
      %1745 = vmatprep.subr.bf16.mxu0 0
      %1746 = vmatpush1.bf16.msra.mxu0 %v1387
      %1747 = vmatprep.subr.bf16.mxu0 0
      %1748 = vmatpush1.bf16.msra.mxu0 %v1393
      %1749 = vmatprep.subr.bf16.mxu0 0
      %1750 = vmatpush1.bf16.msra.mxu0 %v1399
      %1751 = vmatprep.subr.bf16.mxu0 0
      %1752 = vmatpush1.bf16.msra.mxu0 %v1405
      %1753 = vmatprep.subr.bf16.mxu0 0
      %1754 = vmatpush1.bf16.msra.mxu0 %v1411
      %1755 = vmatprep.subr.bf16.mxu0 0
      %1756 = vmatpush1.bf16.msra.mxu0 %v1417
      %1757 = vmatprep.subr.bf16.mxu0 0
      %1758 = vmatpush1.bf16.msra.mxu0 %v1423
      %1759 = vmatprep.subr.bf16.mxu0 0
      %1760 = vmatpush1.bf16.msra.mxu0 %v1429
      %1761 = vmatprep.subr.bf16.mxu0 0
      %1762 = vmatpush1.bf16.msra.mxu0 %v1435
      %1763 = vmatprep.subr.bf16.mxu0 0
      %1764 = vmatpush1.bf16.msra.mxu0 %v1441
      %1765 = vmatprep.subr.bf16.mxu0 0
      %1766 = vmatpush1.bf16.msra.mxu0 %v1447
      %1767 = vmatprep.subr.bf16.mxu0 0
      %1768 = vmatpush1.bf16.msra.mxu0 %v1453
      %1769 = vmatprep.subr.bf16.mxu0 0
      %1770 = vmatpush1.bf16.msra.mxu0 %v1459
      %1771 = vmatprep.subr.bf16.mxu0 0
      %1772 = vmatpush1.bf16.msra.mxu0 %v1465
      %1773 = vmatprep.subr.bf16.mxu0 0
      %1774 = vmatpush1.bf16.msra.mxu0 %v1619
      %1775 = vmatprep.mubr.bf16.mxu0 %v1610
      %1776 = vmatmul.mubr.bf16.gmra.mrb[0].mxu0 %v1602
      %v1777 = vpop.f32.mrb[0].mxu0
      %v1778 = vadd.f32 %v1738, %v1777
      %v1779 = vpop.f32.mrb[0].mxu0
      %v1780 = vpop.f32.mrb[0].mxu0
      %v1781 = vpop.f32.mrb[0].mxu0
      %1782 = vdwg.mxu0
      %v1783 = vld [vmem:[%s370] sm:$0xff]
      %v1784 = vld [vmem:[%s370 + $0x8] sm:$0xf]
      %v1787 = vcombine.low %v1697, %v1699
      %v1789 = vmul.f32 %v1783, %v1787
      %v1790 = vmul.f32 %v1784, %v1778
      %1791 = vst [vmem:[%s389] sm:$0xff] %v1789
      %vm1792 = vcmask 257024
      %1793 = vst.msk [vmem:[%s389 + $0x8] sm:$0xf] %vm1792, %v1790
      %p1794 = scmp.lt.s32.totalorder %s20, 1
      %s1795 = scalar_select %p1794, %s20, 1
      %s1796 = smul.addr %s1795, 3
      %s1797 = smul.addr %s1796, 4
      %s1798 = scalar_lea.vmem %s9, %s1797
      // Predicated region
      $region57: #{bba_forward.3} parent=55 // pred_check
        %p1799 = pneg %p247
      $region58: #{bba_forward.3} parent=55 // pred_check_branch
        %1801 = sbr.rel (%p1799) target = $region60
      $region59: #{bba_forward.3} parent=55 // pred_region
        _
      $region60: #{bba_forward.3} parent=55 // pred_fallthru
        _
    $region56: #{bba_forward.3} parent=5 // pred_fallthru
      _
    %p1802 = scmp.le.s32.totalorder 2, %s15
    // Predicated region
    $region61: #{bba_forward.3} parent=5 // pred_check
      %p1803 = pneg %p1802
    $region62: #{bba_forward.3} parent=5 // pred_check_branch
      %1805 = sbr.rel (%p1803) target = $region64
    $region63: #{bba_forward.3} parent=5 // pred_region
      %s1806 = ssub.s32 %s15, 2
      // Predicated region
      $region65: #{bba_forward.3} parent=63 // pred_check
        %p1807 = pneg %p253
      $region66: #{bba_forward.3} parent=63 // pred_check_branch
        %1809 = sbr.rel (%p1807) target = $region68
      $region67: #{bba_forward.3} parent=63 // pred_region
        %p1810 = scmp.lt.s32.totalorder %s21, 1
        %s1811 = scalar_select %p1810, %s21, 1
        %s1812 = smul.addr %s1811, 3
        %s1813 = smul.addr %s1812, 4
        %s1814 = scalar_lea.vmem %s9, %s1813
      $region68: #{bba_forward.3} parent=63 // pred_fallthru
        _
    $region64: #{bba_forward.3} parent=5 // pred_fallthru
      _
  $region6: #{bba_forward.3} parent=0 // loop_footer
    %s19 = sadd.s32 1, %s15
  $region7: #{bba_forward.3} parent=0 // loop_footer_branch
    %14 = sbr.rel target = $region3
  $region8: #{bba_forward.3} parent=0 // loop_exit
    _

// kernel: bba_forward.4
$region0: #{bba_forward.4}
  #allocation0 [shape = 'u32[]', space=smem, size = 0x4, offset = 0x4, fixed_abs, tag = 'smem constant byte address 0x4 - core index']
  #allocation1 [shape = 'u32[144,128]{1,0:T(1,128)}', space=vmem, size = 0x12000, scoped, tag = 'internal scratch']
  %s0 = inlined_call_operand.vmem [shape: f32[2,8,80], index: 0, kind: input, shape index: {}]
  %s1 = inlined_call_operand.vmem [shape: bf16[2,16,16], index: 1, kind: input, shape index: {}]
  %s2 = inlined_call_operand.vmem [shape: bf16[16,110], index: 2, kind: input, shape index: {}]
  %s3 = inlined_call_operand.vmem [shape: bf16[2,32,4], index: 3, kind: input, shape index: {}]
  %s4 = inlined_call_operand.vmem [shape: bf16[4,110], index: 4, kind: input, shape index: {}]
  %s5 = inlined_call_operand.vmem [shape: bf16[8,432], index: 5, kind: input, shape index: {}]
  %s6 = inlined_call_operand.vmem [shape: f32[8,1], index: 6, kind: input, shape index: {}]
  %s7 = inlined_call_operand.vmem [shape: f32[2,8,80], index: 7, kind: output, shape index: {}]
  %s8 = sld [smem:[#allocation0]]
  $region61: #{bba_forward.4} parent=0
    _
  %s10 = ssub.s32 1, %s8
  %s11 = scalar_select 0, %s10, %s8
  loop: start=0, step=1, limit=4
  $region2: #{bba_forward.4} parent=0 // loop_pre_header
    _
  $region3: #{bba_forward.4} parent=0 // loop_header
    %s13 = sphi 0, %s17
    %p14 = scmp.ge.s32.totalorder %s13, 4
    %s23 = sphi 0, %s25
    %s26 = sphi 0, %s23
    %s27 = sphi 0, %s26
    %s43 = sphi 0, %s27
    %s49 = sphi 0, %s51
    %s52 = sphi 0, %s49
    %s53 = sphi 0, %s52
    %s69 = sphi 0, %s53
    %s73 = sphi 0, %s73
    %s75 = sphi 0, %s73
    %s76 = sphi 0, %s75
    %s90 = sphi 0, %s76
    %s96 = sphi 0, %s98
    %s99 = sphi 0, %s96
    %s100 = sphi 0, %s99
    %s116 = sphi 0, %s100
    %s120 = sphi 0, %s120
    %s122 = sphi 0, %s120
    %s123 = sphi 0, %s122
    %s137 = sphi 0, %s123
    %s141 = sphi 0, %s141
    %s143 = sphi 0, %s141
    %s144 = sphi 0, %s143
    %s158 = sphi 0, %s144
    %s162 = sphi 0, %s162
    %s164 = sphi 0, %s162
    %s165 = sphi 0, %s164
    %s179 = sphi 0, %s165
    %s185 = sphi 0, %s187
    %s188 = sphi 0, %s185
    %s189 = sphi 0, %s188
    %s205 = sphi 0, %s189
  $region4: #{bba_forward.4} parent=0 // loop_header_branch
    %16 = sbr.rel (%p14) target = $region8
  $region5: #{bba_forward.4} parent=0 // loop_body
    %s18 = ssub.s32 %s13, 1
    %s19 = ssub.s32 %s13, 2
    %s20 = sadd.s32 %s13, 1
    %s21 = ssub.s32 %s13, %s20
    %p22 = scmp.eq.s32.totalorder %s21, 0
    %s24 = sadd.s32 %s23, 1
    %s25 = scalar_select %p22, %s23, %s24
    %p28 = pneg %p22
    %p29 = scmp.eq.s32.totalorder %s13, 1
    %p30 = por %p28, %p29
    %p31 = scmp.ne.s32.totalorder %s23, %s26
    %p32 = scmp.eq.s32.totalorder %s13, 0
    %p33 = por %p31, %p32
    %p34 = scmp.ne.s32.totalorder %s23, %s26
    %p35 = scmp.eq.s32.totalorder %s18, 1
    %p36 = por %p34, %p35
    %p37 = scmp.ne.s32.totalorder %s26, %s27
    %p38 = scmp.eq.s32.totalorder %s18, 0
    %p39 = por %p37, %p38
    %p40 = scmp.ne.s32.totalorder %s26, %s27
    %p41 = scmp.eq.s32.totalorder %s19, 1
    %p42 = por %p40, %p41
    %p44 = scmp.ne.s32.totalorder %s27, %s43
    %p45 = scmp.eq.s32.totalorder %s19, 0
    %p46 = por %p44, %p45
    %s47 = ssub.s32 %s13, %s20
    %p48 = scmp.eq.s32.totalorder %s47, 0
    %s50 = sadd.s32 %s49, 1
    %s51 = scalar_select %p48, %s49, %s50
    %p54 = pneg %p48
    %p55 = scmp.eq.s32.totalorder %s13, 1
    %p56 = por %p54, %p55
    %p57 = scmp.ne.s32.totalorder %s49, %s52
    %p58 = scmp.eq.s32.totalorder %s13, 0
    %p59 = por %p57, %p58
    %p60 = scmp.ne.s32.totalorder %s49, %s52
    %p61 = scmp.eq.s32.totalorder %s18, 1
    %p62 = por %p60, %p61
    %p63 = scmp.ne.s32.totalorder %s52, %s53
    %p64 = scmp.eq.s32.totalorder %s18, 0
    %p65 = por %p63, %p64
    %p66 = scmp.ne.s32.totalorder %s52, %s53
    %p67 = scmp.eq.s32.totalorder %s19, 1
    %p68 = por %p66, %p67
    %p70 = scmp.ne.s32.totalorder %s53, %s69
    %p71 = scmp.eq.s32.totalorder %s19, 0
    %p72 = por %p70, %p71
    %s74 = sadd.s32 %s73, 1
    %p77 = scmp.eq.s32.totalorder %s13, 1
    %p78 = scmp.ne.s32.totalorder %s73, %s75
    %p79 = scmp.eq.s32.totalorder %s13, 0
    %p80 = por %p78, %p79
    %p81 = scmp.ne.s32.totalorder %s73, %s75
    %p82 = scmp.eq.s32.totalorder %s18, 1
    %p83 = por %p81, %p82
    %p84 = scmp.ne.s32.totalorder %s75, %s76
    %p85 = scmp.eq.s32.totalorder %s18, 0
    %p86 = por %p84, %p85
    %p87 = scmp.ne.s32.totalorder %s75, %s76
    %p88 = scmp.eq.s32.totalorder %s19, 1
    %p89 = por %p87, %p88
    %p91 = scmp.ne.s32.totalorder %s76, %s90
    %p92 = scmp.eq.s32.totalorder %s19, 0
    %p93 = por %p91, %p92
    %s94 = ssub.s32 %s13, %s20
    %p95 = scmp.eq.s32.totalorder %s94, 0
    %s97 = sadd.s32 %s96, 1
    %s98 = scalar_select %p95, %s96, %s97
    %p101 = pneg %p95
    %p102 = scmp.eq.s32.totalorder %s13, 1
    %p103 = por %p101, %p102
    %p104 = scmp.ne.s32.totalorder %s96, %s99
    %p105 = scmp.eq.s32.totalorder %s13, 0
    %p106 = por %p104, %p105
    %p107 = scmp.ne.s32.totalorder %s96, %s99
    %p108 = scmp.eq.s32.totalorder %s18, 1
    %p109 = por %p107, %p108
    %p110 = scmp.ne.s32.totalorder %s99, %s100
    %p111 = scmp.eq.s32.totalorder %s18, 0
    %p112 = por %p110, %p111
    %p113 = scmp.ne.s32.totalorder %s99, %s100
    %p114 = scmp.eq.s32.totalorder %s19, 1
    %p115 = por %p113, %p114
    %p117 = scmp.ne.s32.totalorder %s100, %s116
    %p118 = scmp.eq.s32.totalorder %s19, 0
    %p119 = por %p117, %p118
    %s121 = sadd.s32 %s120, 1
    %p124 = scmp.eq.s32.totalorder %s13, 1
    %p125 = scmp.ne.s32.totalorder %s120, %s122
    %p126 = scmp.eq.s32.totalorder %s13, 0
    %p127 = por %p125, %p126
    %p128 = scmp.ne.s32.totalorder %s120, %s122
    %p129 = scmp.eq.s32.totalorder %s18, 1
    %p130 = por %p128, %p129
    %p131 = scmp.ne.s32.totalorder %s122, %s123
    %p132 = scmp.eq.s32.totalorder %s18, 0
    %p133 = por %p131, %p132
    %p134 = scmp.ne.s32.totalorder %s122, %s123
    %p135 = scmp.eq.s32.totalorder %s19, 1
    %p136 = por %p134, %p135
    %p138 = scmp.ne.s32.totalorder %s123, %s137
    %p139 = scmp.eq.s32.totalorder %s19, 0
    %p140 = por %p138, %p139
    %s142 = sadd.s32 %s141, 1
    %p145 = scmp.eq.s32.totalorder %s13, 1
    %p146 = scmp.ne.s32.totalorder %s141, %s143
    %p147 = scmp.eq.s32.totalorder %s13, 0
    %p148 = por %p146, %p147
    %p149 = scmp.ne.s32.totalorder %s141, %s143
    %p150 = scmp.eq.s32.totalorder %s18, 1
    %p151 = por %p149, %p150
    %p152 = scmp.ne.s32.totalorder %s143, %s144
    %p153 = scmp.eq.s32.totalorder %s18, 0
    %p154 = por %p152, %p153
    %p155 = scmp.ne.s32.totalorder %s143, %s144
    %p156 = scmp.eq.s32.totalorder %s19, 1
    %p157 = por %p155, %p156
    %p159 = scmp.ne.s32.totalorder %s144, %s158
    %p160 = scmp.eq.s32.totalorder %s19, 0
    %p161 = por %p159, %p160
    %s163 = sadd.s32 %s162, 1
    %p166 = scmp.eq.s32.totalorder %s13, 1
    %p167 = scmp.ne.s32.totalorder %s162, %s164
    %p168 = scmp.eq.s32.totalorder %s13, 0
    %p169 = por %p167, %p168
    %p170 = scmp.ne.s32.totalorder %s162, %s164
    %p171 = scmp.eq.s32.totalorder %s18, 1
    %p172 = por %p170, %p171
    %p173 = scmp.ne.s32.totalorder %s164, %s165
    %p174 = scmp.eq.s32.totalorder %s18, 0
    %p175 = por %p173, %p174
    %p176 = scmp.ne.s32.totalorder %s164, %s165
    %p177 = scmp.eq.s32.totalorder %s19, 1
    %p178 = por %p176, %p177
    %p180 = scmp.ne.s32.totalorder %s165, %s179
    %p181 = scmp.eq.s32.totalorder %s19, 0
    %p182 = por %p180, %p181
    %s183 = ssub.s32 %s13, %s20
    %p184 = scmp.eq.s32.totalorder %s183, 0
    %s186 = sadd.s32 %s185, 1
    %s187 = scalar_select %p184, %s185, %s186
    %p190 = pneg %p184
    %p191 = scmp.eq.s32.totalorder %s13, 1
    %p192 = por %p190, %p191
    %p193 = scmp.ne.s32.totalorder %s185, %s188
    %p194 = scmp.eq.s32.totalorder %s13, 0
    %p195 = por %p193, %p194
    %p196 = scmp.ne.s32.totalorder %s185, %s188
    %p197 = scmp.eq.s32.totalorder %s18, 1
    %p198 = por %p196, %p197
    %p199 = scmp.ne.s32.totalorder %s188, %s189
    %p200 = scmp.eq.s32.totalorder %s18, 0
    %p201 = por %p199, %p200
    %p202 = scmp.ne.s32.totalorder %s188, %s189
    %p203 = scmp.eq.s32.totalorder %s19, 1
    %p204 = por %p202, %p203
    %p206 = scmp.ne.s32.totalorder %s189, %s205
    %p207 = scmp.eq.s32.totalorder %s19, 0
    %p208 = por %p206, %p207
    %p209 = scmp.le.s32.totalorder 1, %s13
    %p210 = scmp.lt.s32.totalorder %s13, 3
    %p211 = pnand %p209, %p210
    %p212 = pneg %p211
    // Predicated region
    $region9: #{bba_forward.4} parent=5 // pred_check
      _
    $region10: #{bba_forward.4} parent=5 // pred_check_branch
      %214 = sbr.rel (%p211) target = $region12
    $region11: #{bba_forward.4} parent=5 // pred_region
      %s215 = ssub.s32 %s13, 1
      // Predicated region
      $region13: #{bba_forward.4} parent=11 // pred_check
        %p216 = pneg %p86
      $region14: #{bba_forward.4} parent=11 // pred_check_branch
        %218 = sbr.rel (%p216) target = $region16
      $region15: #{bba_forward.4} parent=11 // pred_region
        _
      $region16: #{bba_forward.4} parent=11 // pred_fallthru
        _
      // Predicated region
      $region17: #{bba_forward.4} parent=11 // pred_check
        %p219 = pneg %p133
      $region18: #{bba_forward.4} parent=11 // pred_check_branch
        %221 = sbr.rel (%p219) target = $region20
      $region19: #{bba_forward.4} parent=11 // pred_region
        _
      $region20: #{bba_forward.4} parent=11 // pred_fallthru
        _
      // Predicated region
      $region21: #{bba_forward.4} parent=11 // pred_check
        %p222 = pneg %p154
      $region22: #{bba_forward.4} parent=11 // pred_check_branch
        %224 = sbr.rel (%p222) target = $region24
      $region23: #{bba_forward.4} parent=11 // pred_region
        _
      $region24: #{bba_forward.4} parent=11 // pred_fallthru
        _
      // Predicated region
      $region25: #{bba_forward.4} parent=11 // pred_check
        %p225 = pneg %p175
      $region26: #{bba_forward.4} parent=11 // pred_check_branch
        %227 = sbr.rel (%p225) target = $region28
      $region27: #{bba_forward.4} parent=11 // pred_region
        _
      $region28: #{bba_forward.4} parent=11 // pred_fallthru
        _
    $region12: #{bba_forward.4} parent=5 // pred_fallthru
      _
    %p228 = scmp.lt.s32.totalorder %s13, 2
    // Predicated region
    $region29: #{bba_forward.4} parent=5 // pred_check
      %p229 = pneg %p228
    $region30: #{bba_forward.4} parent=5 // pred_check_branch
      %231 = sbr.rel (%p229) target = $region32
    $region31: #{bba_forward.4} parent=5 // pred_region
      // Predicated region
      $region33: #{bba_forward.4} parent=31 // pred_check
        %p232 = pneg %p33
      $region34: #{bba_forward.4} parent=31 // pred_check_branch
        %234 = sbr.rel (%p232) target = $region36
      $region35: #{bba_forward.4} parent=31 // pred_region
        %p235 = scmp.lt.s32.totalorder %s13, 1
        %s236 = scalar_select %p235, %s13, 1
        %s237 = smul.addr %s236, 8
        %s238 = scalar_lea.vmem %s0, %s237
      $region36: #{bba_forward.4} parent=31 // pred_fallthru
        _
      // Predicated region
      $region37: #{bba_forward.4} parent=31 // pred_check
        %p239 = pneg %p59
      $region38: #{bba_forward.4} parent=31 // pred_check_branch
        %241 = sbr.rel (%p239) target = $region40
      $region39: #{bba_forward.4} parent=31 // pred_region
        %p242 = scmp.lt.s32.totalorder %s13, 1
        %s243 = scalar_select %p242, %s13, 1
        %s244 = smul.addr %s243, 2
        %s245 = smul.addr %s244, 4
        %s246 = scalar_lea.vmem %s1, %s245
      $region40: #{bba_forward.4} parent=31 // pred_fallthru
        _
      // Predicated region
      $region41: #{bba_forward.4} parent=31 // pred_check
        %p247 = pneg %p106
      $region42: #{bba_forward.4} parent=31 // pred_check_branch
        %249 = sbr.rel (%p247) target = $region44
      $region43: #{bba_forward.4} parent=31 // pred_region
        %p250 = scmp.lt.s32.totalorder %s13, 1
        %s251 = scalar_select %p250, %s13, 1
        %s252 = smul.addr %s251, 4
        %s253 = smul.addr %s252, 4
        %s254 = scalar_lea.vmem %s3, %s253
      $region44: #{bba_forward.4} parent=31 // pred_fallthru
        _
    $region32: #{bba_forward.4} parent=5 // pred_fallthru
      _
    %p255 = scmp.le.s32.totalorder 1, %s13
    %p256 = scmp.lt.s32.totalorder %s13, 3
    %p257 = pnand %p255, %p256
    %p258 = pneg %p257
    // Predicated region
    $region45: #{bba_forward.4} parent=5 // pred_check
      _
    $region46: #{bba_forward.4} parent=5 // pred_check_branch
      %260 = sbr.rel (%p257) target = $region48
    $region47: #{bba_forward.4} parent=5 // pred_region
      %s261 = ssub.s32 %s13, 1
      %p262 = scmp.lt.s32.totalorder %s18, 1
      %s263 = scalar_select %p262, %s18, 1
      %s264 = smul.addr %s263, 8
      %s265 = scalar_lea.vmem %s0, %s264
      %p266 = pneg %p39
      %p267 = pneg %p36
      %p268 = scmp.lt.s32.totalorder %s18, 1
      %s269 = scalar_select %p268, %s18, 1
      %s270 = smul.addr %s269, 2
      %s271 = smul.addr %s270, 4
      %s272 = scalar_lea.vmem %s1, %s271
      %p273 = pneg %p65
      %p274 = pneg %p62
      %p275 = pneg %p86
      %p276 = pneg %p83
      %p277 = scmp.lt.s32.totalorder %s18, 1
      %s278 = scalar_select %p277, %s18, 1
      %s279 = smul.addr %s278, 4
      %s280 = smul.addr %s279, 4
      %s281 = scalar_lea.vmem %s3, %s280
      %p282 = pneg %p112
      %p283 = pneg %p109
      %p284 = pneg %p133
      %p285 = pneg %p130
      %p286 = pneg %p154
      %p287 = pneg %p151
      %p288 = pneg %p175
      %p289 = pneg %p172
      %p290 = pneg %p201
      %p291 = pneg %p198
      %p292 = scmp.lt.s32.totalorder %s18, 1
      %s293 = scalar_select %p292, %s18, 1
      %s294 = smul.addr %s293, 8
      %s295 = scalar_lea.vmem %s7, %s294
      %p296 = scmp.lt.s32.totalorder %s18, 1
      %s297 = scalar_select %p296, %s18, 1
      %s298 = smul.addr %s297, 8
      %s299 = scalar_lea.vmem %s0, %s298
      %p300 = scmp.lt.s32.totalorder %s18, 1
      %s301 = scalar_select %p300, %s18, 1
      %s302 = smul.addr %s301, 2
      %s303 = smul.addr %s302, 4
      %s304 = scalar_lea.vmem %s1, %s303
      %p305 = scmp.lt.s32.totalorder %s18, 1
      %s306 = scalar_select %p305, %s18, 1
      %s307 = smul.addr %s306, 4
      %s308 = smul.addr %s307, 4
      %s309 = scalar_lea.vmem %s3, %s308
      %p310 = scmp.lt.s32.totalorder %s18, 1
      %s311 = scalar_select %p310, %s18, 1
      %s312 = smul.addr %s311, 8
      %s313 = scalar_lea.vmem %s7, %s312
      %v315 = vld [vmem:[%s304] sm:$0xf]
      %v316 = vld [vmem:[%s304 + $0x4] sm:$0xf]
      %v317 = vld [vmem:[%s2] sm:$0xf]
      %v318 = vld [vmem:[%s2 + $0x4] sm:$0xf]
      %v321 = vunpack.c.l.b16 %v315
      %v322 = vunpack.c.l.b16 %v316
      %v323 = vpack.c.b16 %v322, %v321
      %v326 = vunpack.c.l.b16 %v317
      %v327 = vunpack.c.l.b16 %v318
      %v328 = vpack.c.b16 %v327, %v326
      %vm330 = vcmask 130048
      %v332 = vsel %vm330, %v323, 0
      %334 = vmatprep.subr.bf16.mxu0 0
      %335 = vmatpush1.bf16.msra.mxu0 %v328
      %336 = vmatprep.subr.bf16.mxu0 0
      %337 = vmatpush1.bf16.msra.mxu0 0
      %338 = vmatprep.subr.bf16.mxu0 0
      %339 = vmatpush1.bf16.msra.mxu0 0
      %340 = vmatprep.subr.bf16.mxu0 0
      %341 = vmatpush1.bf16.msra.mxu0 0
      %342 = vmatprep.subr.bf16.mxu0 0
      %343 = vmatpush1.bf16.msra.mxu0 0
      %344 = vmatprep.subr.bf16.mxu0 0
      %345 = vmatpush1.bf16.msra.mxu0 0
      %346 = vmatprep.subr.bf16.mxu0 0
      %347 = vmatpush1.bf16.msra.mxu0 0
      %348 = vmatprep.subr.bf16.mxu0 0
      %349 = vmatpush1.bf16.msra.mxu0 0
      %350 = vmatprep.subr.bf16.mxu0 0
      %351 = vmatpush1.bf16.msra.mxu0 0
      %352 = vmatprep.subr.bf16.mxu0 0
      %353 = vmatpush1.bf16.msra.mxu0 0
      %354 = vmatprep.subr.bf16.mxu0 0
      %355 = vmatpush1.bf16.msra.mxu0 0
      %356 = vmatprep.subr.bf16.mxu0 0
      %357 = vmatpush1.bf16.msra.mxu0 0
      %358 = vmatprep.subr.bf16.mxu0 0
      %359 = vmatpush1.bf16.msra.mxu0 0
      %360 = vmatprep.subr.bf16.mxu0 0
      %361 = vmatpush1.bf16.msra.mxu0 0
      %362 = vmatprep.subr.bf16.mxu0 0
      %363 = vmatpush1.bf16.msra.mxu0 0
      %364 = vmatprep.subr.bf16.mxu0 0
      %365 = vmatpush1.bf16.msra.mxu0 0
      %366 = vmatprep.mubr.bf16.mxu0 0
      %367 = vmatmul.mubr.bf16.gmra.mrb[0].mxu0 %v332
      %v368 = vpop.f32.mrb[0].mxu0
      %v369 = vadd.f32 0.0, %v368
      %v370 = vpop.f32.mrb[0].mxu0
      %v371 = vpop.f32.mrb[0].mxu0
      %v372 = vadd.f32 0.0, %v371
      %v373 = vpop.f32.mrb[0].mxu0
      %374 = vdwg.mxu0
      %v375 = vpack.c.bf16 %v372, %v369
      %v376 = vld [vmem:[%s309] sm:$0xf]
      %v377 = vld [vmem:[%s309 + $0x4] sm:$0xf]
      %v378 = vld [vmem:[%s309 + $0x8] sm:$0xf]
      %v379 = vld [vmem:[%s309 + $0xc] sm:$0xf]
      %v380 = vld [vmem:[%s4] sm:$0x3]
      %v385 = vunpack.c.l.b16 %v376
      %v386 = vunpack.c.l.b16 %v377
      %v387 = vunpack.c.l.b16 %v378
      %v388 = vunpack.c.l.b16 %v379
      %v389 = vpack.c.b16 %v386, %v385
      %v390 = vpack.c.b16 %v388, %v387
      %vm391 = vcmask 31744
      %v393 = vsel %vm391, %v389, 0
      %v396 = vsel %vm391, %v390, 0
      %vm398 = vcmask 1041408
      %v400 = vsel %vm398, %v380, 0
      %402 = vmatprep.subr.bf16.mxu0 0
      %403 = vmatpush1.bf16.msra.mxu0 %v400
      %404 = vmatprep.subr.bf16.mxu0 0
      %405 = vmatpush1.bf16.msra.mxu0 0
      %406 = vmatprep.subr.bf16.mxu0 0
      %407 = vmatpush1.bf16.msra.mxu0 0
      %408 = vmatprep.subr.bf16.mxu0 0
      %409 = vmatpush1.bf16.msra.mxu0 0
      %410 = vmatprep.subr.bf16.mxu0 0
      %411 = vmatpush1.bf16.msra.mxu0 0
      %412 = vmatprep.subr.bf16.mxu0 0
      %413 = vmatpush1.bf16.msra.mxu0 0
      %414 = vmatprep.subr.bf16.mxu0 0
      %415 = vmatpush1.bf16.msra.mxu0 0
      %416 = vmatprep.subr.bf16.mxu0 0
      %417 = vmatpush1.bf16.msra.mxu0 0
      %418 = vmatprep.subr.bf16.mxu0 0
      %419 = vmatpush1.bf16.msra.mxu0 0
      %420 = vmatprep.subr.bf16.mxu0 0
      %421 = vmatpush1.bf16.msra.mxu0 0
      %422 = vmatprep.subr.bf16.mxu0 0
      %423 = vmatpush1.bf16.msra.mxu0 0
      %424 = vmatprep.subr.bf16.mxu0 0
      %425 = vmatpush1.bf16.msra.mxu0 0
      %426 = vmatprep.subr.bf16.mxu0 0
      %427 = vmatpush1.bf16.msra.mxu0 0
      %428 = vmatprep.subr.bf16.mxu0 0
      %429 = vmatpush1.bf16.msra.mxu0 0
      %430 = vmatprep.subr.bf16.mxu0 0
      %431 = vmatpush1.bf16.msra.mxu0 0
      %432 = vmatprep.subr.bf16.mxu0 0
      %433 = vmatpush1.bf16.msra.mxu0 0
      %434 = vmatprep.mubr.bf16.mxu0 0
      %435 = vmatmul.mubr.bf16.gmra.mrb[0].mxu0 %v393
      %v436 = vpop.f32.mrb[0].mxu0
      %v437 = vadd.f32 0.0, %v436
      %v438 = vpop.f32.mrb[0].mxu0
      %v439 = vpop.f32.mrb[0].mxu0
      %v440 = vadd.f32 0.0, %v439
      %v441 = vpop.f32.mrb[0].mxu0
      %442 = vmatprep.mubr.bf16.mxu0 0
      %443 = vmatmul.mubr.bf16.gmra.mrb[0].mxu0 %v396
      %v444 = vpop.f32.mrb[0].mxu0
      %v445 = vadd.f32 0.0, %v444
      %v446 = vpop.f32.mrb[0].mxu0
      %v447 = vpop.f32.mrb[0].mxu0
      %v448 = vadd.f32 0.0, %v447
      %v449 = vpop.f32.mrb[0].mxu0
      %450 = vdwg.mxu0
      %v451 = vpack.c.bf16 %v440, %v437
      %v452 = vpack.c.bf16 %v448, %v445
      %454 = vrot.lane.b32.xlu0 %v375, 127
      %v455 = vpop.permute.xlu0 %454
      %457 = vrot.lane.b32.xlu0 %v375, 126
      %v458 = vpop.permute.xlu0 %457
      %460 = vrot.lane.b32.xlu0 %v375, 118
      %v461 = vpop.permute.xlu0 %460
      %463 = vrot.lane.b32.xlu0 %v375, 117
      %v464 = vpop.permute.xlu0 %463
      %466 = vrot.lane.b32.xlu0 %v375, 116
      %v467 = vpop.permute.xlu0 %466
      %469 = vrot.lane.b32.xlu0 %v375, 108
      %v470 = vpop.permute.xlu0 %469
      %472 = vrot.lane.b32.xlu0 %v375, 107
      %v473 = vpop.permute.xlu0 %472
      %475 = vrot.lane.b32.xlu0 %v375, 106
      %v476 = vpop.permute.xlu0 %475
      %480 = vrot.lane.b32.xlu0 %v451, 127
      %v481 = vpop.permute.xlu0 %480
      %482 = vrot.lane.b32.xlu0 %v452, 127
      %v483 = vpop.permute.xlu0 %482
      %486 = vrot.lane.b32.xlu0 %v451, 126
      %v487 = vpop.permute.xlu0 %486
      %488 = vrot.lane.b32.xlu0 %v452, 126
      %v489 = vpop.permute.xlu0 %488
      %492 = vrot.lane.b32.xlu0 %v451, 118
      %v493 = vpop.permute.xlu0 %492
      %494 = vrot.lane.b32.xlu0 %v452, 118
      %v495 = vpop.permute.xlu0 %494
      %498 = vrot.lane.b32.xlu0 %v451, 117
      %v499 = vpop.permute.xlu0 %498
      %500 = vrot.lane.b32.xlu0 %v452, 117
      %v501 = vpop.permute.xlu0 %500
      %504 = vrot.lane.b32.xlu0 %v451, 116
      %v505 = vpop.permute.xlu0 %504
      %506 = vrot.lane.b32.xlu0 %v452, 116
      %v507 = vpop.permute.xlu0 %506
      %510 = vrot.lane.b32.xlu0 %v451, 108
      %v511 = vpop.permute.xlu0 %510
      %512 = vrot.lane.b32.xlu0 %v452, 108
      %v513 = vpop.permute.xlu0 %512
      %516 = vrot.lane.b32.xlu0 %v451, 107
      %v517 = vpop.permute.xlu0 %516
      %518 = vrot.lane.b32.xlu0 %v452, 107
      %v519 = vpop.permute.xlu0 %518
      %520 = vrot.lane.b32.xlu0 %v481, 107
      %v521 = vpop.permute.xlu0 %520
      %522 = vrot.lane.b32.xlu0 %v483, 107
      %v523 = vpop.permute.xlu0 %522
      %v528 = vld [vmem:[%s5] sm:$0xff]
      %v529 = vld [vmem:[%s5 + $0x8] sm:$0xff]
      %v530 = vld [vmem:[%s6] sm:$0xff]
      %532 = vset.pattern.permute.xlu0 0
      %533 = vperm.xlu0 %532, %v530
      %v534 = vpop.permute.xlu0 %533
      %v538 = vunpack.c.l.b16 %v528
      %v539 = vunpack.c.h.b16 %v528
      %v540 = vunpack.c.l.b16 %v529
      %v541 = vunpack.c.h.b16 %v529
      %v542 = vpack.c.b16 %v538, %v538
      %v543 = vpack.c.b16 %v539, %v539
      %v544 = vpack.c.b16 %v540, %v540
      %v545 = vpack.c.b16 %v541, %v541
      %vm549 = vcmask 392192
      %v551 = vsel %vm549, %v545, 0
      %553 = vmatprep.subr.bf16.mxu0 0
      %554 = vmatpush1.bf16.msra.mxu0 %v375
      %555 = vmatprep.subr.bf16.mxu0 0
      %556 = vmatpush1.bf16.msra.mxu0 %v455
      %557 = vmatprep.subr.bf16.mxu0 0
      %558 = vmatpush1.bf16.msra.mxu0 %v458
      %559 = vmatprep.subr.bf16.mxu0 0
      %560 = vmatpush1.bf16.msra.mxu0 %v461
      %561 = vmatprep.subr.bf16.mxu0 0
      %562 = vmatpush1.bf16.msra.mxu0 %v464
      %563 = vmatprep.subr.bf16.mxu0 0
      %564 = vmatpush1.bf16.msra.mxu0 %v467
      %565 = vmatprep.subr.bf16.mxu0 0
      %566 = vmatpush1.bf16.msra.mxu0 %v470
      %567 = vmatprep.subr.bf16.mxu0 0
      %568 = vmatpush1.bf16.msra.mxu0 %v473
      %569 = vmatprep.subr.bf16.mxu0 0
      %570 = vmatpush1.bf16.msra.mxu0 %v476
      %571 = vmatprep.subr.bf16.mxu0 0
      %572 = vmatpush1.bf16.msra.mxu0 %v451
      %573 = vmatprep.subr.bf16.mxu0 0
      %574 = vmatpush1.bf16.msra.mxu0 %v452
      %575 = vmatprep.subr.bf16.mxu0 0
      %576 = vmatpush1.bf16.msra.mxu0 %v481
      %577 = vmatprep.subr.bf16.mxu0 0
      %578 = vmatpush1.bf16.msra.mxu0 %v483
      %579 = vmatprep.subr.bf16.mxu0 0
      %580 = vmatpush1.bf16.msra.mxu0 %v487
      %581 = vmatprep.subr.bf16.mxu0 0
      %582 = vmatpush1.bf16.msra.mxu0 %v489
      %583 = vmatprep.subr.bf16.mxu0 0
      %584 = vmatpush1.bf16.msra.mxu0 %v493
      %585 = vmatprep.mubr.bf16.mxu0 %v543
      %586 = vmatmul.mubr.bf16.gmra.mrb[0].mxu0 %v542
      %v587 = vpop.f32.mrb[0].mxu0
      %v588 = vadd.f32 %v534, %v587
      %v589 = vpop.f32.mrb[0].mxu0
      %v590 = vpop.f32.mrb[0].mxu0
      %v591 = vpop.f32.mrb[0].mxu0
      %592 = vdwg.mxu0
      %593 = vmatprep.subr.bf16.mxu0 0
      %594 = vmatpush1.bf16.msra.mxu0 %v495
      %595 = vmatprep.subr.bf16.mxu0 0
      %596 = vmatpush1.bf16.msra.mxu0 %v499
      %597 = vmatprep.subr.bf16.mxu0 0
      %598 = vmatpush1.bf16.msra.mxu0 %v501
      %599 = vmatprep.subr.bf16.mxu0 0
      %600 = vmatpush1.bf16.msra.mxu0 %v505
      %601 = vmatprep.subr.bf16.mxu0 0
      %602 = vmatpush1.bf16.msra.mxu0 %v507
      %603 = vmatprep.subr.bf16.mxu0 0
      %604 = vmatpush1.bf16.msra.mxu0 %v511
      %605 = vmatprep.subr.bf16.mxu0 0
      %606 = vmatpush1.bf16.msra.mxu0 %v513
      %607 = vmatprep.subr.bf16.mxu0 0
      %608 = vmatpush1.bf16.msra.mxu0 %v517
      %609 = vmatprep.subr.bf16.mxu0 0
      %610 = vmatpush1.bf16.msra.mxu0 %v519
      %611 = vmatprep.subr.bf16.mxu0 0
      %612 = vmatpush1.bf16.msra.mxu0 %v521
      %613 = vmatprep.subr.bf16.mxu0 0
      %614 = vmatpush1.bf16.msra.mxu0 %v523
      %615 = vmatprep.subr.bf16.mxu0 0
      %616 = vmatpush1.bf16.msra.mxu0 0
      %617 = vmatprep.subr.bf16.mxu0 0
      %618 = vmatpush1.bf16.msra.mxu0 0
      %619 = vmatprep.subr.bf16.mxu0 0
      %620 = vmatpush1.bf16.msra.mxu0 0
      %621 = vmatprep.subr.bf16.mxu0 0
      %622 = vmatpush1.bf16.msra.mxu0 0
      %623 = vmatprep.subr.bf16.mxu0 0
      %624 = vmatpush1.bf16.msra.mxu0 0
      %625 = vmatprep.mubr.bf16.mxu0 %v551
      %626 = vmatmul.mubr.bf16.gmra.mrb[0].mxu0 %v544
      %v627 = vpop.f32.mrb[0].mxu0
      %v628 = vadd.f32 %v588, %v627
      %v629 = vpop.f32.mrb[0].mxu0
      %v630 = vpop.f32.mrb[0].mxu0
      %v631 = vpop.f32.mrb[0].mxu0
      %632 = vdwg.mxu0
      %v633 = vld [vmem:[%s299] sm:$0xff]
      %v634 = vmul.f32 %v633, %v628
      %vm635 = vcmask 654336
      %636 = vst.msk [vmem:[%s313] sm:$0xff] %vm635, %v634
      %p637 = scmp.lt.s32.totalorder %s18, 1
      %s638 = scalar_select %p637, %s18, 1
      %s639 = smul.addr %s638, 8
      %s640 = scalar_lea.vmem %s7, %s639
      // Predicated region
      $region49: #{bba_forward.4} parent=47 // pred_check
        %p641 = pneg %p198
      $region50: #{bba_forward.4} parent=47 // pred_check_branch
        %643 = sbr.rel (%p641) target = $region52
      $region51: #{bba_forward.4} parent=47 // pred_region
        _
      $region52: #{bba_forward.4} parent=47 // pred_fallthru
        _
    $region48: #{bba_forward.4} parent=5 // pred_fallthru
      _
    %p644 = scmp.le.s32.totalorder 2, %s13
    // Predicated region
    $region53: #{bba_forward.4} parent=5 // pred_check
      %p645 = pneg %p644
    $region54: #{bba_forward.4} parent=5 // pred_check_branch
      %647 = sbr.rel (%p645) target = $region56
    $region55: #{bba_forward.4} parent=5 // pred_region
      %s648 = ssub.s32 %s13, 2
      // Predicated region
      $region57: #{bba_forward.4} parent=55 // pred_check
        %p649 = pneg %p204
      $region58: #{bba_forward.4} parent=55 // pred_check_branch
        %651 = sbr.rel (%p649) target = $region60
      $region59: #{bba_forward.4} parent=55 // pred_region
        %p652 = scmp.lt.s32.totalorder %s19, 1
        %s653 = scalar_select %p652, %s19, 1
        %s654 = smul.addr %s653, 8
        %s655 = scalar_lea.vmem %s7, %s654
      $region60: #{bba_forward.4} parent=55 // pred_fallthru
        _
    $region56: #{bba_forward.4} parent=5 // pred_fallthru
      _
  $region6: #{bba_forward.4} parent=0 // loop_footer
    %s17 = sadd.s32 1, %s13
  $region7: #{bba_forward.4} parent=0 // loop_footer_branch
    %12 = sbr.rel target = $region3
  $region8: #{bba_forward.4} parent=0 // loop_exit
    _

// kernel: bba_forward.5
$region0: #{bba_forward.5}
  #allocation0 [shape = 'u32[]', space=smem, size = 0x4, offset = 0x4, fixed_abs, tag = 'smem constant byte address 0x4 - core index']
  #allocation1 [shape = 'u32[144,128]{1,0:T(1,128)}', space=vmem, size = 0x12000, scoped, tag = 'internal scratch']
  %s0 = inlined_call_operand.vmem [shape: f32[2,16,24], index: 0, kind: input, shape index: {}]
  %s1 = inlined_call_operand.vmem [shape: bf16[2,32,4], index: 1, kind: input, shape index: {}]
  %s2 = inlined_call_operand.vmem [shape: bf16[4,42], index: 2, kind: input, shape index: {}]
  %s3 = inlined_call_operand.vmem [shape: bf16[32,288], index: 3, kind: input, shape index: {}]
  %s4 = inlined_call_operand.vmem [shape: f32[32,1], index: 4, kind: input, shape index: {}]
  %s5 = inlined_call_operand.vmem [shape: f32[2,16,24], index: 5, kind: output, shape index: {0}]
  %s6 = inlined_call_operand.vmem [shape: f32[2,16,24], index: 6, kind: output, shape index: {1}]
  %7 = xla_tuple %s5, %s6
  %s8 = sld [smem:[#allocation0]]
  $region61: #{bba_forward.5} parent=0
    _
  %s10 = ssub.s32 1, %s8
  %s11 = scalar_select 0, %s10, %s8
  loop: start=0, step=1, limit=4
  $region2: #{bba_forward.5} parent=0 // loop_pre_header
    _
  $region3: #{bba_forward.5} parent=0 // loop_header
    %s13 = sphi 0, %s17
    %p14 = scmp.ge.s32.totalorder %s13, 4
    %s23 = sphi 0, %s25
    %s26 = sphi 0, %s23
    %s27 = sphi 0, %s26
    %s43 = sphi 0, %s27
    %s49 = sphi 0, %s51
    %s52 = sphi 0, %s49
    %s53 = sphi 0, %s52
    %s69 = sphi 0, %s53
    %s73 = sphi 0, %s73
    %s75 = sphi 0, %s73
    %s76 = sphi 0, %s75
    %s90 = sphi 0, %s76
    %s94 = sphi 0, %s94
    %s96 = sphi 0, %s94
    %s97 = sphi 0, %s96
    %s111 = sphi 0, %s97
    %s115 = sphi 0, %s115
    %s117 = sphi 0, %s115
    %s118 = sphi 0, %s117
    %s132 = sphi 0, %s118
    %s138 = sphi 0, %s140
    %s141 = sphi 0, %s138
    %s142 = sphi 0, %s141
    %s158 = sphi 0, %s142
    %s164 = sphi 0, %s166
    %s167 = sphi 0, %s164
    %s168 = sphi 0, %s167
    %s184 = sphi 0, %s168
  $region4: #{bba_forward.5} parent=0 // loop_header_branch
    %16 = sbr.rel (%p14) target = $region8
  $region5: #{bba_forward.5} parent=0 // loop_body
    %s18 = ssub.s32 %s13, 1
    %s19 = ssub.s32 %s13, 2
    %s20 = sadd.s32 %s13, 1
    %s21 = ssub.s32 %s13, %s20
    %p22 = scmp.eq.s32.totalorder %s21, 0
    %s24 = sadd.s32 %s23, 1
    %s25 = scalar_select %p22, %s23, %s24
    %p28 = pneg %p22
    %p29 = scmp.eq.s32.totalorder %s13, 1
    %p30 = por %p28, %p29
    %p31 = scmp.ne.s32.totalorder %s23, %s26
    %p32 = scmp.eq.s32.totalorder %s13, 0
    %p33 = por %p31, %p32
    %p34 = scmp.ne.s32.totalorder %s23, %s26
    %p35 = scmp.eq.s32.totalorder %s18, 1
    %p36 = por %p34, %p35
    %p37 = scmp.ne.s32.totalorder %s26, %s27
    %p38 = scmp.eq.s32.totalorder %s18, 0
    %p39 = por %p37, %p38
    %p40 = scmp.ne.s32.totalorder %s26, %s27
    %p41 = scmp.eq.s32.totalorder %s19, 1
    %p42 = por %p40, %p41
    %p44 = scmp.ne.s32.totalorder %s27, %s43
    %p45 = scmp.eq.s32.totalorder %s19, 0
    %p46 = por %p44, %p45
    %s47 = ssub.s32 %s13, %s20
    %p48 = scmp.eq.s32.totalorder %s47, 0
    %s50 = sadd.s32 %s49, 1
    %s51 = scalar_select %p48, %s49, %s50
    %p54 = pneg %p48
    %p55 = scmp.eq.s32.totalorder %s13, 1
    %p56 = por %p54, %p55
    %p57 = scmp.ne.s32.totalorder %s49, %s52
    %p58 = scmp.eq.s32.totalorder %s13, 0
    %p59 = por %p57, %p58
    %p60 = scmp.ne.s32.totalorder %s49, %s52
    %p61 = scmp.eq.s32.totalorder %s18, 1
    %p62 = por %p60, %p61
    %p63 = scmp.ne.s32.totalorder %s52, %s53
    %p64 = scmp.eq.s32.totalorder %s18, 0
    %p65 = por %p63, %p64
    %p66 = scmp.ne.s32.totalorder %s52, %s53
    %p67 = scmp.eq.s32.totalorder %s19, 1
    %p68 = por %p66, %p67
    %p70 = scmp.ne.s32.totalorder %s53, %s69
    %p71 = scmp.eq.s32.totalorder %s19, 0
    %p72 = por %p70, %p71
    %s74 = sadd.s32 %s73, 1
    %p77 = scmp.eq.s32.totalorder %s13, 1
    %p78 = scmp.ne.s32.totalorder %s73, %s75
    %p79 = scmp.eq.s32.totalorder %s13, 0
    %p80 = por %p78, %p79
    %p81 = scmp.ne.s32.totalorder %s73, %s75
    %p82 = scmp.eq.s32.totalorder %s18, 1
    %p83 = por %p81, %p82
    %p84 = scmp.ne.s32.totalorder %s75, %s76
    %p85 = scmp.eq.s32.totalorder %s18, 0
    %p86 = por %p84, %p85
    %p87 = scmp.ne.s32.totalorder %s75, %s76
    %p88 = scmp.eq.s32.totalorder %s19, 1
    %p89 = por %p87, %p88
    %p91 = scmp.ne.s32.totalorder %s76, %s90
    %p92 = scmp.eq.s32.totalorder %s19, 0
    %p93 = por %p91, %p92
    %s95 = sadd.s32 %s94, 1
    %p98 = scmp.eq.s32.totalorder %s13, 1
    %p99 = scmp.ne.s32.totalorder %s94, %s96
    %p100 = scmp.eq.s32.totalorder %s13, 0
    %p101 = por %p99, %p100
    %p102 = scmp.ne.s32.totalorder %s94, %s96
    %p103 = scmp.eq.s32.totalorder %s18, 1
    %p104 = por %p102, %p103
    %p105 = scmp.ne.s32.totalorder %s96, %s97
    %p106 = scmp.eq.s32.totalorder %s18, 0
    %p107 = por %p105, %p106
    %p108 = scmp.ne.s32.totalorder %s96, %s97
    %p109 = scmp.eq.s32.totalorder %s19, 1
    %p110 = por %p108, %p109
    %p112 = scmp.ne.s32.totalorder %s97, %s111
    %p113 = scmp.eq.s32.totalorder %s19, 0
    %p114 = por %p112, %p113
    %s116 = sadd.s32 %s115, 1
    %p119 = scmp.eq.s32.totalorder %s13, 1
    %p120 = scmp.ne.s32.totalorder %s115, %s117
    %p121 = scmp.eq.s32.totalorder %s13, 0
    %p122 = por %p120, %p121
    %p123 = scmp.ne.s32.totalorder %s115, %s117
    %p124 = scmp.eq.s32.totalorder %s18, 1
    %p125 = por %p123, %p124
    %p126 = scmp.ne.s32.totalorder %s117, %s118
    %p127 = scmp.eq.s32.totalorder %s18, 0
    %p128 = por %p126, %p127
    %p129 = scmp.ne.s32.totalorder %s117, %s118
    %p130 = scmp.eq.s32.totalorder %s19, 1
    %p131 = por %p129, %p130
    %p133 = scmp.ne.s32.totalorder %s118, %s132
    %p134 = scmp.eq.s32.totalorder %s19, 0
    %p135 = por %p133, %p134
    %s136 = ssub.s32 %s13, %s20
    %p137 = scmp.eq.s32.totalorder %s136, 0
    %s139 = sadd.s32 %s138, 1
    %s140 = scalar_select %p137, %s138, %s139
    %p143 = pneg %p137
    %p144 = scmp.eq.s32.totalorder %s13, 1
    %p145 = por %p143, %p144
    %p146 = scmp.ne.s32.totalorder %s138, %s141
    %p147 = scmp.eq.s32.totalorder %s13, 0
    %p148 = por %p146, %p147
    %p149 = scmp.ne.s32.totalorder %s138, %s141
    %p150 = scmp.eq.s32.totalorder %s18, 1
    %p151 = por %p149, %p150
    %p152 = scmp.ne.s32.totalorder %s141, %s142
    %p153 = scmp.eq.s32.totalorder %s18, 0
    %p154 = por %p152, %p153
    %p155 = scmp.ne.s32.totalorder %s141, %s142
    %p156 = scmp.eq.s32.totalorder %s19, 1
    %p157 = por %p155, %p156
    %p159 = scmp.ne.s32.totalorder %s142, %s158
    %p160 = scmp.eq.s32.totalorder %s19, 0
    %p161 = por %p159, %p160
    %s162 = ssub.s32 %s13, %s20
    %p163 = scmp.eq.s32.totalorder %s162, 0
    %s165 = sadd.s32 %s164, 1
    %s166 = scalar_select %p163, %s164, %s165
    %p169 = pneg %p163
    %p170 = scmp.eq.s32.totalorder %s13, 1
    %p171 = por %p169, %p170
    %p172 = scmp.ne.s32.totalorder %s164, %s167
    %p173 = scmp.eq.s32.totalorder %s13, 0
    %p174 = por %p172, %p173
    %p175 = scmp.ne.s32.totalorder %s164, %s167
    %p176 = scmp.eq.s32.totalorder %s18, 1
    %p177 = por %p175, %p176
    %p178 = scmp.ne.s32.totalorder %s167, %s168
    %p179 = scmp.eq.s32.totalorder %s18, 0
    %p180 = por %p178, %p179
    %p181 = scmp.ne.s32.totalorder %s167, %s168
    %p182 = scmp.eq.s32.totalorder %s19, 1
    %p183 = por %p181, %p182
    %p185 = scmp.ne.s32.totalorder %s168, %s184
    %p186 = scmp.eq.s32.totalorder %s19, 0
    %p187 = por %p185, %p186
    %p188 = scmp.le.s32.totalorder 1, %s13
    %p189 = scmp.lt.s32.totalorder %s13, 3
    %p190 = pnand %p188, %p189
    %p191 = pneg %p190
    // Predicated region
    $region9: #{bba_forward.5} parent=5 // pred_check
      _
    $region10: #{bba_forward.5} parent=5 // pred_check_branch
      %193 = sbr.rel (%p190) target = $region12
    $region11: #{bba_forward.5} parent=5 // pred_region
      %s194 = ssub.s32 %s13, 1
      // Predicated region
      $region13: #{bba_forward.5} parent=11 // pred_check
        %p195 = pneg %p86
      $region14: #{bba_forward.5} parent=11 // pred_check_branch
        %197 = sbr.rel (%p195) target = $region16
      $region15: #{bba_forward.5} parent=11 // pred_region
        _
      $region16: #{bba_forward.5} parent=11 // pred_fallthru
        _
      // Predicated region
      $region17: #{bba_forward.5} parent=11 // pred_check
        %p198 = pneg %p107
      $region18: #{bba_forward.5} parent=11 // pred_check_branch
        %200 = sbr.rel (%p198) target = $region20
      $region19: #{bba_forward.5} parent=11 // pred_region
        _
      $region20: #{bba_forward.5} parent=11 // pred_fallthru
        _
      // Predicated region
      $region21: #{bba_forward.5} parent=11 // pred_check
        %p201 = pneg %p128
      $region22: #{bba_forward.5} parent=11 // pred_check_branch
        %203 = sbr.rel (%p201) target = $region24
      $region23: #{bba_forward.5} parent=11 // pred_region
        _
      $region24: #{bba_forward.5} parent=11 // pred_fallthru
        _
    $region12: #{bba_forward.5} parent=5 // pred_fallthru
      _
    %p204 = scmp.lt.s32.totalorder %s13, 2
    // Predicated region
    $region25: #{bba_forward.5} parent=5 // pred_check
      %p205 = pneg %p204
    $region26: #{bba_forward.5} parent=5 // pred_check_branch
      %207 = sbr.rel (%p205) target = $region28
    $region27: #{bba_forward.5} parent=5 // pred_region
      // Predicated region
      $region29: #{bba_forward.5} parent=27 // pred_check
        %p208 = pneg %p33
      $region30: #{bba_forward.5} parent=27 // pred_check_branch
        %210 = sbr.rel (%p208) target = $region32
      $region31: #{bba_forward.5} parent=27 // pred_region
        %p211 = scmp.lt.s32.totalorder %s13, 1
        %s212 = scalar_select %p211, %s13, 1
        %s213 = smul.addr %s212, 2
        %s214 = smul.addr %s213, 8
        %s215 = scalar_lea.vmem %s0, %s214
      $region32: #{bba_forward.5} parent=27 // pred_fallthru
        _
      // Predicated region
      $region33: #{bba_forward.5} parent=27 // pred_check
        %p216 = pneg %p59
      $region34: #{bba_forward.5} parent=27 // pred_check_branch
        %218 = sbr.rel (%p216) target = $region36
      $region35: #{bba_forward.5} parent=27 // pred_region
        %p219 = scmp.lt.s32.totalorder %s13, 1
        %s220 = scalar_select %p219, %s13, 1
        %s221 = smul.addr %s220, 4
        %s222 = smul.addr %s221, 4
        %s223 = scalar_lea.vmem %s1, %s222
      $region36: #{bba_forward.5} parent=27 // pred_fallthru
        _
    $region28: #{bba_forward.5} parent=5 // pred_fallthru
      _
    %p224 = scmp.le.s32.totalorder 1, %s13
    %p225 = scmp.lt.s32.totalorder %s13, 3
    %p226 = pnand %p224, %p225
    %p227 = pneg %p226
    // Predicated region
    $region37: #{bba_forward.5} parent=5 // pred_check
      _
    $region38: #{bba_forward.5} parent=5 // pred_check_branch
      %229 = sbr.rel (%p226) target = $region40
    $region39: #{bba_forward.5} parent=5 // pred_region
      %s230 = ssub.s32 %s13, 1
      %p231 = scmp.lt.s32.totalorder %s18, 1
      %s232 = scalar_select %p231, %s18, 1
      %s233 = smul.addr %s232, 2
      %s234 = smul.addr %s233, 8
      %s235 = scalar_lea.vmem %s0, %s234
      %p236 = pneg %p39
      %p237 = pneg %p36
      %p238 = scmp.lt.s32.totalorder %s18, 1
      %s239 = scalar_select %p238, %s18, 1
      %s240 = smul.addr %s239, 4
      %s241 = smul.addr %s240, 4
      %s242 = scalar_lea.vmem %s1, %s241
      %p243 = pneg %p65
      %p244 = pneg %p62
      %p245 = pneg %p86
      %p246 = pneg %p83
      %p247 = pneg %p107
      %p248 = pneg %p104
      %p249 = pneg %p128
      %p250 = pneg %p125
      %p251 = pneg %p154
      %p252 = pneg %p151
      %p253 = scmp.lt.s32.totalorder %s18, 1
      %s254 = scalar_select %p253, %s18, 1
      %s255 = smul.addr %s254, 2
      %s256 = smul.addr %s255, 8
      %s257 = scalar_lea.vmem %s5, %s256
      %p258 = pneg %p180
      %p259 = pneg %p177
      %p260 = scmp.lt.s32.totalorder %s18, 1
      %s261 = scalar_select %p260, %s18, 1
      %s262 = smul.addr %s261, 2
      %s263 = smul.addr %s262, 8
      %s264 = scalar_lea.vmem %s6, %s263
      %p265 = scmp.lt.s32.totalorder %s18, 1
      %s266 = scalar_select %p265, %s18, 1
      %s267 = smul.addr %s266, 2
      %s268 = smul.addr %s267, 8
      %s269 = scalar_lea.vmem %s0, %s268
      %p270 = scmp.lt.s32.totalorder %s18, 1
      %s271 = scalar_select %p270, %s18, 1
      %s272 = smul.addr %s271, 4
      %s273 = smul.addr %s272, 4
      %s274 = scalar_lea.vmem %s1, %s273
      %p275 = scmp.lt.s32.totalorder %s18, 1
      %s276 = scalar_select %p275, %s18, 1
      %s277 = smul.addr %s276, 2
      %s278 = smul.addr %s277, 8
      %s279 = scalar_lea.vmem %s5, %s278
      %p280 = scmp.lt.s32.totalorder %s18, 1
      %s281 = scalar_select %p280, %s18, 1
      %s282 = smul.addr %s281, 2
      %s283 = smul.addr %s282, 8
      %s284 = scalar_lea.vmem %s6, %s283
      %v286 = vld [vmem:[%s274] sm:$0xf]
      %v287 = vld [vmem:[%s274 + $0x4] sm:$0xf]
      %v288 = vld [vmem:[%s274 + $0x8] sm:$0xf]
      %v289 = vld [vmem:[%s274 + $0xc] sm:$0xf]
      %v290 = vld [vmem:[%s2] sm:$0x3]
      %v295 = vunpack.c.l.b16 %v286
      %v296 = vunpack.c.l.b16 %v287
      %v297 = vunpack.c.l.b16 %v288
      %v298 = vunpack.c.l.b16 %v289
      %v299 = vpack.c.b16 %v296, %v295
      %v300 = vpack.c.b16 %v298, %v297
      %vm301 = vcmask 31744
      %v303 = vsel %vm301, %v299, 0
      %v306 = vsel %vm301, %v300, 0
      %vm308 = vcmask 1041408
      %v310 = vsel %vm308, %v290, 0
      %312 = vmatprep.subr.bf16.mxu0 0
      %313 = vmatpush1.bf16.msra.mxu0 %v310
      %314 = vmatprep.subr.bf16.mxu0 0
      %315 = vmatpush1.bf16.msra.mxu0 0
      %316 = vmatprep.subr.bf16.mxu0 0
      %317 = vmatpush1.bf16.msra.mxu0 0
      %318 = vmatprep.subr.bf16.mxu0 0
      %319 = vmatpush1.bf16.msra.mxu0 0
      %320 = vmatprep.subr.bf16.mxu0 0
      %321 = vmatpush1.bf16.msra.mxu0 0
      %322 = vmatprep.subr.bf16.mxu0 0
      %323 = vmatpush1.bf16.msra.mxu0 0
      %324 = vmatprep.subr.bf16.mxu0 0
      %325 = vmatpush1.bf16.msra.mxu0 0
      %326 = vmatprep.subr.bf16.mxu0 0
      %327 = vmatpush1.bf16.msra.mxu0 0
      %328 = vmatprep.subr.bf16.mxu0 0
      %329 = vmatpush1.bf16.msra.mxu0 0
      %330 = vmatprep.subr.bf16.mxu0 0
      %331 = vmatpush1.bf16.msra.mxu0 0
      %332 = vmatprep.subr.bf16.mxu0 0
      %333 = vmatpush1.bf16.msra.mxu0 0
      %334 = vmatprep.subr.bf16.mxu0 0
      %335 = vmatpush1.bf16.msra.mxu0 0
      %336 = vmatprep.subr.bf16.mxu0 0
      %337 = vmatpush1.bf16.msra.mxu0 0
      %338 = vmatprep.subr.bf16.mxu0 0
      %339 = vmatpush1.bf16.msra.mxu0 0
      %340 = vmatprep.subr.bf16.mxu0 0
      %341 = vmatpush1.bf16.msra.mxu0 0
      %342 = vmatprep.subr.bf16.mxu0 0
      %343 = vmatpush1.bf16.msra.mxu0 0
      %344 = vmatprep.mubr.bf16.mxu0 0
      %345 = vmatmul.mubr.bf16.gmra.mrb[0].mxu0 %v303
      %v346 = vpop.f32.mrb[0].mxu0
      %v347 = vadd.f32 0.0, %v346
      %v348 = vpop.f32.mrb[0].mxu0
      %v349 = vpop.f32.mrb[0].mxu0
      %v350 = vadd.f32 0.0, %v349
      %v351 = vpop.f32.mrb[0].mxu0
      %352 = vmatprep.mubr.bf16.mxu0 0
      %353 = vmatmul.mubr.bf16.gmra.mrb[0].mxu0 %v306
      %v354 = vpop.f32.mrb[0].mxu0
      %v355 = vadd.f32 0.0, %v354
      %v356 = vpop.f32.mrb[0].mxu0
      %v357 = vpop.f32.mrb[0].mxu0
      %v358 = vadd.f32 0.0, %v357
      %v359 = vpop.f32.mrb[0].mxu0
      %360 = vdwg.mxu0
      %v361 = vpack.c.bf16 %v350, %v347
      %v362 = vpack.c.bf16 %v358, %v355
      %365 = vrot.lane.b32.xlu0 %v361, 127
      %v366 = vpop.permute.xlu0 %365
      %367 = vrot.lane.b32.xlu0 %v362, 127
      %v368 = vpop.permute.xlu0 %367
      %371 = vrot.lane.b32.xlu0 %v361, 126
      %v372 = vpop.permute.xlu0 %371
      %373 = vrot.lane.b32.xlu0 %v362, 126
      %v374 = vpop.permute.xlu0 %373
      %377 = vrot.lane.b32.xlu0 %v361, 122
      %v378 = vpop.permute.xlu0 %377
      %379 = vrot.lane.b32.xlu0 %v362, 122
      %v380 = vpop.permute.xlu0 %379
      %383 = vrot.lane.b32.xlu0 %v361, 121
      %v384 = vpop.permute.xlu0 %383
      %385 = vrot.lane.b32.xlu0 %v362, 121
      %v386 = vpop.permute.xlu0 %385
      %389 = vrot.lane.b32.xlu0 %v361, 120
      %v390 = vpop.permute.xlu0 %389
      %391 = vrot.lane.b32.xlu0 %v362, 120
      %v392 = vpop.permute.xlu0 %391
      %395 = vrot.lane.b32.xlu0 %v361, 116
      %v396 = vpop.permute.xlu0 %395
      %397 = vrot.lane.b32.xlu0 %v362, 116
      %v398 = vpop.permute.xlu0 %397
      %401 = vrot.lane.b32.xlu0 %v361, 115
      %v402 = vpop.permute.xlu0 %401
      %403 = vrot.lane.b32.xlu0 %v362, 115
      %v404 = vpop.permute.xlu0 %403
      %407 = vrot.lane.b32.xlu0 %v361, 114
      %v408 = vpop.permute.xlu0 %407
      %409 = vrot.lane.b32.xlu0 %v362, 114
      %v410 = vpop.permute.xlu0 %409
      %v413 = vld [vmem:[%s3] sm:$0xff]
      %v414 = vld [vmem:[%s3 + $0x8] sm:$0xf]
      %v415 = vld [vmem:[%s3 + $0xc] sm:$0xff]
      %v416 = vld [vmem:[%s3 + $0x14] sm:$0xf]
      %v417 = vld [vmem:[%s3 + $0x18] sm:$0xff]
      %v418 = vld [vmem:[%s3 + $0x20] sm:$0xf]
      %v419 = vld [vmem:[%s3 + $0x24] sm:$0xff]
      %v420 = vld [vmem:[%s3 + $0x2c] sm:$0xf]
      %v421 = vld [vmem:[%s4] sm:$0xff]
      %v422 = vld [vmem:[%s4 + $0x8] sm:$0xff]
      %v423 = vld [vmem:[%s4 + $0x10] sm:$0xff]
      %v424 = vld [vmem:[%s4 + $0x18] sm:$0xff]
      %426 = vset.pattern.permute.xlu0 0
      %427 = vperm.xlu0 %426, %v421
      %v428 = vpop.permute.xlu0 %427
      %431 = vset.pattern.permute.xlu0 0
      %432 = vperm.xlu0 %431, %v422
      %v433 = vpop.permute.xlu0 %432
      %436 = vset.pattern.permute.xlu0 0
      %437 = vperm.xlu0 %436, %v423
      %v438 = vpop.permute.xlu0 %437
      %441 = vset.pattern.permute.xlu0 0
      %442 = vperm.xlu0 %441, %v424
      %v443 = vpop.permute.xlu0 %442
      %v453 = vunpack.c.l.b16 %v413
      %v454 = vunpack.c.h.b16 %v413
      %v455 = vunpack.c.l.b16 %v414
      %v456 = vunpack.c.l.b16 %v415
      %v457 = vunpack.c.h.b16 %v415
      %v458 = vunpack.c.l.b16 %v416
      %v459 = vunpack.c.l.b16 %v417
      %v460 = vunpack.c.h.b16 %v417
      %v461 = vunpack.c.l.b16 %v418
      %v462 = vunpack.c.l.b16 %v419
      %v463 = vunpack.c.h.b16 %v419
      %v464 = vunpack.c.l.b16 %v420
      %v465 = vpack.c.b16 %v456, %v453
      %v466 = vpack.c.b16 %v457, %v454
      %v467 = vpack.c.b16 %v458, %v455
      %v468 = vpack.c.b16 %v462, %v459
      %v469 = vpack.c.b16 %v463, %v460
      %v470 = vpack.c.b16 %v464, %v461
      %vm475 = vcmask 261120
      %v477 = vsel %vm475, %v467, 0
      %v480 = vsel %vm475, %v470, 0
      %482 = vmatprep.subr.bf16.mxu0 0
      %483 = vmatpush1.bf16.msra.mxu0 %v361
      %484 = vmatprep.subr.bf16.mxu0 0
      %485 = vmatpush1.bf16.msra.mxu0 %v362
      %486 = vmatprep.subr.bf16.mxu0 0
      %487 = vmatpush1.bf16.msra.mxu0 %v366
      %488 = vmatprep.subr.bf16.mxu0 0
      %489 = vmatpush1.bf16.msra.mxu0 %v368
      %490 = vmatprep.subr.bf16.mxu0 0
      %491 = vmatpush1.bf16.msra.mxu0 %v372
      %492 = vmatprep.subr.bf16.mxu0 0
      %493 = vmatpush1.bf16.msra.mxu0 %v374
      %494 = vmatprep.subr.bf16.mxu0 0
      %495 = vmatpush1.bf16.msra.mxu0 %v378
      %496 = vmatprep.subr.bf16.mxu0 0
      %497 = vmatpush1.bf16.msra.mxu0 %v380
      %498 = vmatprep.subr.bf16.mxu0 0
      %499 = vmatpush1.bf16.msra.mxu0 %v384
      %500 = vmatprep.subr.bf16.mxu0 0
      %501 = vmatpush1.bf16.msra.mxu0 %v386
      %502 = vmatprep.subr.bf16.mxu0 0
      %503 = vmatpush1.bf16.msra.mxu0 %v390
      %504 = vmatprep.subr.bf16.mxu0 0
      %505 = vmatpush1.bf16.msra.mxu0 %v392
      %506 = vmatprep.subr.bf16.mxu0 0
      %507 = vmatpush1.bf16.msra.mxu0 %v396
      %508 = vmatprep.subr.bf16.mxu0 0
      %509 = vmatpush1.bf16.msra.mxu0 %v398
      %510 = vmatprep.subr.bf16.mxu0 0
      %511 = vmatpush1.bf16.msra.mxu0 %v402
      %512 = vmatprep.subr.bf16.mxu0 0
      %513 = vmatpush1.bf16.msra.mxu0 %v404
      %514 = vmatprep.mubr.bf16.mxu0 %v466
      %515 = vmatmul.mubr.bf16.gmra.mrb[0].mxu0 %v465
      %v516 = vpop.f32.mrb[0].mxu0
      %v517 = vadd.f32 %v428, %v516
      %v518 = vpop.f32.mrb[0].mxu0
      %v519 = vpop.f32.mrb[0].mxu0
      %v520 = vadd.f32 %v433, %v519
      %v521 = vpop.f32.mrb[0].mxu0
      %522 = vmatprep.mubr.bf16.mxu0 %v469
      %523 = vmatmul.mubr.bf16.gmra.mrb[0].mxu0 %v468
      %v524 = vpop.f32.mrb[0].mxu0
      %v525 = vadd.f32 %v438, %v524
      %v526 = vpop.f32.mrb[0].mxu0
      %v527 = vpop.f32.mrb[0].mxu0
      %v528 = vadd.f32 %v443, %v527
      %v529 = vpop.f32.mrb[0].mxu0
      %530 = vdwg.mxu0
      %531 = vmatprep.subr.bf16.mxu0 0
      %532 = vmatpush1.bf16.msra.mxu0 %v408
      %533 = vmatprep.subr.bf16.mxu0 0
      %534 = vmatpush1.bf16.msra.mxu0 %v410
      %535 = vmatprep.subr.bf16.mxu0 0
      %536 = vmatpush1.bf16.msra.mxu0 0
      %537 = vmatprep.subr.bf16.mxu0 0
      %538 = vmatpush1.bf16.msra.mxu0 0
      %539 = vmatprep.subr.bf16.mxu0 0
      %540 = vmatpush1.bf16.msra.mxu0 0
      %541 = vmatprep.subr.bf16.mxu0 0
      %542 = vmatpush1.bf16.msra.mxu0 0
      %543 = vmatprep.subr.bf16.mxu0 0
      %544 = vmatpush1.bf16.msra.mxu0 0
      %545 = vmatprep.subr.bf16.mxu0 0
      %546 = vmatpush1.bf16.msra.mxu0 0
      %547 = vmatprep.subr.bf16.mxu0 0
      %548 = vmatpush1.bf16.msra.mxu0 0
      %549 = vmatprep.subr.bf16.mxu0 0
      %550 = vmatpush1.bf16.msra.mxu0 0
      %551 = vmatprep.subr.bf16.mxu0 0
      %552 = vmatpush1.bf16.msra.mxu0 0
      %553 = vmatprep.subr.bf16.mxu0 0
      %554 = vmatpush1.bf16.msra.mxu0 0
      %555 = vmatprep.subr.bf16.mxu0 0
      %556 = vmatpush1.bf16.msra.mxu0 0
      %557 = vmatprep.subr.bf16.mxu0 0
      %558 = vmatpush1.bf16.msra.mxu0 0
      %559 = vmatprep.subr.bf16.mxu0 0
      %560 = vmatpush1.bf16.msra.mxu0 0
      %561 = vmatprep.subr.bf16.mxu0 0
      %562 = vmatpush1.bf16.msra.mxu0 0
      %563 = vmatprep.mubr.bf16.mxu0 0
      %564 = vmatmul.mubr.bf16.gmra.mrb[0].mxu0 %v477
      %v565 = vpop.f32.mrb[0].mxu0
      %v566 = vadd.f32 %v517, %v565
      %v567 = vpop.f32.mrb[0].mxu0
      %v568 = vpop.f32.mrb[0].mxu0
      %v569 = vadd.f32 %v520, %v568
      %v570 = vpop.f32.mrb[0].mxu0
      %571 = vmatprep.mubr.bf16.mxu0 0
      %572 = vmatmul.mubr.bf16.gmra.mrb[0].mxu0 %v480
      %v573 = vpop.f32.mrb[0].mxu0
      %v574 = vadd.f32 %v525, %v573
      %v575 = vpop.f32.mrb[0].mxu0
      %v576 = vpop.f32.mrb[0].mxu0
      %v577 = vadd.f32 %v528, %v576
      %v578 = vpop.f32.mrb[0].mxu0
      %579 = vdwg.mxu0
      %v580 = vld [vmem:[%s269] sm:$0xff]
      %v581 = vld [vmem:[%s269 + $0x8] sm:$0xff]
      %v582 = vmul.f32 %v580, %v566
      %v583 = vmul.f32 %v581, %v569
      %vm584 = vcmask 195584
      %585 = vst.msk [vmem:[%s279] sm:$0xff] %vm584, %v582
      %586 = vst.msk [vmem:[%s279 + $0x8] sm:$0xff] %vm584, %v583
      %587 = vst.msk [vmem:[%s284] sm:$0xff] %vm584, %v574
      %588 = vst.msk [vmem:[%s284 + $0x8] sm:$0xff] %vm584, %v577
      %p589 = scmp.lt.s32.totalorder %s18, 1
      %s590 = scalar_select %p589, %s18, 1
      %s591 = smul.addr %s590, 2
      %s592 = smul.addr %s591, 8
      %s593 = scalar_lea.vmem %s5, %s592
      %p594 = scmp.lt.s32.totalorder %s18, 1
      %s595 = scalar_select %p594, %s18, 1
      %s596 = smul.addr %s595, 2
      %s597 = smul.addr %s596, 8
      %s598 = scalar_lea.vmem %s6, %s597
      // Predicated region
      $region41: #{bba_forward.5} parent=39 // pred_check
        %p599 = pneg %p151
      $region42: #{bba_forward.5} parent=39 // pred_check_branch
        %601 = sbr.rel (%p599) target = $region44
      $region43: #{bba_forward.5} parent=39 // pred_region
        _
      $region44: #{bba_forward.5} parent=39 // pred_fallthru
        _
      // Predicated region
      $region45: #{bba_forward.5} parent=39 // pred_check
        %p602 = pneg %p177
      $region46: #{bba_forward.5} parent=39 // pred_check_branch
        %604 = sbr.rel (%p602) target = $region48
      $region47: #{bba_forward.5} parent=39 // pred_region
        _
      $region48: #{bba_forward.5} parent=39 // pred_fallthru
        _
    $region40: #{bba_forward.5} parent=5 // pred_fallthru
      _
    %p605 = scmp.le.s32.totalorder 2, %s13
    // Predicated region
    $region49: #{bba_forward.5} parent=5 // pred_check
      %p606 = pneg %p605
    $region50: #{bba_forward.5} parent=5 // pred_check_branch
      %608 = sbr.rel (%p606) target = $region52
    $region51: #{bba_forward.5} parent=5 // pred_region
      %s609 = ssub.s32 %s13, 2
      // Predicated region
      $region53: #{bba_forward.5} parent=51 // pred_check
        %p610 = pneg %p157
      $region54: #{bba_forward.5} parent=51 // pred_check_branch
        %612 = sbr.rel (%p610) target = $region56
      $region55: #{bba_forward.5} parent=51 // pred_region
        %p613 = scmp.lt.s32.totalorder %s19, 1
        %s614 = scalar_select %p613, %s19, 1
        %s615 = smul.addr %s614, 2
        %s616 = smul.addr %s615, 8
        %s617 = scalar_lea.vmem %s5, %s616
      $region56: #{bba_forward.5} parent=51 // pred_fallthru
        _
      // Predicated region
      $region57: #{bba_forward.5} parent=51 // pred_check
        %p618 = pneg %p183
      $region58: #{bba_forward.5} parent=51 // pred_check_branch
        %620 = sbr.rel (%p618) target = $region60
      $region59: #{bba_forward.5} parent=51 // pred_region
        %p621 = scmp.lt.s32.totalorder %s19, 1
        %s622 = scalar_select %p621, %s19, 1
        %s623 = smul.addr %s622, 2
        %s624 = smul.addr %s623, 8
        %s625 = scalar_lea.vmem %s6, %s624
      $region60: #{bba_forward.5} parent=51 // pred_fallthru
        _
    $region52: #{bba_forward.5} parent=5 // pred_fallthru
      _
  $region6: #{bba_forward.5} parent=0 // loop_footer
    %s17 = sadd.s32 1, %s13
  $region7: #{bba_forward.5} parent=0 // loop_footer_branch
    %12 = sbr.rel target = $region3
  $region8: #{bba_forward.5} parent=0 // loop_exit
    _

</llo_original>
